<compile_context>
chip_gen: v5e
topology: v5e:2x2
jax: 0.10.0
libtpu: 0.0.40
codegen_flags: <defaults>
</compile_context>

<pallas_src>
import functools

import jax
import jax.numpy as jnp
from jax.experimental import pallas as pl
from jax.experimental.pallas import tpu as pltpu


def _round_up(x, m):
    return ((x + m - 1) // m) * m


# ----------------------------------------------------------------------------
# Pallas kernel: one grid step == (batch element, chunk of output rows).
# ----------------------------------------------------------------------------
def _dw_block_kernel(x_ref, wcat_ref, b1_ref, bs_ref, w2_ref, b2_ref,
                     w3_ref, b3_ref, o_ref, t1_ref, sc_ref, *,
                     ksize, Wp, chunk, win, cin, cexp_p, sc_off):
    c = pl.program_id(1)
    s = pl.multiple_of(c * chunk, chunk)       # flat start of this output chunk

    # --- fused 1x1 expansion conv + 1x1 shortcut conv (one MXU matmul) -------
    # BN scales are already folded into wcat; only the shift adds remain.
    xw = x_ref[0, pl.ds(s, win), :]                            # (win, Cin_p) bf16
    y = jnp.dot(xw, wcat_ref[...], preferred_element_type=jnp.float32)
    # validity indicator travels as channel `cin` of x (1 inside image, 0 on pad)
    valid = xw[:, cin:cin + 1].astype(jnp.float32)             # (win, 1)
    t1 = jnp.maximum(y[:, :cexp_p] + b1_ref[...], 0.0) * valid
    t1_ref[...] = t1.astype(t1_ref.dtype)                      # bf16 scratch
    sc_ref[...] = y[sc_off:sc_off + chunk, cexp_p:] + bs_ref[...]

    # --- KxK conv: ksize matmuls, contraction K = ksize * Cexp ---------------
    acc = None
    for ky in range(ksize):                                    # static unroll
        taps = [t1_ref[pl.ds(ky * Wp + kx, chunk), :] for kx in range(ksize)]
        wide = jnp.concatenate(taps, axis=-1) if ksize > 1 else taps[0]
        part = jnp.dot(wide, w2_ref[ky], preferred_element_type=jnp.float32)
        acc = part if acc is None else acc + part
    t2 = jnp.maximum(acc + b2_ref[...], 0.0).astype(jnp.bfloat16)

    # --- 1x1 projection + shortcut add + final ReLU --------------------------
    y3 = jnp.dot(t2, w3_ref[...], preferred_element_type=jnp.float32) + b3_ref[...]
    o_ref[0] = jnp.maximum(y3 + sc_ref[...], 0.0)


# ----------------------------------------------------------------------------
# Wrapper: layout plumbing, BN folding into weights, pallas_call.
# ----------------------------------------------------------------------------
def dw_block_forward(x_nchw, params, *, ksize, stride=1, eps=1e-5):
    assert stride == 1  # TODO(synk): AvgPool shortcut for stride > 1.
    N, Cin, H, W = x_nchw.shape
    pad = ksize // 2

    Cexp = params['w1'].shape[1]
    Cout = params['w3'].shape[1]

    LANE = 128
    Cin_p = _round_up(Cin + 1, LANE)          # +1 slot for the validity channel
    Cexp_p = _round_up(Cexp, LANE)
    Cout_p = _round_up(Cout, LANE)

    Wp = _round_up(W + 2 * pad, 8)            # sublane-aligned padded row width
    M = H * Wp                                # flat positions with real output
    chunk = min(256, _round_up(M, 8))         # output rows per grid step
    M_out = _round_up(M, chunk)
    nc = M_out // chunk
    win = _round_up(chunk + 2 * pad * (Wp + 1), 16)   # chunk rows + conv halo
    sc_off = pad * (Wp + 1)                   # shortcut offset inside the window
    L = M_out - chunk + win                   # flat rows of the padded input grid
    Hgrid = -(-L // Wp)

    # ---- input: NCHW -> zero-padded, channels-last, flattened, bf16 ---------
    x = jnp.transpose(x_nchw, (0, 2, 3, 1)).astype(jnp.bfloat16)
    xg = jnp.zeros((N, Hgrid, Wp, Cin_p), jnp.bfloat16)
    xg = xg.at[:, pad:pad + H, pad:pad + W, :Cin].set(x)
    xg = xg.at[:, pad:pad + H, pad:pad + W, Cin].set(1.0)      # validity channel
    x_flat = xg.reshape(N, Hgrid * Wp, Cin_p)[:, :L, :]

    # ---- fold BN (+ conv bias) into weights / per-channel shifts ------------
    def fold(w, g, be, mu, var, conv_bias=None):
        s = g / jnp.sqrt(var + eps)
        sh = be - s * mu
        if conv_bias is not None:
            sh = sh + s * conv_bias
        return w * s, sh.reshape(1, -1)

    P = params
    w1s, b1 = fold(P['w1'], P['g1'], P['be1'], P['m1'], P['v1'], P['cb1'])
    w2s, b2 = fold(P['w2'], P['g2'], P['be2'], P['m2'], P['v2'])
    w3s, b3 = fold(P['w3'], P['g3'], P['be3'], P['m3'], P['v3'], P['cb3'])
    wss, bs = fold(P['ws'], P['gs'], P['bes'], P['ms'], P['vs'])

    def padw(w, r, c):
        return jnp.zeros((r, c), jnp.float32).at[:w.shape[0], :w.shape[1]].set(w)

    def padv(v, c):
        return jnp.zeros((1, c), jnp.float32).at[:, :v.shape[1]].set(v)

    # fused [expansion | shortcut] weight, bf16
    wcat = jnp.concatenate([padw(w1s, Cin_p, Cexp_p),
                            padw(wss, Cin_p, Cout_p)], axis=1).astype(jnp.bfloat16)
    # KxK conv weight re-packed so kx taps stack along the contraction axis
    w2p = jnp.zeros((ksize, ksize, Cexp_p, Cexp_p), jnp.float32)
    w2p = w2p.at[:, :, :Cexp, :Cexp].set(w2s)
    w2k = w2p.reshape(ksize, ksize * Cexp_p, Cexp_p).astype(jnp.bfloat16)
    w3p = padw(w3s, Cexp_p, Cout_p).astype(jnp.bfloat16)
    b1p, b2p = padv(b1, Cexp_p), padv(b2, Cexp_p)
    b3p, bsp = padv(b3, Cout_p), padv(bs, Cout_p)

    kernel = functools.partial(
        _dw_block_kernel, ksize=ksize, Wp=Wp, chunk=chunk, win=win,
        cin=Cin, cexp_p=Cexp_p, sc_off=sc_off)

    def const(shape):
        return pl.BlockSpec(shape, lambda n, c: (0,) * len(shape))

    out_flat = pl.pallas_call(
        kernel,
        out_shape=jax.ShapeDtypeStruct((N, M_out, Cout_p), jnp.float32),
        grid_spec=pltpu.PrefetchScalarGridSpec(
            num_scalar_prefetch=0,
            grid=(N, nc),
            in_specs=[
                pl.BlockSpec((1, L, Cin_p), lambda n, c: (n, 0, 0)),   # x
                const((Cin_p, Cexp_p + Cout_p)),                       # [w1|ws]
                const((1, Cexp_p)), const((1, Cout_p)),                # b1, bs
                const((ksize, ksize * Cexp_p, Cexp_p)),                # w2 (packed)
                const((1, Cexp_p)),                                    # b2
                const((Cexp_p, Cout_p)), const((1, Cout_p)),           # w3, b3
            ],
            out_specs=pl.BlockSpec((1, chunk, Cout_p), lambda n, c: (n, c, 0)),
            scratch_shapes=[pltpu.VMEM((win, Cexp_p), jnp.bfloat16),   # t1 window
                            pltpu.VMEM((chunk, Cout_p), jnp.float32)], # shortcut
        ),
        compiler_params=pltpu.CompilerParams(
            dimension_semantics=("parallel", "parallel"),
            vmem_limit_bytes=64 * 1024 * 1024),
    )(x_flat, wcat, b1p, bsp, w2k, b2p, w3p, b3p)

    out = out_flat[:, :M, :Cout].reshape(N, H, Wp, Cout)[:, :, :W, :]
    return jnp.transpose(out, (0, 3, 1, 2)).astype(x_nchw.dtype)


# ----------------------------------------------------------------------------
# Deterministic parameter init (shapes from DwBlock.__init__).
# ----------------------------------------------------------------------------
def init_params(key, in_ch, out_ch, ksize, expansion=1.0):
    exp_ch = int(round(out_ch * expansion))
    keys = jax.random.split(key, 10)

    def nrm(k, shape, scale=0.3):
        return scale * jax.random.normal(k, shape, jnp.float32)

    def bn(k, ch):
        k1, k2, k3, k4 = jax.random.split(k, 4)
        g = 0.5 + jax.random.uniform(k1, (ch,), jnp.float32)
        be = 0.1 * jax.random.normal(k2, (ch,), jnp.float32)
        mu = 0.1 * jax.random.normal(k3, (ch,), jnp.float32)
        var = 0.5 + jax.random.uniform(k4, (ch,), jnp.float32)
        return g, be, mu, var

    P = {}
    P['w1'] = nrm(keys[0], (in_ch, exp_ch))                      # 1x1 conv (bias)
    P['cb1'] = nrm(keys[1], (exp_ch,), 0.1)
    P['w2'] = nrm(keys[2], (ksize, ksize, exp_ch, exp_ch), 0.2)  # KxK, no bias
    P['w3'] = nrm(keys[3], (exp_ch, out_ch))                     # 1x1 conv (bias)
    P['cb3'] = nrm(keys[4], (out_ch,), 0.1)
    P['ws'] = nrm(keys[5], (in_ch, out_ch))                      # shortcut 1x1
    P['g1'], P['be1'], P['m1'], P['v1'] = bn(keys[6], exp_ch)
    P['g2'], P['be2'], P['m2'], P['v2'] = bn(keys[7], exp_ch)
    P['g3'], P['be3'], P['m3'], P['v3'] = bn(keys[8], out_ch)
    P['gs'], P['bes'], P['ms'], P['vs'] = bn(keys[9], out_ch)
    return P


# ----------------------------------------------------------------------------
# Pure-JAX reference (lax.conv) used only for verification.
# ----------------------------------------------------------------------------
def ref_forward(x_nchw, P, *, ksize, eps=1e-5):
    x = jnp.transpose(x_nchw, (0, 2, 3, 1)).astype(jnp.float32)
    pad = ksize // 2

    def conv(h, w_hwio, p, bias=None):
        y = jax.lax.conv_general_dilated(
            h, w_hwio, (1, 1), [(p, p), (p, p)],
            dimension_numbers=('NHWC', 'HWIO', 'NHWC'))
        return y if bias is None else y + bias

    def bn(h, g, be, mu, var):
        return g * (h - mu) / jnp.sqrt(var + eps) + be

    h = conv(x, P['w1'][None, None], 0, P['cb1'])
    h = jax.nn.relu(bn(h, P['g1'], P['be1'], P['m1'], P['v1']))
    h = conv(h, P['w2'], pad)
    h = jax.nn.relu(bn(h, P['g2'], P['be2'], P['m2'], P['v2']))
    h = conv(h, P['w3'][None, None], 0, P['cb3'])
    h = bn(h, P['g3'], P['be3'], P['m3'], P['v3'])
    s = conv(x, P['ws'][None, None], 0)
    s = bn(s, P['gs'], P['bes'], P['ms'], P['vs'])
    out = jax.nn.relu(h + s)
    return jnp.transpose(out, (0, 3, 1, 2))


if __name__ == "__main__":
    key = jax.random.PRNGKey(0)
    kx_, kp_ = jax.random.split(key)

    N, Cin, H, W = 2, 4, 16, 16
    Cout, ksize = 8, 3            # stride=1, expansion=1.0, in_ch != out_ch

    x = jax.random.normal(kx_, (N, Cin, H, W), jnp.float32)
    params = init_params(kp_, Cin, Cout, ksize)

    out = dw_block_forward(x, params, ksize=ksize)
    out = jax.block_until_ready(out)
    assert out.shape == (N, Cout, H, W)

    ref = ref_forward(x, params, ksize=ksize)
    err = float(jnp.max(jnp.abs(out - ref)))
    # bf16 MXU operands (f32 accumulation) -> looser tolerance than pure f32.
    assert jnp.allclose(out, ref, rtol=5e-2, atol=8e-2), f"max abs err {err}"

    print("KERNEL_OK")
</pallas_src>

<mosaic_0001>
module attributes {stable_mosaic.version = 11 : i64} {
  func.func @_dw_block_kernel(%arg0: i32, %arg1: i32, %arg2: memref<1x576x128xbf16, #tpu.memory_space<vmem>>, %arg3: memref<128x256xbf16, #tpu.memory_space<vmem>>, %arg4: memref<1x128xf32, #tpu.memory_space<vmem>>, %arg5: memref<1x128xf32, #tpu.memory_space<vmem>>, %arg6: memref<3x384x128xbf16, #tpu.memory_space<vmem>>, %arg7: memref<1x128xf32, #tpu.memory_space<vmem>>, %arg8: memref<128x128xbf16, #tpu.memory_space<vmem>>, %arg9: memref<1x128xf32, #tpu.memory_space<vmem>>, %arg10: memref<1x256x128xf32, #tpu.memory_space<vmem>>, %arg11: memref<320x128xbf16, #tpu.memory_space<vmem>>, %arg12: memref<256x128xf32, #tpu.memory_space<vmem>>) attributes {dimension_semantics = [#tpu.dimension_semantics<parallel>, #tpu.dimension_semantics<parallel>], iteration_bounds = array<i64: 2, 2>, scalar_prefetch = 0 : i64, scratch_operands = 2 : i64, tpu.core_type = #tpu.core_type<tc>, window_params = [{transform_indices = @transform_0, window_bounds = array<i64: 1, 576, 128>}, {pipeline_mode = #tpu.pipeline_mode<synchronous>, transform_indices = @transform_1, window_bounds = array<i64: 128, 256>}, {pipeline_mode = #tpu.pipeline_mode<synchronous>, transform_indices = @transform_2, window_bounds = array<i64: 1, 128>}, {pipeline_mode = #tpu.pipeline_mode<synchronous>, transform_indices = @transform_3, window_bounds = array<i64: 1, 128>}, {pipeline_mode = #tpu.pipeline_mode<synchronous>, transform_indices = @transform_4, window_bounds = array<i64: 3, 384, 128>}, {pipeline_mode = #tpu.pipeline_mode<synchronous>, transform_indices = @transform_5, window_bounds = array<i64: 1, 128>}, {pipeline_mode = #tpu.pipeline_mode<synchronous>, transform_indices = @transform_6, window_bounds = array<i64: 128, 128>}, {pipeline_mode = #tpu.pipeline_mode<synchronous>, transform_indices = @transform_7, window_bounds = array<i64: 1, 128>}, {transform_indices = @transform_8, window_bounds = array<i64: 1, 256, 128>}]} {
    %c256_i32 = arith.constant 256 : i32
    %0 = arith.muli %arg1, %c256_i32 : i32
    %1 = tpu.assume_multiple %0, 256 : i32
    %c0 = arith.constant 0 : index
    %2 = arith.index_cast %1 : i32 to index
    %c0_0 = arith.constant 0 : index
    %3 = vector.load %arg2[%c0, %2, %c0_0] : memref<1x576x128xbf16, #tpu.memory_space<vmem>>, vector<1x320x128xbf16>
    %4 = vector.shape_cast %3 : vector<1x320x128xbf16> to vector<320x128xbf16>
    %c0_1 = arith.constant 0 : index
    %c0_2 = arith.constant 0 : index
    %5 = vector.load %arg3[%c0_1, %c0_2] : memref<128x256xbf16, #tpu.memory_space<vmem>>, vector<128x256xbf16>
    %cst = arith.constant dense<0.000000e+00> : vector<320x256xf32>
    %6 = tpu.matmul %4, %5, %cst {dimension_numbers = #tpu.dot_dimension_numbers<[1], [0], [0], [1], [0, 0, 1, 1], [], []>} : vector<320x128xbf16>, vector<128x256xbf16>, vector<320x256xf32> -> vector<320x256xf32>
    %7 = vector.extract_strided_slice %4 {offsets = [0, 4], sizes = [320, 1], strides = [1, 1]} : vector<320x128xbf16> to vector<320x1xbf16>
    %8 = arith.extf %7 : vector<320x1xbf16> to vector<320x1xf32>
    %9 = vector.extract_strided_slice %6 {offsets = [0, 0], sizes = [320, 128], strides = [1, 1]} : vector<320x256xf32> to vector<320x128xf32>
    %c0_3 = arith.constant 0 : index
    %c0_4 = arith.constant 0 : index
    %10 = vector.load %arg4[%c0_3, %c0_4] : memref<1x128xf32, #tpu.memory_space<vmem>>, vector<1x128xf32>
    %11 = vector.broadcast %10 : vector<1x128xf32> to vector<320x128xf32>
    %12 = arith.addf %9, %11 : vector<320x128xf32>
    %cst_5 = arith.constant 0.000000e+00 : f32
    %13 = vector.broadcast %cst_5 : f32 to vector<320x128xf32>
    %14 = arith.maximumf %12, %13 : vector<320x128xf32>
    %15 = vector.broadcast %8 : vector<320x1xf32> to vector<320x128xf32>
    %16 = arith.mulf %14, %15 : vector<320x128xf32>
    %17 = arith.truncf %16 : vector<320x128xf32> to vector<320x128xbf16>
    %c0_6 = arith.constant 0 : index
    %c0_7 = arith.constant 0 : index
    %18 = vector.load %arg11[%c0_6, %c0_7] : memref<320x128xbf16, #tpu.memory_space<vmem>>, vector<320x128xbf16>
    tpu.vector_store %arg11[%c0_6, %c0_7], %17 {strides = array<i32>} : memref<320x128xbf16, #tpu.memory_space<vmem>>, vector<320x128xbf16>,
    %19 = vector.extract_strided_slice %6 {offsets = [25, 128], sizes = [256, 128], strides = [1, 1]} : vector<320x256xf32> to vector<256x128xf32>
    %c0_8 = arith.constant 0 : index
    %c0_9 = arith.constant 0 : index
    %20 = vector.load %arg5[%c0_8, %c0_9] : memref<1x128xf32, #tpu.memory_space<vmem>>, vector<1x128xf32>
    %21 = vector.broadcast %20 : vector<1x128xf32> to vector<256x128xf32>
    %22 = arith.addf %19, %21 : vector<256x128xf32>
    %c0_10 = arith.constant 0 : index
    %c0_11 = arith.constant 0 : index
    %23 = vector.load %arg12[%c0_10, %c0_11] : memref<256x128xf32, #tpu.memory_space<vmem>>, vector<256x128xf32>
    tpu.vector_store %arg12[%c0_10, %c0_11], %22 {strides = array<i32>} : memref<256x128xf32, #tpu.memory_space<vmem>>, vector<256x128xf32>,
    %c0_12 = arith.constant 0 : index
    %c0_13 = arith.constant 0 : index
    %24 = vector.load %arg11[%c0_12, %c0_13] : memref<320x128xbf16, #tpu.memory_space<vmem>>, vector<256x128xbf16>
    %c1 = arith.constant 1 : index
    %c0_14 = arith.constant 0 : index
    %25 = vector.load %arg11[%c1, %c0_14] : memref<320x128xbf16, #tpu.memory_space<vmem>>, vector<256x128xbf16>
    %c2 = arith.constant 2 : index
    %c0_15 = arith.constant 0 : index
    %26 = vector.load %arg11[%c2, %c0_15] : memref<320x128xbf16, #tpu.memory_space<vmem>>, vector<256x128xbf16>
    %27 = tpu.concatenate %24, %25, %26 in 1 : vector<256x128xbf16>, vector<256x128xbf16>, vector<256x128xbf16> -> vector<256x384xbf16>
    %c0_16 = arith.constant 0 : index
    %c0_17 = arith.constant 0 : index
    %c0_18 = arith.constant 0 : index
    %28 = vector.load %arg6[%c0_16, %c0_17, %c0_18] : memref<3x384x128xbf16, #tpu.memory_space<vmem>>, vector<1x384x128xbf16>
    %29 = vector.shape_cast %28 : vector<1x384x128xbf16> to vector<384x128xbf16>
    %cst_19 = arith.constant dense<0.000000e+00> : vector<256x128xf32>
    %30 = tpu.matmul %27, %29, %cst_19 {dimension_numbers = #tpu.dot_dimension_numbers<[1], [0], [0], [1], [0, 0, 1, 1], [], []>} : vector<256x384xbf16>, vector<384x128xbf16>, vector<256x128xf32> -> vector<256x128xf32>
    %c24 = arith.constant 24 : index
    %c0_20 = arith.constant 0 : index
    %31 = vector.load %arg11[%c24, %c0_20] : memref<320x128xbf16, #tpu.memory_space<vmem>>, vector<256x128xbf16>
    %c25 = arith.constant 25 : index
    %c0_21 = arith.constant 0 : index
    %32 = vector.load %arg11[%c25, %c0_21] : memref<320x128xbf16, #tpu.memory_space<vmem>>, vector<256x128xbf16>
    %c26 = arith.constant 26 : index
    %c0_22 = arith.constant 0 : index
    %33 = vector.load %arg11[%c26, %c0_22] : memref<320x128xbf16, #tpu.memory_space<vmem>>, vector<256x128xbf16>
    %34 = tpu.concatenate %31, %32, %33 in 1 : vector<256x128xbf16>, vector<256x128xbf16>, vector<256x128xbf16> -> vector<256x384xbf16>
    %c1_23 = arith.constant 1 : index
    %c0_24 = arith.constant 0 : index
    %c0_25 = arith.constant 0 : index
    %35 = vector.load %arg6[%c1_23, %c0_24, %c0_25] : memref<3x384x128xbf16, #tpu.memory_space<vmem>>, vector<1x384x128xbf16>
    %36 = vector.shape_cast %35 : vector<1x384x128xbf16> to vector<384x128xbf16>
    %cst_26 = arith.constant dense<0.000000e+00> : vector<256x128xf32>
    %37 = tpu.matmul %34, %36, %cst_26 {dimension_numbers = #tpu.dot_dimension_numbers<[1], [0], [0], [1], [0, 0, 1, 1], [], []>} : vector<256x384xbf16>, vector<384x128xbf16>, vector<256x128xf32> -> vector<256x128xf32>
    %38 = arith.addf %30, %37 : vector<256x128xf32>
    %c48 = arith.constant 48 : index
    %c0_27 = arith.constant 0 : index
    %39 = vector.load %arg11[%c48, %c0_27] : memref<320x128xbf16, #tpu.memory_space<vmem>>, vector<256x128xbf16>
    %c49 = arith.constant 49 : index
    %c0_28 = arith.constant 0 : index
    %40 = vector.load %arg11[%c49, %c0_28] : memref<320x128xbf16, #tpu.memory_space<vmem>>, vector<256x128xbf16>
    %c50 = arith.constant 50 : index
    %c0_29 = arith.constant 0 : index
    %41 = vector.load %arg11[%c50, %c0_29] : memref<320x128xbf16, #tpu.memory_space<vmem>>, vector<256x128xbf16>
    %42 = tpu.concatenate %39, %40, %41 in 1 : vector<256x128xbf16>, vector<256x128xbf16>, vector<256x128xbf16> -> vector<256x384xbf16>
    %c2_30 = arith.constant 2 : index
    %c0_31 = arith.constant 0 : index
    %c0_32 = arith.constant 0 : index
    %43 = vector.load %arg6[%c2_30, %c0_31, %c0_32] : memref<3x384x128xbf16, #tpu.memory_space<vmem>>, vector<1x384x128xbf16>
    %44 = vector.shape_cast %43 : vector<1x384x128xbf16> to vector<384x128xbf16>
    %cst_33 = arith.constant dense<0.000000e+00> : vector<256x128xf32>
    %45 = tpu.matmul %42, %44, %cst_33 {dimension_numbers = #tpu.dot_dimension_numbers<[1], [0], [0], [1], [0, 0, 1, 1], [], []>} : vector<256x384xbf16>, vector<384x128xbf16>, vector<256x128xf32> -> vector<256x128xf32>
    %46 = arith.addf %38, %45 : vector<256x128xf32>
    %c0_34 = arith.constant 0 : index
    %c0_35 = arith.constant 0 : index
    %47 = vector.load %arg7[%c0_34, %c0_35] : memref<1x128xf32, #tpu.memory_space<vmem>>, vector<1x128xf32>
    %48 = vector.broadcast %47 : vector<1x128xf32> to vector<256x128xf32>
    %49 = arith.addf %46, %48 : vector<256x128xf32>
    %cst_36 = arith.constant 0.000000e+00 : f32
    %50 = vector.broadcast %cst_36 : f32 to vector<256x128xf32>
    %51 = arith.maximumf %49, %50 : vector<256x128xf32>
    %52 = arith.truncf %51 : vector<256x128xf32> to vector<256x128xbf16>
    %c0_37 = arith.constant 0 : index
    %c0_38 = arith.constant 0 : index
    %53 = vector.load %arg8[%c0_37, %c0_38] : memref<128x128xbf16, #tpu.memory_space<vmem>>, vector<128x128xbf16>
    %cst_39 = arith.constant dense<0.000000e+00> : vector<256x128xf32>
    %54 = tpu.matmul %52, %53, %cst_39 {dimension_numbers = #tpu.dot_dimension_numbers<[1], [0], [0], [1], [0, 0, 1, 1], [], []>} : vector<256x128xbf16>, vector<128x128xbf16>, vector<256x128xf32> -> vector<256x128xf32>
    %c0_40 = arith.constant 0 : index
    %c0_41 = arith.constant 0 : index
    %55 = vector.load %arg9[%c0_40, %c0_41] : memref<1x128xf32, #tpu.memory_space<vmem>>, vector<1x128xf32>
    %56 = vector.broadcast %55 : vector<1x128xf32> to vector<256x128xf32>
    %57 = arith.addf %54, %56 : vector<256x128xf32>
    %c0_42 = arith.constant 0 : index
    %c0_43 = arith.constant 0 : index
    %58 = vector.load %arg12[%c0_42, %c0_43] : memref<256x128xf32, #tpu.memory_space<vmem>>, vector<256x128xf32>
    %59 = arith.addf %57, %58 : vector<256x128xf32>
    %cst_44 = arith.constant 0.000000e+00 : f32
    %60 = vector.broadcast %cst_44 : f32 to vector<256x128xf32>
    %61 = arith.maximumf %59, %60 : vector<256x128xf32>
    %c0_45 = arith.constant 0 : index
    %c0_46 = arith.constant 0 : index
    %c0_47 = arith.constant 0 : index
    %62 = vector.load %arg10[%c0_45, %c0_46, %c0_47] : memref<1x256x128xf32, #tpu.memory_space<vmem>>, vector<1x256x128xf32>
    %63 = vector.shape_cast %62 : vector<1x256x128xf32> to vector<256x128xf32>
    %64 = vector.shape_cast %61 : vector<256x128xf32> to vector<1x256x128xf32>
    tpu.vector_store %arg10[%c0_45, %c0_46, %c0_47], %64 {strides = array<i32>} : memref<1x256x128xf32, #tpu.memory_space<vmem>>, vector<1x256x128xf32>,
    return
  }
  func.func @transform_0(%arg0: i32, %arg1: i32) -> (i32, i32, i32) {
    %c0_i32 = arith.constant 0 : i32
    %c0_i32_0 = arith.constant 0 : i32
    %c0_i32_1 = arith.constant 0 : i32
    return %arg0, %c0_i32, %c0_i32_0 : i32, i32, i32
  }
  func.func @transform_1(%arg0: i32, %arg1: i32) -> (i32, i32) {
    %c0_i32 = arith.constant 0 : i32
    %c0_i32_0 = arith.constant 0 : i32
    %c0_i32_1 = arith.constant 0 : i32
    return %c0_i32, %c0_i32_0 : i32, i32
  }
  func.func @transform_2(%arg0: i32, %arg1: i32) -> (i32, i32) {
    %c0_i32 = arith.constant 0 : i32
    %c0_i32_0 = arith.constant 0 : i32
    %c0_i32_1 = arith.constant 0 : i32
    return %c0_i32, %c0_i32_0 : i32, i32
  }
  func.func @transform_3(%arg0: i32, %arg1: i32) -> (i32, i32) {
    %c0_i32 = arith.constant 0 : i32
    %c0_i32_0 = arith.constant 0 : i32
    %c0_i32_1 = arith.constant 0 : i32
    return %c0_i32, %c0_i32_0 : i32, i32
  }
  func.func @transform_4(%arg0: i32, %arg1: i32) -> (i32, i32, i32) {
    %c0_i32 = arith.constant 0 : i32
    %c0_i32_0 = arith.constant 0 : i32
    %c0_i32_1 = arith.constant 0 : i32
    %c0_i32_2 = arith.constant 0 : i32
    return %c0_i32, %c0_i32_0, %c0_i32_1 : i32, i32, i32
  }
  func.func @transform_5(%arg0: i32, %arg1: i32) -> (i32, i32) {
    %c0_i32 = arith.constant 0 : i32
    %c0_i32_0 = arith.constant 0 : i32
    %c0_i32_1 = arith.constant 0 : i32
    return %c0_i32, %c0_i32_0 : i32, i32
  }
  func.func @transform_6(%arg0: i32, %arg1: i32) -> (i32, i32) {
    %c0_i32 = arith.constant 0 : i32
    %c0_i32_0 = arith.constant 0 : i32
    %c0_i32_1 = arith.constant 0 : i32
    return %c0_i32, %c0_i32_0 : i32, i32
  }
  func.func @transform_7(%arg0: i32, %arg1: i32) -> (i32, i32) {
    %c0_i32 = arith.constant 0 : i32
    %c0_i32_0 = arith.constant 0 : i32
    %c0_i32_1 = arith.constant 0 : i32
    return %c0_i32, %c0_i32_0 : i32, i32
  }
  func.func @transform_8(%arg0: i32, %arg1: i32) -> (i32, i32, i32) {
    %c0_i32 = arith.constant 0 : i32
    %c0_i32_0 = arith.constant 0 : i32
    return %arg0, %arg1, %c0_i32 : i32, i32, i32
  }
}

</mosaic_0001>

<llo_original>
// kernel: tpu_custom_call.1
$region0: #{tpu_custom_call.1}
  #allocation0 [shape = 'u32[]', space=smem, size = 0x4, offset = 0x4, fixed_abs, tag = 'smem constant byte address 0x4 - core index']
  #allocation1 [shape = 'u32[72,128]{1,0:T(1,128)}', space=vmem, size = 0x9000, scoped, tag = 'internal scratch']
  #allocation2 [shape = 'bf16[320,128]{1,0:T(8,128)(2,1)}', space=vmem, size = 0x14000, scoped, tag = 'scratch operand']
  #allocation3 [shape = 'f32[256,128]{1,0:T(8,128)}', space=vmem, size = 0x20000, scoped, tag = 'scratch operand']
  %s0 = inlined_call_operand.hbm [shape: bf16[2,576,128], index: 0, kind: input, shape index: {}]
  %s1 = inlined_call_operand.hbm [shape: bf16[128,256], index: 1, kind: input, shape index: {}]
  %s2 = inlined_call_operand.vmem [shape: f32[1,128], index: 2, kind: input, shape index: {}]
  %s3 = inlined_call_operand.vmem [shape: f32[1,128], index: 3, kind: input, shape index: {}]
  %s4 = inlined_call_operand.hbm [shape: bf16[3,384,128], index: 4, kind: input, shape index: {}]
  %s5 = inlined_call_operand.vmem [shape: f32[1,128], index: 5, kind: input, shape index: {}]
  %s6 = inlined_call_operand.hbm [shape: bf16[128,128], index: 6, kind: input, shape index: {}]
  %s7 = inlined_call_operand.vmem [shape: f32[1,128], index: 7, kind: input, shape index: {}]
  %s8 = inlined_call_operand.hbm [shape: f32[2,512,128], index: 8, kind: output, shape index: {}]
  %s9 = sld [smem:[#allocation0]]
  $region81: #{tpu_custom_call.1} parent=0
    _
  %s11 = ssub.s32 1, %s9
  %s12 = scalar_select 0, %s11, %s9
  $region1: #{tpu_custom_call.1} parent=0
    #allocation4 [shape = 'u8[294912]{0}', space=vmem, size = 0x48000, scoped, tag = 'input window, operand 0']
    #allocation5 [shape = 's32[2]{0}', space=sflag, size = 0x8, scoped, tag = 'scoped memory for tpu_custom_call.1']
    #allocation6 [shape = 's32[2]{0}', space=sflag, size = 0x8, scoped, tag = 'scoped memory for tpu_custom_call.1']
    #allocation7 [shape = 'u8[65536]{0}', space=vmem, size = 0x10000, scoped, tag = 'input window, operand 1, single buffered']
    #allocation8 [shape = 's32[1]{0}', space=sflag, size = 0x4, scoped, tag = 'scoped memory for tpu_custom_call.1']
    #allocation9 [shape = 'u8[294912]{0}', space=vmem, size = 0x48000, scoped, tag = 'input window, operand 4, single buffered']
    #allocation10 [shape = 'u8[32768]{0}', space=vmem, size = 0x8000, scoped, tag = 'input window, operand 6, single buffered']
    #allocation11 [shape = 's32[1]{0}', space=sflag, size = 0x4, scoped, tag = 'scoped memory for tpu_custom_call.1']
    #allocation12 [shape = 'u8[262144]{0}', space=vmem, size = 0x40000, scoped, tag = 'output window, operand 0']
    %13 = vsyncpa [#allocation5], 0
    %s14 = scalar_lea.sflag [#allocation5], 1
    %15 = vsyncpa %s14, 0
    %16 = vsyncpa [#allocation8], 0
    %17 = vsyncpa [#allocation11], 0
    %18 = vsyncpa [#allocation6], 0
    %s19 = scalar_lea.sflag [#allocation6], 1
    %20 = vsyncpa %s19, 0
    loop: start=0, step=1, limit=6
    $region2: #{tpu_custom_call.1} parent=1 // loop_pre_header
      _
    $region3: #{tpu_custom_call.1} parent=1 // loop_header
      %s22 = sphi 0, %s26
      %p23 = scmp.ge.s32.totalorder %s22, 6
      %s29 = sphi 0, %s41
      %s30 = sphi 0, %s37
      %s31 = sphi 0, %s29
      %s32 = sphi 0, %s30
      %s33 = sphi 0, %s31
      %s34 = sphi 0, %s32
      %s44 = sphi 0, %s46
      %s47 = sphi 0, %s44
      %s48 = sphi 0, %s47
      %s64 = sphi 0, %s48
      %s68 = sphi 0, %s68
      %s70 = sphi 0, %s68
      %s71 = sphi 0, %s70
      %s85 = sphi 0, %s71
      %s89 = sphi 0, %s89
      %s91 = sphi 0, %s89
      %s92 = sphi 0, %s91
      %s106 = sphi 0, %s92
      %s110 = sphi 0, %s110
      %s112 = sphi 0, %s110
      %s113 = sphi 0, %s112
      %s127 = sphi 0, %s113
      %s131 = sphi 0, %s131
      %s133 = sphi 0, %s131
      %s134 = sphi 0, %s133
      %s148 = sphi 0, %s134
      %s152 = sphi 0, %s152
      %s154 = sphi 0, %s152
      %s155 = sphi 0, %s154
      %s169 = sphi 0, %s155
      %s173 = sphi 0, %s173
      %s175 = sphi 0, %s173
      %s176 = sphi 0, %s175
      %s190 = sphi 0, %s176
      %s194 = sphi 0, %s194
      %s196 = sphi 0, %s194
      %s197 = sphi 0, %s196
      %s211 = sphi 0, %s197
      %s219 = sphi 0, %s221
      %s222 = sphi 0, %s219
      %s223 = sphi 0, %s222
      %s239 = sphi 0, %s223
    $region4: #{tpu_custom_call.1} parent=1 // loop_header_branch
      %25 = sbr.rel (%p23) target = $region8
    $region5: #{tpu_custom_call.1} parent=1 // loop_body
      %s27 = ssub.s32 %s22, 1
      %s28 = ssub.s32 %s22, 2
      %s35 = sadd.s32 1, %s30
      %p36 = scmp.ge.s32.totalorder %s35, 2
      %s37 = scalar_select %p36, 0, %s35
      %s38 = sadd.s32 1, %s29
      %s39 = scalar_select %p36, %s38, %s29
      %p40 = scmp.ge.s32.totalorder %s39, 2
      %s41 = scalar_select %p40, 0, %s39
      %s42 = ssub.s32 %s29, %s41
      %p43 = scmp.eq.s32.totalorder %s42, 0
      %s45 = sadd.s32 %s44, 1
      %s46 = scalar_select %p43, %s44, %s45
      %p49 = pneg %p43
      %p50 = scmp.eq.s32.totalorder %s22, 3
      %p51 = por %p49, %p50
      %p52 = scmp.ne.s32.totalorder %s44, %s47
      %p53 = scmp.eq.s32.totalorder %s22, 0
      %p54 = por %p52, %p53
      %p55 = scmp.ne.s32.totalorder %s44, %s47
      %p56 = scmp.eq.s32.totalorder %s27, 3
      %p57 = por %p55, %p56
      %p58 = scmp.ne.s32.totalorder %s47, %s48
      %p59 = scmp.eq.s32.totalorder %s27, 0
      %p60 = por %p58, %p59
      %p61 = scmp.ne.s32.totalorder %s47, %s48
      %p62 = scmp.eq.s32.totalorder %s28, 3
      %p63 = por %p61, %p62
      %p65 = scmp.ne.s32.totalorder %s48, %s64
      %p66 = scmp.eq.s32.totalorder %s28, 0
      %p67 = por %p65, %p66
      %s69 = sadd.s32 %s68, 1
      %p72 = scmp.eq.s32.totalorder %s22, 3
      %p73 = scmp.ne.s32.totalorder %s68, %s70
      %p74 = scmp.eq.s32.totalorder %s22, 0
      %p75 = por %p73, %p74
      %p76 = scmp.ne.s32.totalorder %s68, %s70
      %p77 = scmp.eq.s32.totalorder %s27, 3
      %p78 = por %p76, %p77
      %p79 = scmp.ne.s32.totalorder %s70, %s71
      %p80 = scmp.eq.s32.totalorder %s27, 0
      %p81 = por %p79, %p80
      %p82 = scmp.ne.s32.totalorder %s70, %s71
      %p83 = scmp.eq.s32.totalorder %s28, 3
      %p84 = por %p82, %p83
      %p86 = scmp.ne.s32.totalorder %s71, %s85
      %p87 = scmp.eq.s32.totalorder %s28, 0
      %p88 = por %p86, %p87
      %s90 = sadd.s32 %s89, 1
      %p93 = scmp.eq.s32.totalorder %s22, 3
      %p94 = scmp.ne.s32.totalorder %s89, %s91
      %p95 = scmp.eq.s32.totalorder %s22, 0
      %p96 = por %p94, %p95
      %p97 = scmp.ne.s32.totalorder %s89, %s91
      %p98 = scmp.eq.s32.totalorder %s27, 3
      %p99 = por %p97, %p98
      %p100 = scmp.ne.s32.totalorder %s91, %s92
      %p101 = scmp.eq.s32.totalorder %s27, 0
      %p102 = por %p100, %p101
      %p103 = scmp.ne.s32.totalorder %s91, %s92
      %p104 = scmp.eq.s32.totalorder %s28, 3
      %p105 = por %p103, %p104
      %p107 = scmp.ne.s32.totalorder %s92, %s106
      %p108 = scmp.eq.s32.totalorder %s28, 0
      %p109 = por %p107, %p108
      %s111 = sadd.s32 %s110, 1
      %p114 = scmp.eq.s32.totalorder %s22, 3
      %p115 = scmp.ne.s32.totalorder %s110, %s112
      %p116 = scmp.eq.s32.totalorder %s22, 0
      %p117 = por %p115, %p116
      %p118 = scmp.ne.s32.totalorder %s110, %s112
      %p119 = scmp.eq.s32.totalorder %s27, 3
      %p120 = por %p118, %p119
      %p121 = scmp.ne.s32.totalorder %s112, %s113
      %p122 = scmp.eq.s32.totalorder %s27, 0
      %p123 = por %p121, %p122
      %p124 = scmp.ne.s32.totalorder %s112, %s113
      %p125 = scmp.eq.s32.totalorder %s28, 3
      %p126 = por %p124, %p125
      %p128 = scmp.ne.s32.totalorder %s113, %s127
      %p129 = scmp.eq.s32.totalorder %s28, 0
      %p130 = por %p128, %p129
      %s132 = sadd.s32 %s131, 1
      %p135 = scmp.eq.s32.totalorder %s22, 3
      %p136 = scmp.ne.s32.totalorder %s131, %s133
      %p137 = scmp.eq.s32.totalorder %s22, 0
      %p138 = por %p136, %p137
      %p139 = scmp.ne.s32.totalorder %s131, %s133
      %p140 = scmp.eq.s32.totalorder %s27, 3
      %p141 = por %p139, %p140
      %p142 = scmp.ne.s32.totalorder %s133, %s134
      %p143 = scmp.eq.s32.totalorder %s27, 0
      %p144 = por %p142, %p143
      %p145 = scmp.ne.s32.totalorder %s133, %s134
      %p146 = scmp.eq.s32.totalorder %s28, 3
      %p147 = por %p145, %p146
      %p149 = scmp.ne.s32.totalorder %s134, %s148
      %p150 = scmp.eq.s32.totalorder %s28, 0
      %p151 = por %p149, %p150
      %s153 = sadd.s32 %s152, 1
      %p156 = scmp.eq.s32.totalorder %s22, 3
      %p157 = scmp.ne.s32.totalorder %s152, %s154
      %p158 = scmp.eq.s32.totalorder %s22, 0
      %p159 = por %p157, %p158
      %p160 = scmp.ne.s32.totalorder %s152, %s154
      %p161 = scmp.eq.s32.totalorder %s27, 3
      %p162 = por %p160, %p161
      %p163 = scmp.ne.s32.totalorder %s154, %s155
      %p164 = scmp.eq.s32.totalorder %s27, 0
      %p165 = por %p163, %p164
      %p166 = scmp.ne.s32.totalorder %s154, %s155
      %p167 = scmp.eq.s32.totalorder %s28, 3
      %p168 = por %p166, %p167
      %p170 = scmp.ne.s32.totalorder %s155, %s169
      %p171 = scmp.eq.s32.totalorder %s28, 0
      %p172 = por %p170, %p171
      %s174 = sadd.s32 %s173, 1
      %p177 = scmp.eq.s32.totalorder %s22, 3
      %p178 = scmp.ne.s32.totalorder %s173, %s175
      %p179 = scmp.eq.s32.totalorder %s22, 0
      %p180 = por %p178, %p179
      %p181 = scmp.ne.s32.totalorder %s173, %s175
      %p182 = scmp.eq.s32.totalorder %s27, 3
      %p183 = por %p181, %p182
      %p184 = scmp.ne.s32.totalorder %s175, %s176
      %p185 = scmp.eq.s32.totalorder %s27, 0
      %p186 = por %p184, %p185
      %p187 = scmp.ne.s32.totalorder %s175, %s176
      %p188 = scmp.eq.s32.totalorder %s28, 3
      %p189 = por %p187, %p188
      %p191 = scmp.ne.s32.totalorder %s176, %s190
      %p192 = scmp.eq.s32.totalorder %s28, 0
      %p193 = por %p191, %p192
      %s195 = sadd.s32 %s194, 1
      %p198 = scmp.eq.s32.totalorder %s22, 3
      %p199 = scmp.ne.s32.totalorder %s194, %s196
      %p200 = scmp.eq.s32.totalorder %s22, 0
      %p201 = por %p199, %p200
      %p202 = scmp.ne.s32.totalorder %s194, %s196
      %p203 = scmp.eq.s32.totalorder %s27, 3
      %p204 = por %p202, %p203
      %p205 = scmp.ne.s32.totalorder %s196, %s197
      %p206 = scmp.eq.s32.totalorder %s27, 0
      %p207 = por %p205, %p206
      %p208 = scmp.ne.s32.totalorder %s196, %s197
      %p209 = scmp.eq.s32.totalorder %s28, 3
      %p210 = por %p208, %p209
      %p212 = scmp.ne.s32.totalorder %s197, %s211
      %p213 = scmp.eq.s32.totalorder %s28, 0
      %p214 = por %p212, %p213
      %s215 = ssub.s32 %s29, %s41
      %s216 = ssub.s32 %s30, %s37
      %s217 = sor.u32 %s215, %s216
      %p218 = scmp.eq.s32.totalorder %s217, 0
      %s220 = sadd.s32 %s219, 1
      %s221 = scalar_select %p218, %s219, %s220
      %p224 = pneg %p218
      %p225 = scmp.eq.s32.totalorder %s22, 3
      %p226 = por %p224, %p225
      %p227 = scmp.ne.s32.totalorder %s219, %s222
      %p228 = scmp.eq.s32.totalorder %s22, 0
      %p229 = por %p227, %p228
      %p230 = scmp.ne.s32.totalorder %s219, %s222
      %p231 = scmp.eq.s32.totalorder %s27, 3
      %p232 = por %p230, %p231
      %p233 = scmp.ne.s32.totalorder %s222, %s223
      %p234 = scmp.eq.s32.totalorder %s27, 0
      %p235 = por %p233, %p234
      %p236 = scmp.ne.s32.totalorder %s222, %s223
      %p237 = scmp.eq.s32.totalorder %s28, 3
      %p238 = por %p236, %p237
      %p240 = scmp.ne.s32.totalorder %s223, %s239
      %p241 = scmp.eq.s32.totalorder %s28, 0
      %p242 = por %p240, %p241
      %p243 = scmp.le.s32.totalorder 1, %s22
      %p244 = scmp.lt.s32.totalorder %s22, 5
      %p245 = pnand %p243, %p244
      %p246 = pneg %p245
      // Predicated region
      $region9: #{tpu_custom_call.1} parent=5 // pred_check
        _
      $region10: #{tpu_custom_call.1} parent=5 // pred_check_branch
        %248 = sbr.rel (%p245) target = $region12
      $region11: #{tpu_custom_call.1} parent=5 // pred_region
        %s249 = ssub.s32 %s22, 1
        // Predicated region
        $region13: #{tpu_custom_call.1} parent=11 // pred_check
          %p250 = pneg %p81
        $region14: #{tpu_custom_call.1} parent=11 // pred_check_branch
          %252 = sbr.rel (%p250) target = $region16
        $region15: #{tpu_custom_call.1} parent=11 // pred_region
          %254 = vsyncadd [#allocation8], 0
          %s255 = sshll.u32 %s1, 4
          %s256 = int_to_ptr.hbm [resolvable:$true] %s255
          %s257 = sshll.u32 [#allocation7], 4
          %s258 = int_to_ptr.vmem [resolvable:$true] %s257
          %263 = dma.hbm_to_vmem [thread:$0]  %s256, 2048, %s258, [#allocation8], 128, 128, 8
        $region16: #{tpu_custom_call.1} parent=11 // pred_fallthru
          _
        // Predicated region
        $region17: #{tpu_custom_call.1} parent=11 // pred_check
          %p264 = pneg %p102
        $region18: #{tpu_custom_call.1} parent=11 // pred_check_branch
          %266 = sbr.rel (%p264) target = $region20
        $region19: #{tpu_custom_call.1} parent=11 // pred_region
          _
        $region20: #{tpu_custom_call.1} parent=11 // pred_fallthru
          _
        // Predicated region
        $region21: #{tpu_custom_call.1} parent=11 // pred_check
          %p267 = pneg %p123
        $region22: #{tpu_custom_call.1} parent=11 // pred_check_branch
          %269 = sbr.rel (%p267) target = $region24
        $region23: #{tpu_custom_call.1} parent=11 // pred_region
          _
        $region24: #{tpu_custom_call.1} parent=11 // pred_fallthru
          _
        // Predicated region
        $region25: #{tpu_custom_call.1} parent=11 // pred_check
          %p270 = pneg %p144
        $region26: #{tpu_custom_call.1} parent=11 // pred_check_branch
          %272 = sbr.rel (%p270) target = $region28
        $region27: #{tpu_custom_call.1} parent=11 // pred_region
          %274 = vsyncadd [#allocation8], 0
          %s275 = sshll.u32 %s4, 4
          %s276 = int_to_ptr.hbm [resolvable:$true] %s275
          %s277 = sshll.u32 [#allocation9], 4
          %s278 = int_to_ptr.vmem [resolvable:$true] %s277
          %283 = dma.hbm_to_vmem [thread:$0]  %s276, 9216, %s278, [#allocation8], 64, 64, 4
        $region28: #{tpu_custom_call.1} parent=11 // pred_fallthru
          _
        // Predicated region
        $region29: #{tpu_custom_call.1} parent=11 // pred_check
          %p284 = pneg %p165
        $region30: #{tpu_custom_call.1} parent=11 // pred_check_branch
          %286 = sbr.rel (%p284) target = $region32
        $region31: #{tpu_custom_call.1} parent=11 // pred_region
          _
        $region32: #{tpu_custom_call.1} parent=11 // pred_fallthru
          _
        // Predicated region
        $region33: #{tpu_custom_call.1} parent=11 // pred_check
          %p287 = pneg %p186
        $region34: #{tpu_custom_call.1} parent=11 // pred_check_branch
          %289 = sbr.rel (%p287) target = $region36
        $region35: #{tpu_custom_call.1} parent=11 // pred_region
          %291 = vsyncadd [#allocation11], 0
          %s292 = sshll.u32 %s6, 4
          %s293 = int_to_ptr.hbm [resolvable:$true] %s292
          %s294 = sshll.u32 [#allocation10], 4
          %s295 = int_to_ptr.vmem [resolvable:$true] %s294
          %300 = dma.hbm_to_vmem [thread:$0]  %s293, 1024, %s295, [#allocation11], 64, 64, 4
        $region36: #{tpu_custom_call.1} parent=11 // pred_fallthru
          _
        // Predicated region
        $region37: #{tpu_custom_call.1} parent=11 // pred_check
          %p301 = pneg %p207
        $region38: #{tpu_custom_call.1} parent=11 // pred_check_branch
          %303 = sbr.rel (%p301) target = $region40
        $region39: #{tpu_custom_call.1} parent=11 // pred_region
          _
        $region40: #{tpu_custom_call.1} parent=11 // pred_fallthru
          _
      $region12: #{tpu_custom_call.1} parent=5 // pred_fallthru
        _
      %p304 = scmp.lt.s32.totalorder %s22, 4
      // Predicated region
      $region41: #{tpu_custom_call.1} parent=5 // pred_check
        %p305 = pneg %p304
      $region42: #{tpu_custom_call.1} parent=5 // pred_check_branch
        %307 = sbr.rel (%p305) target = $region44
      $region43: #{tpu_custom_call.1} parent=5 // pred_region
        // Predicated region
        $region45: #{tpu_custom_call.1} parent=43 // pred_check
          %p308 = pneg %p54
        $region46: #{tpu_custom_call.1} parent=43 // pred_check_branch
          %310 = sbr.rel (%p308) target = $region48
        $region47: #{tpu_custom_call.1} parent=43 // pred_region
          %s311 = sand.u32 %s44, 1
          %s312 = scalar_lea.sflag [#allocation5], %s311
          %s313 = sand.u32 %s44, 1
          %s314 = smul.addr %s313, 288
          %s315 = scalar_lea.vmem [#allocation4], %s314
          %317 = vsyncadd %s312, 0
          %s318 = smul.addr %s29, 72
          %s319 = smul.addr %s318, 4
          %s320 = scalar_lea.hbm %s0, %s319
          %s321 = sshll.u32 %s320, 4
          %s322 = int_to_ptr.hbm [resolvable:$true] %s321
          %s323 = sshll.u32 %s315, 4
          %s324 = int_to_ptr.vmem [resolvable:$true] %s323
          %329 = dma.hbm_to_vmem [thread:$0]  %s322, 4608, %s324, %s312, 64, 64, 4
        $region48: #{tpu_custom_call.1} parent=43 // pred_fallthru
          _
      $region44: #{tpu_custom_call.1} parent=5 // pred_fallthru
        _
      %p330 = scmp.le.s32.totalorder 1, %s22
      %p331 = scmp.lt.s32.totalorder %s22, 5
      %p332 = pnand %p330, %p331
      %p333 = pneg %p332
      // Predicated region
      $region49: #{tpu_custom_call.1} parent=5 // pred_check
        _
      $region50: #{tpu_custom_call.1} parent=5 // pred_check_branch
        %335 = sbr.rel (%p332) target = $region52
      $region51: #{tpu_custom_call.1} parent=5 // pred_region
        %s336 = ssub.s32 %s22, 1
        %s337 = sand.u32 %s47, 1
        %s338 = scalar_lea.sflag [#allocation5], %s337
        %s339 = sand.u32 %s47, 1
        %s340 = smul.addr %s339, 288
        %s341 = scalar_lea.vmem [#allocation4], %s340
        // Predicated region
        $region53: #{tpu_custom_call.1} parent=51 // pred_check
          %p342 = pneg %p60
        $region54: #{tpu_custom_call.1} parent=51 // pred_check_branch
          %344 = sbr.rel (%p342) target = $region56
        $region55: #{tpu_custom_call.1} parent=51 // pred_region
          %346 = dma.done %s338, 4608
        $region56: #{tpu_custom_call.1} parent=51 // pred_fallthru
          _
        // Predicated region
        $region57: #{tpu_custom_call.1} parent=51 // pred_check
          %p347 = pneg %p81
        $region58: #{tpu_custom_call.1} parent=51 // pred_check_branch
          %349 = sbr.rel (%p347) target = $region60
        $region59: #{tpu_custom_call.1} parent=51 // pred_region
          %351 = dma.done [#allocation8], 2048
        $region60: #{tpu_custom_call.1} parent=51 // pred_fallthru
          _
        // Predicated region
        $region61: #{tpu_custom_call.1} parent=51 // pred_check
          %p352 = pneg %p144
        $region62: #{tpu_custom_call.1} parent=51 // pred_check_branch
          %354 = sbr.rel (%p352) target = $region64
        $region63: #{tpu_custom_call.1} parent=51 // pred_region
          %356 = dma.done [#allocation8], 9216
        $region64: #{tpu_custom_call.1} parent=51 // pred_fallthru
          _
        // Predicated region
        $region65: #{tpu_custom_call.1} parent=51 // pred_check
          %p357 = pneg %p186
        $region66: #{tpu_custom_call.1} parent=51 // pred_check_branch
          %359 = sbr.rel (%p357) target = $region68
        $region67: #{tpu_custom_call.1} parent=51 // pred_region
          %361 = dma.done [#allocation11], 1024
        $region68: #{tpu_custom_call.1} parent=51 // pred_fallthru
          _
        %s362 = sand.u32 %s47, 1
        %s363 = scalar_lea.sflag [#allocation5], %s362
        %s364 = sand.u32 %s47, 1
        %s365 = smul.addr %s364, 288
        %s366 = scalar_lea.vmem [#allocation4], %s365
        %p367 = pneg %p60
        %p368 = pneg %p57
        %p369 = pneg %p81
        %p370 = pneg %p78
        %p371 = pneg %p102
        %p372 = pneg %p99
        %p373 = pneg %p123
        %p374 = pneg %p120
        %p375 = pneg %p144
        %p376 = pneg %p141
        %p377 = pneg %p165
        %p378 = pneg %p162
        %p379 = pneg %p186
        %p380 = pneg %p183
        %p381 = pneg %p207
        %p382 = pneg %p204
        %p383 = pneg %p235
        %p384 = pneg %p232
        %s385 = sand.u32 %s222, 1
        %s386 = scalar_lea.sflag [#allocation6], %s385
        %s387 = sand.u32 %s222, 1
        %s388 = smul.addr %s387, 256
        %s389 = scalar_lea.vmem [#allocation12], %s388
        %s390 = smul.u32 32, %s32
        %s391 = smul.u32 %s32, 256
        %s392 = sshra.s32 %s391, 3
        %s393 = sand.u32 %s391, 7
        %s394 = smul.addr %s392, 4
        %s395 = scalar_lea.vmem %s341, %s394 [#allocation4]
        %v396 = vld [vmem:[%s395] sm:$0xf]
        %v397 = vld [vmem:[%s395 + $0x4] sm:$0xf]
        %v398 = vld [vmem:[%s395 + $0x8] sm:$0xf]
        %v399 = vld [vmem:[%s395 + $0xc] sm:$0xf]
        %v400 = vld [vmem:[%s395 + $0x10] sm:$0xf]
        %v401 = vld [vmem:[%s395 + $0x14] sm:$0xf]
        %v402 = vld [vmem:[%s395 + $0x18] sm:$0xf]
        %v403 = vld [vmem:[%s395 + $0x1c] sm:$0xf]
        %v404 = vld [vmem:[%s395 + $0x20] sm:$0xf]
        %v405 = vld [vmem:[%s395 + $0x24] sm:$0xf]
        %v406 = vld [vmem:[%s395 + $0x28] sm:$0xf]
        %v407 = vld [vmem:[%s395 + $0x2c] sm:$0xf]
        %v408 = vld [vmem:[%s395 + $0x30] sm:$0xf]
        %v409 = vld [vmem:[%s395 + $0x34] sm:$0xf]
        %v410 = vld [vmem:[%s395 + $0x38] sm:$0xf]
        %v411 = vld [vmem:[%s395 + $0x3c] sm:$0xf]
        %v412 = vld [vmem:[%s395 + $0x40] sm:$0xf]
        %v413 = vld [vmem:[%s395 + $0x44] sm:$0xf]
        %v414 = vld [vmem:[%s395 + $0x48] sm:$0xf]
        %v415 = vld [vmem:[%s395 + $0x4c] sm:$0xf]
        %v416 = vld [vmem:[%s395 + $0x50] sm:$0xf]
        %v417 = vld [vmem:[%s395 + $0x54] sm:$0xf]
        %v418 = vld [vmem:[%s395 + $0x58] sm:$0xf]
        %v419 = vld [vmem:[%s395 + $0x5c] sm:$0xf]
        %v420 = vld [vmem:[%s395 + $0x60] sm:$0xf]
        %v421 = vld [vmem:[%s395 + $0x64] sm:$0xf]
        %v422 = vld [vmem:[%s395 + $0x68] sm:$0xf]
        %v423 = vld [vmem:[%s395 + $0x6c] sm:$0xf]
        %v424 = vld [vmem:[%s395 + $0x70] sm:$0xf]
        %v425 = vld [vmem:[%s395 + $0x74] sm:$0xf]
        %v426 = vld [vmem:[%s395 + $0x78] sm:$0xf]
        %v427 = vld [vmem:[%s395 + $0x7c] sm:$0xf]
        %v428 = vld [vmem:[%s395 + $0x80] sm:$0xf]
        %v429 = vld [vmem:[%s395 + $0x84] sm:$0xf]
        %v430 = vld [vmem:[%s395 + $0x88] sm:$0xf]
        %v431 = vld [vmem:[%s395 + $0x8c] sm:$0xf]
        %v432 = vld [vmem:[%s395 + $0x90] sm:$0xf]
        %v433 = vld [vmem:[%s395 + $0x94] sm:$0xf]
        %v434 = vld [vmem:[%s395 + $0x98] sm:$0xf]
        %v435 = vld [vmem:[%s395 + $0x9c] sm:$0xf]
        %v436 = vld [vmem:[#allocation7] sm:$0xff]
        %v437 = vld [vmem:[#allocation7 + $0x8] sm:$0xff]
        %v438 = vld [vmem:[#allocation7 + $0x10] sm:$0xff]
        %v439 = vld [vmem:[#allocation7 + $0x18] sm:$0xff]
        %v440 = vld [vmem:[#allocation7 + $0x20] sm:$0xff]
        %v441 = vld [vmem:[#allocation7 + $0x28] sm:$0xff]
        %v442 = vld [vmem:[#allocation7 + $0x30] sm:$0xff]
        %v443 = vld [vmem:[#allocation7 + $0x38] sm:$0xff]
        %v444 = vld [vmem:[#allocation7 + $0x40] sm:$0xff]
        %v445 = vld [vmem:[#allocation7 + $0x48] sm:$0xff]
        %v446 = vld [vmem:[#allocation7 + $0x50] sm:$0xff]
        %v447 = vld [vmem:[#allocation7 + $0x58] sm:$0xff]
        %v448 = vld [vmem:[#allocation7 + $0x60] sm:$0xff]
        %v449 = vld [vmem:[#allocation7 + $0x68] sm:$0xff]
        %v450 = vld [vmem:[#allocation7 + $0x70] sm:$0xff]
        %v451 = vld [vmem:[#allocation7 + $0x78] sm:$0xff]
        %v492 = vunpack.c.l.b16 %v396
        %v493 = vunpack.c.l.b16 %v397
        %v494 = vunpack.c.l.b16 %v398
        %v495 = vunpack.c.l.b16 %v399
        %v496 = vunpack.c.l.b16 %v400
        %v497 = vunpack.c.l.b16 %v401
        %v498 = vunpack.c.l.b16 %v402
        %v499 = vunpack.c.l.b16 %v403
        %v500 = vunpack.c.l.b16 %v404
        %v501 = vunpack.c.l.b16 %v405
        %v502 = vunpack.c.l.b16 %v406
        %v503 = vunpack.c.l.b16 %v407
        %v504 = vunpack.c.l.b16 %v408
        %v505 = vunpack.c.l.b16 %v409
        %v506 = vunpack.c.l.b16 %v410
        %v507 = vunpack.c.l.b16 %v411
        %v508 = vunpack.c.l.b16 %v412
        %v509 = vunpack.c.l.b16 %v413
        %v510 = vunpack.c.l.b16 %v414
        %v511 = vunpack.c.l.b16 %v415
        %v512 = vunpack.c.l.b16 %v416
        %v513 = vunpack.c.l.b16 %v417
        %v514 = vunpack.c.l.b16 %v418
        %v515 = vunpack.c.l.b16 %v419
        %v516 = vunpack.c.l.b16 %v420
        %v517 = vunpack.c.l.b16 %v421
        %v518 = vunpack.c.l.b16 %v422
        %v519 = vunpack.c.l.b16 %v423
        %v520 = vunpack.c.l.b16 %v424
        %v521 = vunpack.c.l.b16 %v425
        %v522 = vunpack.c.l.b16 %v426
        %v523 = vunpack.c.l.b16 %v427
        %v524 = vunpack.c.l.b16 %v428
        %v525 = vunpack.c.l.b16 %v429
        %v526 = vunpack.c.l.b16 %v430
        %v527 = vunpack.c.l.b16 %v431
        %v528 = vunpack.c.l.b16 %v432
        %v529 = vunpack.c.l.b16 %v433
        %v530 = vunpack.c.l.b16 %v434
        %v531 = vunpack.c.l.b16 %v435
        %v532 = vpack.c.b16 %v493, %v492
        %v533 = vpack.c.b16 %v495, %v494
        %v534 = vpack.c.b16 %v497, %v496
        %v535 = vpack.c.b16 %v499, %v498
        %v536 = vpack.c.b16 %v501, %v500
        %v537 = vpack.c.b16 %v503, %v502
        %v538 = vpack.c.b16 %v505, %v504
        %v539 = vpack.c.b16 %v507, %v506
        %v540 = vpack.c.b16 %v509, %v508
        %v541 = vpack.c.b16 %v511, %v510
        %v542 = vpack.c.b16 %v513, %v512
        %v543 = vpack.c.b16 %v515, %v514
        %v544 = vpack.c.b16 %v517, %v516
        %v545 = vpack.c.b16 %v519, %v518
        %v546 = vpack.c.b16 %v521, %v520
        %v547 = vpack.c.b16 %v523, %v522
        %v548 = vpack.c.b16 %v525, %v524
        %v549 = vpack.c.b16 %v527, %v526
        %v550 = vpack.c.b16 %v529, %v528
        %v551 = vpack.c.b16 %v531, %v530
        %v588 = vunpack.c.l.b16 %v436
        %v589 = vunpack.c.h.b16 %v436
        %v590 = vunpack.c.l.b16 %v437
        %v591 = vunpack.c.h.b16 %v437
        %v592 = vunpack.c.l.b16 %v438
        %v593 = vunpack.c.h.b16 %v438
        %v594 = vunpack.c.l.b16 %v439
        %v595 = vunpack.c.h.b16 %v439
        %v596 = vunpack.c.l.b16 %v440
        %v597 = vunpack.c.h.b16 %v440
        %v598 = vunpack.c.l.b16 %v441
        %v599 = vunpack.c.h.b16 %v441
        %v600 = vunpack.c.l.b16 %v442
        %v601 = vunpack.c.h.b16 %v442
        %v602 = vunpack.c.l.b16 %v443
        %v603 = vunpack.c.h.b16 %v443
        %v604 = vunpack.c.l.b16 %v444
        %v605 = vunpack.c.h.b16 %v444
        %v606 = vunpack.c.l.b16 %v445
        %v607 = vunpack.c.h.b16 %v445
        %v608 = vunpack.c.l.b16 %v446
        %v609 = vunpack.c.h.b16 %v446
        %v610 = vunpack.c.l.b16 %v447
        %v611 = vunpack.c.h.b16 %v447
        %v612 = vunpack.c.l.b16 %v448
        %v613 = vunpack.c.h.b16 %v448
        %v614 = vunpack.c.l.b16 %v449
        %v615 = vunpack.c.h.b16 %v449
        %v616 = vunpack.c.l.b16 %v450
        %v617 = vunpack.c.h.b16 %v450
        %v618 = vunpack.c.l.b16 %v451
        %v619 = vunpack.c.h.b16 %v451
        %v620 = vpack.c.b16 %v590, %v588
        %v621 = vpack.c.b16 %v591, %v589
        %v622 = vpack.c.b16 %v594, %v592
        %v623 = vpack.c.b16 %v595, %v593
        %v624 = vpack.c.b16 %v598, %v596
        %v625 = vpack.c.b16 %v599, %v597
        %v626 = vpack.c.b16 %v602, %v600
        %v627 = vpack.c.b16 %v603, %v601
        %v628 = vpack.c.b16 %v606, %v604
        %v629 = vpack.c.b16 %v607, %v605
        %v630 = vpack.c.b16 %v610, %v608
        %v631 = vpack.c.b16 %v611, %v609
        %v632 = vpack.c.b16 %v614, %v612
        %v633 = vpack.c.b16 %v615, %v613
        %v634 = vpack.c.b16 %v618, %v616
        %v635 = vpack.c.b16 %v619, %v617
        %652 = vmatpush.bf16.msra.mxu0 %v634
        %653 = vmatpush.bf16.msra.mxu0 %v632
        %654 = vmatpush.bf16.msra.mxu0 %v630
        %655 = vmatpush.bf16.msra.mxu0 %v628
        %656 = vmatpush.bf16.msra.mxu0 %v626
        %657 = vmatpush.bf16.msra.mxu0 %v624
        %658 = vmatpush.bf16.msra.mxu0 %v622
        %659 = vmatpush.bf16.msra.mxu0 %v620
        %660 = vmatmul.bf16.gmra.mxu0 %v532
        %v661 = vpop.f32.mrf.mxu0
        %v662 = vadd.f32 0.0, %v661
        %v663 = vpop.f32.mrf.mxu0
        %v664 = vadd.f32 0.0, %v663
        %665 = vmatmul.bf16.gmra.mxu0 %v533
        %v666 = vpop.f32.mrf.mxu0
        %v667 = vadd.f32 0.0, %v666
        %v668 = vpop.f32.mrf.mxu0
        %v669 = vadd.f32 0.0, %v668
        %670 = vmatmul.bf16.gmra.mxu0 %v534
        %v671 = vpop.f32.mrf.mxu0
        %v672 = vadd.f32 0.0, %v671
        %v673 = vpop.f32.mrf.mxu0
        %v674 = vadd.f32 0.0, %v673
        %675 = vmatmul.bf16.gmra.mxu0 %v535
        %v676 = vpop.f32.mrf.mxu0
        %v677 = vadd.f32 0.0, %v676
        %v678 = vpop.f32.mrf.mxu0
        %v679 = vadd.f32 0.0, %v678
        %680 = vmatmul.bf16.gmra.mxu0 %v536
        %v681 = vpop.f32.mrf.mxu0
        %v682 = vadd.f32 0.0, %v681
        %v683 = vpop.f32.mrf.mxu0
        %v684 = vadd.f32 0.0, %v683
        %685 = vmatmul.bf16.gmra.mxu0 %v537
        %v686 = vpop.f32.mrf.mxu0
        %v687 = vadd.f32 0.0, %v686
        %v688 = vpop.f32.mrf.mxu0
        %v689 = vadd.f32 0.0, %v688
        %690 = vmatmul.bf16.gmra.mxu0 %v538
        %v691 = vpop.f32.mrf.mxu0
        %v692 = vadd.f32 0.0, %v691
        %v693 = vpop.f32.mrf.mxu0
        %v694 = vadd.f32 0.0, %v693
        %695 = vmatmul.bf16.gmra.mxu0 %v539
        %v696 = vpop.f32.mrf.mxu0
        %v697 = vadd.f32 0.0, %v696
        %v698 = vpop.f32.mrf.mxu0
        %v699 = vadd.f32 0.0, %v698
        %700 = vmatmul.bf16.gmra.mxu0 %v540
        %v701 = vpop.f32.mrf.mxu0
        %v702 = vadd.f32 0.0, %v701
        %v703 = vpop.f32.mrf.mxu0
        %v704 = vadd.f32 0.0, %v703
        %705 = vmatmul.bf16.gmra.mxu0 %v541
        %v706 = vpop.f32.mrf.mxu0
        %v707 = vadd.f32 0.0, %v706
        %v708 = vpop.f32.mrf.mxu0
        %v709 = vadd.f32 0.0, %v708
        %710 = vmatmul.bf16.gmra.mxu0 %v542
        %v711 = vpop.f32.mrf.mxu0
        %v712 = vadd.f32 0.0, %v711
        %v713 = vpop.f32.mrf.mxu0
        %v714 = vadd.f32 0.0, %v713
        %715 = vmatmul.bf16.gmra.mxu0 %v543
        %v716 = vpop.f32.mrf.mxu0
        %v717 = vadd.f32 0.0, %v716
        %v718 = vpop.f32.mrf.mxu0
        %v719 = vadd.f32 0.0, %v718
        %720 = vmatmul.bf16.gmra.mxu0 %v544
        %v721 = vpop.f32.mrf.mxu0
        %v722 = vadd.f32 0.0, %v721
        %v723 = vpop.f32.mrf.mxu0
        %v724 = vadd.f32 0.0, %v723
        %725 = vmatmul.bf16.gmra.mxu0 %v545
        %v726 = vpop.f32.mrf.mxu0
        %v727 = vadd.f32 0.0, %v726
        %v728 = vpop.f32.mrf.mxu0
        %v729 = vadd.f32 0.0, %v728
        %730 = vmatmul.bf16.gmra.mxu0 %v546
        %v731 = vpop.f32.mrf.mxu0
        %v732 = vadd.f32 0.0, %v731
        %v733 = vpop.f32.mrf.mxu0
        %v734 = vadd.f32 0.0, %v733
        %735 = vmatmul.bf16.gmra.mxu0 %v547
        %v736 = vpop.f32.mrf.mxu0
        %v737 = vadd.f32 0.0, %v736
        %v738 = vpop.f32.mrf.mxu0
        %v739 = vadd.f32 0.0, %v738
        %740 = vmatmul.bf16.gmra.mxu0 %v548
        %v741 = vpop.f32.mrf.mxu0
        %v742 = vadd.f32 0.0, %v741
        %v743 = vpop.f32.mrf.mxu0
        %v744 = vadd.f32 0.0, %v743
        %745 = vmatmul.bf16.gmra.mxu0 %v549
        %v746 = vpop.f32.mrf.mxu0
        %v747 = vadd.f32 0.0, %v746
        %v748 = vpop.f32.mrf.mxu0
        %v749 = vadd.f32 0.0, %v748
        %750 = vmatmul.bf16.gmra.mxu0 %v550
        %v751 = vpop.f32.mrf.mxu0
        %v752 = vadd.f32 0.0, %v751
        %v753 = vpop.f32.mrf.mxu0
        %v754 = vadd.f32 0.0, %v753
        %755 = vmatmul.bf16.gmra.mxu0 %v551
        %v756 = vpop.f32.mrf.mxu0
        %v757 = vadd.f32 0.0, %v756
        %v758 = vpop.f32.mrf.mxu0
        %v759 = vadd.f32 0.0, %v758
        %760 = vdwg.mxu0
        %761 = vmatpush.bf16.msra.mxu0 %v635
        %762 = vmatpush.bf16.msra.mxu0 %v633
        %763 = vmatpush.bf16.msra.mxu0 %v631
        %764 = vmatpush.bf16.msra.mxu0 %v629
        %765 = vmatpush.bf16.msra.mxu0 %v627
        %766 = vmatpush.bf16.msra.mxu0 %v625
        %767 = vmatpush.bf16.msra.mxu0 %v623
        %768 = vmatpush.bf16.msra.mxu0 %v621
        %769 = vmatmul.bf16.gmra.mxu0 %v532
        %v770 = vpop.f32.mrf.mxu0
        %v771 = vpop.f32.mrf.mxu0
        %772 = vmatmul.bf16.gmra.mxu0 %v533
        %v773 = vpop.f32.mrf.mxu0
        %v774 = vpop.f32.mrf.mxu0
        %v775 = vadd.f32 0.0, %v774
        %776 = vmatmul.bf16.gmra.mxu0 %v534
        %v777 = vpop.f32.mrf.mxu0
        %v778 = vadd.f32 0.0, %v777
        %v779 = vpop.f32.mrf.mxu0
        %v780 = vadd.f32 0.0, %v779
        %781 = vmatmul.bf16.gmra.mxu0 %v535
        %v782 = vpop.f32.mrf.mxu0
        %v783 = vadd.f32 0.0, %v782
        %v784 = vpop.f32.mrf.mxu0
        %v785 = vadd.f32 0.0, %v784
        %786 = vmatmul.bf16.gmra.mxu0 %v536
        %v787 = vpop.f32.mrf.mxu0
        %v788 = vadd.f32 0.0, %v787
        %v789 = vpop.f32.mrf.mxu0
        %v790 = vadd.f32 0.0, %v789
        %791 = vmatmul.bf16.gmra.mxu0 %v537
        %v792 = vpop.f32.mrf.mxu0
        %v793 = vadd.f32 0.0, %v792
        %v794 = vpop.f32.mrf.mxu0
        %v795 = vadd.f32 0.0, %v794
        %796 = vmatmul.bf16.gmra.mxu0 %v538
        %v797 = vpop.f32.mrf.mxu0
        %v798 = vadd.f32 0.0, %v797
        %v799 = vpop.f32.mrf.mxu0
        %v800 = vadd.f32 0.0, %v799
        %801 = vmatmul.bf16.gmra.mxu0 %v539
        %v802 = vpop.f32.mrf.mxu0
        %v803 = vadd.f32 0.0, %v802
        %v804 = vpop.f32.mrf.mxu0
        %v805 = vadd.f32 0.0, %v804
        %806 = vmatmul.bf16.gmra.mxu0 %v540
        %v807 = vpop.f32.mrf.mxu0
        %v808 = vadd.f32 0.0, %v807
        %v809 = vpop.f32.mrf.mxu0
        %v810 = vadd.f32 0.0, %v809
        %811 = vmatmul.bf16.gmra.mxu0 %v541
        %v812 = vpop.f32.mrf.mxu0
        %v813 = vadd.f32 0.0, %v812
        %v814 = vpop.f32.mrf.mxu0
        %v815 = vadd.f32 0.0, %v814
        %816 = vmatmul.bf16.gmra.mxu0 %v542
        %v817 = vpop.f32.mrf.mxu0
        %v818 = vadd.f32 0.0, %v817
        %v819 = vpop.f32.mrf.mxu0
        %v820 = vadd.f32 0.0, %v819
        %821 = vmatmul.bf16.gmra.mxu0 %v543
        %v822 = vpop.f32.mrf.mxu0
        %v823 = vadd.f32 0.0, %v822
        %v824 = vpop.f32.mrf.mxu0
        %v825 = vadd.f32 0.0, %v824
        %826 = vmatmul.bf16.gmra.mxu0 %v544
        %v827 = vpop.f32.mrf.mxu0
        %v828 = vadd.f32 0.0, %v827
        %v829 = vpop.f32.mrf.mxu0
        %v830 = vadd.f32 0.0, %v829
        %831 = vmatmul.bf16.gmra.mxu0 %v545
        %v832 = vpop.f32.mrf.mxu0
        %v833 = vadd.f32 0.0, %v832
        %v834 = vpop.f32.mrf.mxu0
        %v835 = vadd.f32 0.0, %v834
        %836 = vmatmul.bf16.gmra.mxu0 %v546
        %v837 = vpop.f32.mrf.mxu0
        %v838 = vadd.f32 0.0, %v837
        %v839 = vpop.f32.mrf.mxu0
        %v840 = vadd.f32 0.0, %v839
        %841 = vmatmul.bf16.gmra.mxu0 %v547
        %v842 = vpop.f32.mrf.mxu0
        %v843 = vadd.f32 0.0, %v842
        %v844 = vpop.f32.mrf.mxu0
        %v845 = vadd.f32 0.0, %v844
        %846 = vmatmul.bf16.gmra.mxu0 %v548
        %v847 = vpop.f32.mrf.mxu0
        %v848 = vadd.f32 0.0, %v847
        %v849 = vpop.f32.mrf.mxu0
        %v850 = vadd.f32 0.0, %v849
        %851 = vmatmul.bf16.gmra.mxu0 %v549
        %v852 = vpop.f32.mrf.mxu0
        %v853 = vadd.f32 0.0, %v852
        %v854 = vpop.f32.mrf.mxu0
        %v855 = vadd.f32 0.0, %v854
        %856 = vmatmul.bf16.gmra.mxu0 %v550
        %v857 = vpop.f32.mrf.mxu0
        %v858 = vpop.f32.mrf.mxu0
        %859 = vmatmul.bf16.gmra.mxu0 %v551
        %v860 = vpop.f32.mrf.mxu0
        %v861 = vpop.f32.mrf.mxu0
        %862 = vdwg.mxu0
        %v863 = vunpack.c.l.bf16 %v396
        %v864 = vunpack.c.l.bf16 %v397
        %v865 = vunpack.c.l.bf16 %v398
        %v866 = vunpack.c.l.bf16 %v399
        %v867 = vunpack.c.l.bf16 %v400
        %v868 = vunpack.c.l.bf16 %v401
        %v869 = vunpack.c.l.bf16 %v402
        %v870 = vunpack.c.l.bf16 %v403
        %v871 = vunpack.c.l.bf16 %v404
        %v872 = vunpack.c.l.bf16 %v405
        %v873 = vunpack.c.l.bf16 %v406
        %v874 = vunpack.c.l.bf16 %v407
        %v875 = vunpack.c.l.bf16 %v408
        %v876 = vunpack.c.l.bf16 %v409
        %v877 = vunpack.c.l.bf16 %v410
        %v878 = vunpack.c.l.bf16 %v411
        %v879 = vunpack.c.l.bf16 %v412
        %v880 = vunpack.c.l.bf16 %v413
        %v881 = vunpack.c.l.bf16 %v414
        %v882 = vunpack.c.l.bf16 %v415
        %v883 = vunpack.c.l.bf16 %v416
        %v884 = vunpack.c.l.bf16 %v417
        %v885 = vunpack.c.l.bf16 %v418
        %v886 = vunpack.c.l.bf16 %v419
        %v887 = vunpack.c.l.bf16 %v420
        %v888 = vunpack.c.l.bf16 %v421
        %v889 = vunpack.c.l.bf16 %v422
        %v890 = vunpack.c.l.bf16 %v423
        %v891 = vunpack.c.l.bf16 %v424
        %v892 = vunpack.c.l.bf16 %v425
        %v893 = vunpack.c.l.bf16 %v426
        %v894 = vunpack.c.l.bf16 %v427
        %v895 = vunpack.c.l.bf16 %v428
        %v896 = vunpack.c.l.bf16 %v429
        %v897 = vunpack.c.l.bf16 %v430
        %v898 = vunpack.c.l.bf16 %v431
        %v899 = vunpack.c.l.bf16 %v432
        %v900 = vunpack.c.l.bf16 %v433
        %v901 = vunpack.c.l.bf16 %v434
        %v902 = vunpack.c.l.bf16 %v435
        %v903 = vld [vmem:[%s2] sm:$0x1]
        %v905 = vperm.slane %v903, 0
        %v907 = vadd.f32 %v662, %v905
        %v908 = vadd.f32 %v664, %v905
        %v909 = vadd.f32 %v667, %v905
        %v910 = vadd.f32 %v669, %v905
        %v911 = vadd.f32 %v672, %v905
        %v912 = vadd.f32 %v674, %v905
        %v913 = vadd.f32 %v677, %v905
        %v914 = vadd.f32 %v679, %v905
        %v915 = vadd.f32 %v682, %v905
        %v916 = vadd.f32 %v684, %v905
        %v917 = vadd.f32 %v687, %v905
        %v918 = vadd.f32 %v689, %v905
        %v919 = vadd.f32 %v692, %v905
        %v920 = vadd.f32 %v694, %v905
        %v921 = vadd.f32 %v697, %v905
        %v922 = vadd.f32 %v699, %v905
        %v923 = vadd.f32 %v702, %v905
        %v924 = vadd.f32 %v704, %v905
        %v925 = vadd.f32 %v707, %v905
        %v926 = vadd.f32 %v709, %v905
        %v927 = vadd.f32 %v712, %v905
        %v928 = vadd.f32 %v714, %v905
        %v929 = vadd.f32 %v717, %v905
        %v930 = vadd.f32 %v719, %v905
        %v931 = vadd.f32 %v722, %v905
        %v932 = vadd.f32 %v724, %v905
        %v933 = vadd.f32 %v727, %v905
        %v934 = vadd.f32 %v729, %v905
        %v935 = vadd.f32 %v732, %v905
        %v936 = vadd.f32 %v734, %v905
        %v937 = vadd.f32 %v737, %v905
        %v938 = vadd.f32 %v739, %v905
        %v939 = vadd.f32 %v742, %v905
        %v940 = vadd.f32 %v744, %v905
        %v941 = vadd.f32 %v747, %v905
        %v942 = vadd.f32 %v749, %v905
        %v943 = vadd.f32 %v752, %v905
        %v944 = vadd.f32 %v754, %v905
        %v945 = vadd.f32 %v757, %v905
        %v946 = vadd.f32 %v759, %v905
        %v947 = vmax.f32 %v907, 0.0
        %v948 = vmax.f32 %v908, 0.0
        %v949 = vmax.f32 %v909, 0.0
        %v950 = vmax.f32 %v910, 0.0
        %v951 = vmax.f32 %v911, 0.0
        %v952 = vmax.f32 %v912, 0.0
        %v953 = vmax.f32 %v913, 0.0
        %v954 = vmax.f32 %v914, 0.0
        %v955 = vmax.f32 %v915, 0.0
        %v956 = vmax.f32 %v916, 0.0
        %v957 = vmax.f32 %v917, 0.0
        %v958 = vmax.f32 %v918, 0.0
        %v959 = vmax.f32 %v919, 0.0
        %v960 = vmax.f32 %v920, 0.0
        %v961 = vmax.f32 %v921, 0.0
        %v962 = vmax.f32 %v922, 0.0
        %v963 = vmax.f32 %v923, 0.0
        %v964 = vmax.f32 %v924, 0.0
        %v965 = vmax.f32 %v925, 0.0
        %v966 = vmax.f32 %v926, 0.0
        %v967 = vmax.f32 %v927, 0.0
        %v968 = vmax.f32 %v928, 0.0
        %v969 = vmax.f32 %v929, 0.0
        %v970 = vmax.f32 %v930, 0.0
        %v971 = vmax.f32 %v931, 0.0
        %v972 = vmax.f32 %v932, 0.0
        %v973 = vmax.f32 %v933, 0.0
        %v974 = vmax.f32 %v934, 0.0
        %v975 = vmax.f32 %v935, 0.0
        %v976 = vmax.f32 %v936, 0.0
        %v977 = vmax.f32 %v937, 0.0
        %v978 = vmax.f32 %v938, 0.0
        %v979 = vmax.f32 %v939, 0.0
        %v980 = vmax.f32 %v940, 0.0
        %v981 = vmax.f32 %v941, 0.0
        %v982 = vmax.f32 %v942, 0.0
        %v983 = vmax.f32 %v943, 0.0
        %v984 = vmax.f32 %v944, 0.0
        %v985 = vmax.f32 %v945, 0.0
        %v986 = vmax.f32 %v946, 0.0
        %988 = vset.pattern.permute.xlu0 4
        %989 = vperm.xlu0 %988, %v863
        %v990 = vpop.permute.xlu0 %989
        %993 = vset.pattern.permute.xlu0 4
        %994 = vperm.xlu0 %993, %v864
        %v995 = vpop.permute.xlu0 %994
        %998 = vset.pattern.permute.xlu0 4
        %999 = vperm.xlu0 %998, %v865
        %v1000 = vpop.permute.xlu0 %999
        %1003 = vset.pattern.permute.xlu0 4
        %1004 = vperm.xlu0 %1003, %v866
        %v1005 = vpop.permute.xlu0 %1004
        %1008 = vset.pattern.permute.xlu0 4
        %1009 = vperm.xlu0 %1008, %v867
        %v1010 = vpop.permute.xlu0 %1009
        %1013 = vset.pattern.permute.xlu0 4
        %1014 = vperm.xlu0 %1013, %v868
        %v1015 = vpop.permute.xlu0 %1014
        %1018 = vset.pattern.permute.xlu0 4
        %1019 = vperm.xlu0 %1018, %v869
        %v1020 = vpop.permute.xlu0 %1019
        %1023 = vset.pattern.permute.xlu0 4
        %1024 = vperm.xlu0 %1023, %v870
        %v1025 = vpop.permute.xlu0 %1024
        %1028 = vset.pattern.permute.xlu0 4
        %1029 = vperm.xlu0 %1028, %v871
        %v1030 = vpop.permute.xlu0 %1029
        %1033 = vset.pattern.permute.xlu0 4
        %1034 = vperm.xlu0 %1033, %v872
        %v1035 = vpop.permute.xlu0 %1034
        %1038 = vset.pattern.permute.xlu0 4
        %1039 = vperm.xlu0 %1038, %v873
        %v1040 = vpop.permute.xlu0 %1039
        %1043 = vset.pattern.permute.xlu0 4
        %1044 = vperm.xlu0 %1043, %v874
        %v1045 = vpop.permute.xlu0 %1044
        %1048 = vset.pattern.permute.xlu0 4
        %1049 = vperm.xlu0 %1048, %v875
        %v1050 = vpop.permute.xlu0 %1049
        %1053 = vset.pattern.permute.xlu0 4
        %1054 = vperm.xlu0 %1053, %v876
        %v1055 = vpop.permute.xlu0 %1054
        %1058 = vset.pattern.permute.xlu0 4
        %1059 = vperm.xlu0 %1058, %v877
        %v1060 = vpop.permute.xlu0 %1059
        %1063 = vset.pattern.permute.xlu0 4
        %1064 = vperm.xlu0 %1063, %v878
        %v1065 = vpop.permute.xlu0 %1064
        %1068 = vset.pattern.permute.xlu0 4
        %1069 = vperm.xlu0 %1068, %v879
        %v1070 = vpop.permute.xlu0 %1069
        %1073 = vset.pattern.permute.xlu0 4
        %1074 = vperm.xlu0 %1073, %v880
        %v1075 = vpop.permute.xlu0 %1074
        %1078 = vset.pattern.permute.xlu0 4
        %1079 = vperm.xlu0 %1078, %v881
        %v1080 = vpop.permute.xlu0 %1079
        %1083 = vset.pattern.permute.xlu0 4
        %1084 = vperm.xlu0 %1083, %v882
        %v1085 = vpop.permute.xlu0 %1084
        %1088 = vset.pattern.permute.xlu0 4
        %1089 = vperm.xlu0 %1088, %v883
        %v1090 = vpop.permute.xlu0 %1089
        %1093 = vset.pattern.permute.xlu0 4
        %1094 = vperm.xlu0 %1093, %v884
        %v1095 = vpop.permute.xlu0 %1094
        %1098 = vset.pattern.permute.xlu0 4
        %1099 = vperm.xlu0 %1098, %v885
        %v1100 = vpop.permute.xlu0 %1099
        %1103 = vset.pattern.permute.xlu0 4
        %1104 = vperm.xlu0 %1103, %v886
        %v1105 = vpop.permute.xlu0 %1104
        %1108 = vset.pattern.permute.xlu0 4
        %1109 = vperm.xlu0 %1108, %v887
        %v1110 = vpop.permute.xlu0 %1109
        %1113 = vset.pattern.permute.xlu0 4
        %1114 = vperm.xlu0 %1113, %v888
        %v1115 = vpop.permute.xlu0 %1114
        %1118 = vset.pattern.permute.xlu0 4
        %1119 = vperm.xlu0 %1118, %v889
        %v1120 = vpop.permute.xlu0 %1119
        %1123 = vset.pattern.permute.xlu0 4
        %1124 = vperm.xlu0 %1123, %v890
        %v1125 = vpop.permute.xlu0 %1124
        %1128 = vset.pattern.permute.xlu0 4
        %1129 = vperm.xlu0 %1128, %v891
        %v1130 = vpop.permute.xlu0 %1129
        %1133 = vset.pattern.permute.xlu0 4
        %1134 = vperm.xlu0 %1133, %v892
        %v1135 = vpop.permute.xlu0 %1134
        %1138 = vset.pattern.permute.xlu0 4
        %1139 = vperm.xlu0 %1138, %v893
        %v1140 = vpop.permute.xlu0 %1139
        %1143 = vset.pattern.permute.xlu0 4
        %1144 = vperm.xlu0 %1143, %v894
        %v1145 = vpop.permute.xlu0 %1144
        %1148 = vset.pattern.permute.xlu0 4
        %1149 = vperm.xlu0 %1148, %v895
        %v1150 = vpop.permute.xlu0 %1149
        %1153 = vset.pattern.permute.xlu0 4
        %1154 = vperm.xlu0 %1153, %v896
        %v1155 = vpop.permute.xlu0 %1154
        %1158 = vset.pattern.permute.xlu0 4
        %1159 = vperm.xlu0 %1158, %v897
        %v1160 = vpop.permute.xlu0 %1159
        %1163 = vset.pattern.permute.xlu0 4
        %1164 = vperm.xlu0 %1163, %v898
        %v1165 = vpop.permute.xlu0 %1164
        %1168 = vset.pattern.permute.xlu0 4
        %1169 = vperm.xlu0 %1168, %v899
        %v1170 = vpop.permute.xlu0 %1169
        %1173 = vset.pattern.permute.xlu0 4
        %1174 = vperm.xlu0 %1173, %v900
        %v1175 = vpop.permute.xlu0 %1174
        %1178 = vset.pattern.permute.xlu0 4
        %1179 = vperm.xlu0 %1178, %v901
        %v1180 = vpop.permute.xlu0 %1179
        %1183 = vset.pattern.permute.xlu0 4
        %1184 = vperm.xlu0 %1183, %v902
        %v1185 = vpop.permute.xlu0 %1184
        %v1187 = vmul.f32 %v947, %v990
        %v1188 = vmul.f32 %v948, %v995
        %v1189 = vmul.f32 %v949, %v1000
        %v1190 = vmul.f32 %v950, %v1005
        %v1191 = vmul.f32 %v951, %v1010
        %v1192 = vmul.f32 %v952, %v1015
        %v1193 = vmul.f32 %v953, %v1020
        %v1194 = vmul.f32 %v954, %v1025
        %v1195 = vmul.f32 %v955, %v1030
        %v1196 = vmul.f32 %v956, %v1035
        %v1197 = vmul.f32 %v957, %v1040
        %v1198 = vmul.f32 %v958, %v1045
        %v1199 = vmul.f32 %v959, %v1050
        %v1200 = vmul.f32 %v960, %v1055
        %v1201 = vmul.f32 %v961, %v1060
        %v1202 = vmul.f32 %v962, %v1065
        %v1203 = vmul.f32 %v963, %v1070
        %v1204 = vmul.f32 %v964, %v1075
        %v1205 = vmul.f32 %v965, %v1080
        %v1206 = vmul.f32 %v966, %v1085
        %v1207 = vmul.f32 %v967, %v1090
        %v1208 = vmul.f32 %v968, %v1095
        %v1209 = vmul.f32 %v969, %v1100
        %v1210 = vmul.f32 %v970, %v1105
        %v1211 = vmul.f32 %v971, %v1110
        %v1212 = vmul.f32 %v972, %v1115
        %v1213 = vmul.f32 %v973, %v1120
        %v1214 = vmul.f32 %v974, %v1125
        %v1215 = vmul.f32 %v975, %v1130
        %v1216 = vmul.f32 %v976, %v1135
        %v1217 = vmul.f32 %v977, %v1140
        %v1218 = vmul.f32 %v978, %v1145
        %v1219 = vmul.f32 %v979, %v1150
        %v1220 = vmul.f32 %v980, %v1155
        %v1221 = vmul.f32 %v981, %v1160
        %v1222 = vmul.f32 %v982, %v1165
        %v1223 = vmul.f32 %v983, %v1170
        %v1224 = vmul.f32 %v984, %v1175
        %v1225 = vmul.f32 %v985, %v1180
        %v1226 = vmul.f32 %v986, %v1185
        %v1227 = vpack.c.bf16 %v1187, %v1187
        %v1228 = vpack.c.bf16 %v1188, %v1188
        %v1229 = vpack.c.bf16 %v1189, %v1189
        %v1230 = vpack.c.bf16 %v1190, %v1190
        %v1231 = vpack.c.bf16 %v1191, %v1191
        %v1232 = vpack.c.bf16 %v1192, %v1192
        %v1233 = vpack.c.bf16 %v1193, %v1193
        %v1234 = vpack.c.bf16 %v1194, %v1194
        %v1235 = vpack.c.bf16 %v1195, %v1195
        %v1236 = vpack.c.bf16 %v1196, %v1196
        %v1237 = vpack.c.bf16 %v1197, %v1197
        %v1238 = vpack.c.bf16 %v1198, %v1198
        %v1239 = vpack.c.bf16 %v1199, %v1199
        %v1240 = vpack.c.bf16 %v1200, %v1200
        %v1241 = vpack.c.bf16 %v1201, %v1201
        %v1242 = vpack.c.bf16 %v1202, %v1202
        %v1243 = vpack.c.bf16 %v1203, %v1203
        %v1244 = vpack.c.bf16 %v1204, %v1204
        %v1245 = vpack.c.bf16 %v1205, %v1205
        %v1246 = vpack.c.bf16 %v1206, %v1206
        %v1247 = vpack.c.bf16 %v1207, %v1207
        %v1248 = vpack.c.bf16 %v1208, %v1208
        %v1249 = vpack.c.bf16 %v1209, %v1209
        %v1250 = vpack.c.bf16 %v1210, %v1210
        %v1251 = vpack.c.bf16 %v1211, %v1211
        %v1252 = vpack.c.bf16 %v1212, %v1212
        %v1253 = vpack.c.bf16 %v1213, %v1213
        %v1254 = vpack.c.bf16 %v1214, %v1214
        %v1255 = vpack.c.bf16 %v1215, %v1215
        %v1256 = vpack.c.bf16 %v1216, %v1216
        %v1257 = vpack.c.bf16 %v1217, %v1217
        %v1258 = vpack.c.bf16 %v1218, %v1218
        %v1259 = vpack.c.bf16 %v1219, %v1219
        %v1260 = vpack.c.bf16 %v1220, %v1220
        %v1261 = vpack.c.bf16 %v1221, %v1221
        %v1262 = vpack.c.bf16 %v1222, %v1222
        %v1263 = vpack.c.bf16 %v1223, %v1223
        %v1264 = vpack.c.bf16 %v1224, %v1224
        %v1265 = vpack.c.bf16 %v1225, %v1225
        %v1266 = vpack.c.bf16 %v1226, %v1226
        %1267 = vst [vmem:[#allocation2] sm:$0xf] %v1227
        %1268 = vst [vmem:[#allocation2 + $0x4] sm:$0xf] %v1228
        %1269 = vst [vmem:[#allocation2 + $0x8] sm:$0xf] %v1229
        %1270 = vst [vmem:[#allocation2 + $0xc] sm:$0xf] %v1230
        %1271 = vst [vmem:[#allocation2 + $0x10] sm:$0xf] %v1231
        %1272 = vst [vmem:[#allocation2 + $0x14] sm:$0xf] %v1232
        %1273 = vst [vmem:[#allocation2 + $0x18] sm:$0xf] %v1233
        %1274 = vst [vmem:[#allocation2 + $0x1c] sm:$0xf] %v1234
        %1275 = vst [vmem:[#allocation2 + $0x20] sm:$0xf] %v1235
        %1276 = vst [vmem:[#allocation2 + $0x24] sm:$0xf] %v1236
        %1277 = vst [vmem:[#allocation2 + $0x28] sm:$0xf] %v1237
        %1278 = vst [vmem:[#allocation2 + $0x2c] sm:$0xf] %v1238
        %1279 = vst [vmem:[#allocation2 + $0x30] sm:$0xf] %v1239
        %1280 = vst [vmem:[#allocation2 + $0x34] sm:$0xf] %v1240
        %1281 = vst [vmem:[#allocation2 + $0x38] sm:$0xf] %v1241
        %1282 = vst [vmem:[#allocation2 + $0x3c] sm:$0xf] %v1242
        %1283 = vst [vmem:[#allocation2 + $0x40] sm:$0xf] %v1243
        %1284 = vst [vmem:[#allocation2 + $0x44] sm:$0xf] %v1244
        %1285 = vst [vmem:[#allocation2 + $0x48] sm:$0xf] %v1245
        %1286 = vst [vmem:[#allocation2 + $0x4c] sm:$0xf] %v1246
        %1287 = vst [vmem:[#allocation2 + $0x50] sm:$0xf] %v1247
        %1288 = vst [vmem:[#allocation2 + $0x54] sm:$0xf] %v1248
        %1289 = vst [vmem:[#allocation2 + $0x58] sm:$0xf] %v1249
        %1290 = vst [vmem:[#allocation2 + $0x5c] sm:$0xf] %v1250
        %1291 = vst [vmem:[#allocation2 + $0x60] sm:$0xf] %v1251
        %1292 = vst [vmem:[#allocation2 + $0x64] sm:$0xf] %v1252
        %1293 = vst [vmem:[#allocation2 + $0x68] sm:$0xf] %v1253
        %1294 = vst [vmem:[#allocation2 + $0x6c] sm:$0xf] %v1254
        %1295 = vst [vmem:[#allocation2 + $0x70] sm:$0xf] %v1255
        %1296 = vst [vmem:[#allocation2 + $0x74] sm:$0xf] %v1256
        %1297 = vst [vmem:[#allocation2 + $0x78] sm:$0xf] %v1257
        %1298 = vst [vmem:[#allocation2 + $0x7c] sm:$0xf] %v1258
        %1299 = vst [vmem:[#allocation2 + $0x80] sm:$0xf] %v1259
        %1300 = vst [vmem:[#allocation2 + $0x84] sm:$0xf] %v1260
        %1301 = vst [vmem:[#allocation2 + $0x88] sm:$0xf] %v1261
        %1302 = vst [vmem:[#allocation2 + $0x8c] sm:$0xf] %v1262
        %1303 = vst [vmem:[#allocation2 + $0x90] sm:$0xf] %v1263
        %1304 = vst [vmem:[#allocation2 + $0x94] sm:$0xf] %v1264
        %1305 = vst [vmem:[#allocation2 + $0x98] sm:$0xf] %v1265
        %1306 = vst [vmem:[#allocation2 + $0x9c] sm:$0xf] %v1266
        %v1307 = vld [vmem:[%s3] sm:$0x1]
        %v1309 = vperm.slane %v1307, 0
        %v1311 = vadd.f32 %v775, %v1309
        %v1312 = vadd.f32 %v778, %v1309
        %v1313 = vadd.f32 %v780, %v1309
        %v1314 = vadd.f32 %v783, %v1309
        %v1315 = vadd.f32 %v785, %v1309
        %v1316 = vadd.f32 %v788, %v1309
        %v1317 = vadd.f32 %v790, %v1309
        %v1318 = vadd.f32 %v793, %v1309
        %v1319 = vadd.f32 %v795, %v1309
        %v1320 = vadd.f32 %v798, %v1309
        %v1321 = vadd.f32 %v800, %v1309
        %v1322 = vadd.f32 %v803, %v1309
        %v1323 = vadd.f32 %v805, %v1309
        %v1324 = vadd.f32 %v808, %v1309
        %v1325 = vadd.f32 %v810, %v1309
        %v1326 = vadd.f32 %v813, %v1309
        %v1327 = vadd.f32 %v815, %v1309
        %v1328 = vadd.f32 %v818, %v1309
        %v1329 = vadd.f32 %v820, %v1309
        %v1330 = vadd.f32 %v823, %v1309
        %v1331 = vadd.f32 %v825, %v1309
        %v1332 = vadd.f32 %v828, %v1309
        %v1333 = vadd.f32 %v830, %v1309
        %v1334 = vadd.f32 %v833, %v1309
        %v1335 = vadd.f32 %v835, %v1309
        %v1336 = vadd.f32 %v838, %v1309
        %v1337 = vadd.f32 %v840, %v1309
        %v1338 = vadd.f32 %v843, %v1309
        %v1339 = vadd.f32 %v845, %v1309
        %v1340 = vadd.f32 %v848, %v1309
        %v1341 = vadd.f32 %v850, %v1309
        %v1342 = vadd.f32 %v853, %v1309
        %v1343 = vadd.f32 %v855, %v1309
        %1344 = vst [vmem:[#allocation3 - $0x1] sm:$0xfe] %v1311
        %1345 = vst [vmem:[#allocation3 + $0x7] sm:$0xff] %v1312
        %1346 = vst [vmem:[#allocation3 + $0xf] sm:$0xff] %v1313
        %1347 = vst [vmem:[#allocation3 + $0x17] sm:$0xff] %v1314
        %1348 = vst [vmem:[#allocation3 + $0x1f] sm:$0xff] %v1315
        %1349 = vst [vmem:[#allocation3 + $0x27] sm:$0xff] %v1316
        %1350 = vst [vmem:[#allocation3 + $0x2f] sm:$0xff] %v1317
        %1351 = vst [vmem:[#allocation3 + $0x37] sm:$0xff] %v1318
        %1352 = vst [vmem:[#allocation3 + $0x3f] sm:$0xff] %v1319
        %1353 = vst [vmem:[#allocation3 + $0x47] sm:$0xff] %v1320
        %1354 = vst [vmem:[#allocation3 + $0x4f] sm:$0xff] %v1321
        %1355 = vst [vmem:[#allocation3 + $0x57] sm:$0xff] %v1322
        %1356 = vst [vmem:[#allocation3 + $0x5f] sm:$0xff] %v1323
        %1357 = vst [vmem:[#allocation3 + $0x67] sm:$0xff] %v1324
        %1358 = vst [vmem:[#allocation3 + $0x6f] sm:$0xff] %v1325
        %1359 = vst [vmem:[#allocation3 + $0x77] sm:$0xff] %v1326
        %1360 = vst [vmem:[#allocation3 + $0x7f] sm:$0xff] %v1327
        %1361 = vst [vmem:[#allocation3 + $0x87] sm:$0xff] %v1328
        %1362 = vst [vmem:[#allocation3 + $0x8f] sm:$0xff] %v1329
        %1363 = vst [vmem:[#allocation3 + $0x97] sm:$0xff] %v1330
        %1364 = vst [vmem:[#allocation3 + $0x9f] sm:$0xff] %v1331
        %1365 = vst [vmem:[#allocation3 + $0xa7] sm:$0xff] %v1332
        %1366 = vst [vmem:[#allocation3 + $0xaf] sm:$0xff] %v1333
        %1367 = vst [vmem:[#allocation3 + $0xb7] sm:$0xff] %v1334
        %1368 = vst [vmem:[#allocation3 + $0xbf] sm:$0xff] %v1335
        %1369 = vst [vmem:[#allocation3 + $0xc7] sm:$0xff] %v1336
        %1370 = vst [vmem:[#allocation3 + $0xcf] sm:$0xff] %v1337
        %1371 = vst [vmem:[#allocation3 + $0xd7] sm:$0xff] %v1338
        %1372 = vst [vmem:[#allocation3 + $0xdf] sm:$0xff] %v1339
        %1373 = vst [vmem:[#allocation3 + $0xe7] sm:$0xff] %v1340
        %1374 = vst [vmem:[#allocation3 + $0xef] sm:$0xff] %v1341
        %1375 = vst [vmem:[#allocation3 + $0xf7] sm:$0xff] %v1342
        %1376 = vst [vmem:[#allocation3 + $0xff] sm:$0x1] %v1343
        %v1377 = vld [vmem:[#allocation2] sm:$0xf]
        %v1378 = vld [vmem:[#allocation2 + $0x4] sm:$0xf]
        %v1379 = vld [vmem:[#allocation2 + $0x8] sm:$0xf]
        %v1380 = vld [vmem:[#allocation2 + $0xc] sm:$0xf]
        %v1381 = vld [vmem:[#allocation2 + $0x10] sm:$0xf]
        %v1382 = vld [vmem:[#allocation2 + $0x14] sm:$0xf]
        %v1383 = vld [vmem:[#allocation2 + $0x18] sm:$0xf]
        %v1384 = vld [vmem:[#allocation2 + $0x1c] sm:$0xf]
        %v1385 = vld [vmem:[#allocation2 + $0x20] sm:$0xf]
        %v1386 = vld [vmem:[#allocation2 + $0x24] sm:$0xf]
        %v1387 = vld [vmem:[#allocation2 + $0x28] sm:$0xf]
        %v1388 = vld [vmem:[#allocation2 + $0x2c] sm:$0xf]
        %v1389 = vld [vmem:[#allocation2 + $0x30] sm:$0xf]
        %v1390 = vld [vmem:[#allocation2 + $0x34] sm:$0xf]
        %v1391 = vld [vmem:[#allocation2 + $0x38] sm:$0xf]
        %v1392 = vld [vmem:[#allocation2 + $0x3c] sm:$0xf]
        %v1393 = vld [vmem:[#allocation2 + $0x40] sm:$0xf]
        %v1394 = vld [vmem:[#allocation2 + $0x44] sm:$0xf]
        %v1395 = vld [vmem:[#allocation2 + $0x48] sm:$0xf]
        %v1396 = vld [vmem:[#allocation2 + $0x4c] sm:$0xf]
        %v1397 = vld [vmem:[#allocation2 + $0x50] sm:$0xf]
        %v1398 = vld [vmem:[#allocation2 + $0x54] sm:$0xf]
        %v1399 = vld [vmem:[#allocation2 + $0x58] sm:$0xf]
        %v1400 = vld [vmem:[#allocation2 + $0x5c] sm:$0xf]
        %v1401 = vld [vmem:[#allocation2 + $0x60] sm:$0xf]
        %v1402 = vld [vmem:[#allocation2 + $0x64] sm:$0xf]
        %v1403 = vld [vmem:[#allocation2 + $0x68] sm:$0xf]
        %v1404 = vld [vmem:[#allocation2 + $0x6c] sm:$0xf]
        %v1405 = vld [vmem:[#allocation2 + $0x70] sm:$0xf]
        %v1406 = vld [vmem:[#allocation2 + $0x74] sm:$0xf]
        %v1407 = vld [vmem:[#allocation2 + $0x78] sm:$0xf]
        %v1408 = vld [vmem:[#allocation2 + $0x7c] sm:$0xf]
        %v1409 = vld [vmem:[#allocation2 + $0x80] sm:$0x1]
        %v1410 = vld [vmem:[#allocation2] sm:$0xe]
        %v1443 = vunpack.c.l.b16 %v1377
        %v1444 = vunpack.c.l.b16 %v1378
        %v1445 = vunpack.c.l.b16 %v1379
        %v1446 = vunpack.c.l.b16 %v1380
        %v1447 = vunpack.c.l.b16 %v1381
        %v1448 = vunpack.c.l.b16 %v1382
        %v1449 = vunpack.c.l.b16 %v1383
        %v1450 = vunpack.c.l.b16 %v1384
        %v1451 = vunpack.c.l.b16 %v1385
        %v1452 = vunpack.c.l.b16 %v1386
        %v1453 = vunpack.c.l.b16 %v1387
        %v1454 = vunpack.c.l.b16 %v1388
        %v1455 = vunpack.c.l.b16 %v1389
        %v1456 = vunpack.c.l.b16 %v1390
        %v1457 = vunpack.c.l.b16 %v1391
        %v1458 = vunpack.c.l.b16 %v1392
        %v1459 = vunpack.c.l.b16 %v1393
        %v1460 = vunpack.c.l.b16 %v1394
        %v1461 = vunpack.c.l.b16 %v1395
        %v1462 = vunpack.c.l.b16 %v1396
        %v1463 = vunpack.c.l.b16 %v1397
        %v1464 = vunpack.c.l.b16 %v1398
        %v1465 = vunpack.c.l.b16 %v1399
        %v1466 = vunpack.c.l.b16 %v1400
        %v1467 = vunpack.c.l.b16 %v1401
        %v1468 = vunpack.c.l.b16 %v1402
        %v1469 = vunpack.c.l.b16 %v1403
        %v1470 = vunpack.c.l.b16 %v1404
        %v1471 = vunpack.c.l.b16 %v1405
        %v1472 = vunpack.c.l.b16 %v1406
        %v1473 = vunpack.c.l.b16 %v1407
        %v1474 = vunpack.c.l.b16 %v1408
        %v1475 = vpack.c.b16 %v1444, %v1443
        %v1476 = vpack.c.b16 %v1446, %v1445
        %v1477 = vpack.c.b16 %v1448, %v1447
        %v1478 = vpack.c.b16 %v1450, %v1449
        %v1479 = vpack.c.b16 %v1452, %v1451
        %v1480 = vpack.c.b16 %v1454, %v1453
        %v1481 = vpack.c.b16 %v1456, %v1455
        %v1482 = vpack.c.b16 %v1458, %v1457
        %v1483 = vpack.c.b16 %v1460, %v1459
        %v1484 = vpack.c.b16 %v1462, %v1461
        %v1485 = vpack.c.b16 %v1464, %v1463
        %v1486 = vpack.c.b16 %v1466, %v1465
        %v1487 = vpack.c.b16 %v1468, %v1467
        %v1488 = vpack.c.b16 %v1470, %v1469
        %v1489 = vpack.c.b16 %v1472, %v1471
        %v1490 = vpack.c.b16 %v1474, %v1473
        %v1508 = vunpack.c.l.b16 %v1409
        %v1509 = vpack.c.b16 %v1508, %v1508
        %vm1510 = vsmask.f32 7424
        %v1512 = vshrl.u32 %v1475, 16
        %v1514 = vshll.u32 %v1475, 16
        %v1516 = vrot.slane %v1514, 1
        %v1517 = vor.u32 %v1512, %v1516
        %v1519 = vshll.u32 %v1476, 16
        %v1521 = vrot.slane %v1519, 1
        %v1522 = vsel %vm1510, %v1517, %v1521
        %v1523 = vshrl.u32 %v1476, 16
        %v1525 = vor.u32 %v1523, %v1521
        %v1527 = vshll.u32 %v1477, 16
        %v1529 = vrot.slane %v1527, 1
        %v1530 = vsel %vm1510, %v1525, %v1529
        %v1531 = vshrl.u32 %v1477, 16
        %v1533 = vor.u32 %v1531, %v1529
        %v1535 = vshll.u32 %v1478, 16
        %v1537 = vrot.slane %v1535, 1
        %v1538 = vsel %vm1510, %v1533, %v1537
        %v1539 = vshrl.u32 %v1478, 16
        %v1541 = vor.u32 %v1539, %v1537
        %v1543 = vshll.u32 %v1479, 16
        %v1545 = vrot.slane %v1543, 1
        %v1546 = vsel %vm1510, %v1541, %v1545
        %v1547 = vshrl.u32 %v1479, 16
        %v1549 = vor.u32 %v1547, %v1545
        %v1551 = vshll.u32 %v1480, 16
        %v1553 = vrot.slane %v1551, 1
        %v1554 = vsel %vm1510, %v1549, %v1553
        %v1555 = vshrl.u32 %v1480, 16
        %v1557 = vor.u32 %v1555, %v1553
        %v1559 = vshll.u32 %v1481, 16
        %v1561 = vrot.slane %v1559, 1
        %v1562 = vsel %vm1510, %v1557, %v1561
        %v1563 = vshrl.u32 %v1481, 16
        %v1565 = vor.u32 %v1563, %v1561
        %v1567 = vshll.u32 %v1482, 16
        %v1569 = vrot.slane %v1567, 1
        %v1570 = vsel %vm1510, %v1565, %v1569
        %v1571 = vshrl.u32 %v1482, 16
        %v1573 = vor.u32 %v1571, %v1569
        %v1575 = vshll.u32 %v1483, 16
        %v1577 = vrot.slane %v1575, 1
        %v1578 = vsel %vm1510, %v1573, %v1577
        %v1579 = vshrl.u32 %v1483, 16
        %v1581 = vor.u32 %v1579, %v1577
        %v1583 = vshll.u32 %v1484, 16
        %v1585 = vrot.slane %v1583, 1
        %v1586 = vsel %vm1510, %v1581, %v1585
        %v1587 = vshrl.u32 %v1484, 16
        %v1589 = vor.u32 %v1587, %v1585
        %v1591 = vshll.u32 %v1485, 16
        %v1593 = vrot.slane %v1591, 1
        %v1594 = vsel %vm1510, %v1589, %v1593
        %v1595 = vshrl.u32 %v1485, 16
        %v1597 = vor.u32 %v1595, %v1593
        %v1599 = vshll.u32 %v1486, 16
        %v1601 = vrot.slane %v1599, 1
        %v1602 = vsel %vm1510, %v1597, %v1601
        %v1603 = vshrl.u32 %v1486, 16
        %v1605 = vor.u32 %v1603, %v1601
        %v1607 = vshll.u32 %v1487, 16
        %v1609 = vrot.slane %v1607, 1
        %v1610 = vsel %vm1510, %v1605, %v1609
        %v1611 = vshrl.u32 %v1487, 16
        %v1613 = vor.u32 %v1611, %v1609
        %v1615 = vshll.u32 %v1488, 16
        %v1617 = vrot.slane %v1615, 1
        %v1618 = vsel %vm1510, %v1613, %v1617
        %v1619 = vshrl.u32 %v1488, 16
        %v1621 = vor.u32 %v1619, %v1617
        %v1623 = vshll.u32 %v1489, 16
        %v1625 = vrot.slane %v1623, 1
        %v1626 = vsel %vm1510, %v1621, %v1625
        %v1627 = vshrl.u32 %v1489, 16
        %v1629 = vor.u32 %v1627, %v1625
        %v1631 = vshll.u32 %v1490, 16
        %v1633 = vrot.slane %v1631, 1
        %v1634 = vsel %vm1510, %v1629, %v1633
        %v1635 = vshrl.u32 %v1490, 16
        %v1637 = vor.u32 %v1635, %v1633
        %v1639 = vshll.u32 %v1509, 16
        %v1641 = vrot.slane %v1639, 1
        %v1642 = vsel %vm1510, %v1637, %v1641
        %v1660 = vunpack.c.l.b16 %v1410
        %v1661 = vpack.c.b16 %v1444, %v1660
        %vm1662 = vcmask 1046528
        %v1663 = vrot.slane %v1661, 1
        %v1664 = vrot.slane %v1476, 1
        %v1665 = vsel %vm1662, %v1663, %v1664
        %v1666 = vrot.slane %v1477, 1
        %v1667 = vsel %vm1662, %v1664, %v1666
        %v1668 = vrot.slane %v1478, 1
        %v1669 = vsel %vm1662, %v1666, %v1668
        %v1670 = vrot.slane %v1479, 1
        %v1671 = vsel %vm1662, %v1668, %v1670
        %v1672 = vrot.slane %v1480, 1
        %v1673 = vsel %vm1662, %v1670, %v1672
        %v1674 = vrot.slane %v1481, 1
        %v1675 = vsel %vm1662, %v1672, %v1674
        %v1676 = vrot.slane %v1482, 1
        %v1677 = vsel %vm1662, %v1674, %v1676
        %v1678 = vrot.slane %v1483, 1
        %v1679 = vsel %vm1662, %v1676, %v1678
        %v1680 = vrot.slane %v1484, 1
        %v1681 = vsel %vm1662, %v1678, %v1680
        %v1682 = vrot.slane %v1485, 1
        %v1683 = vsel %vm1662, %v1680, %v1682
        %v1684 = vrot.slane %v1486, 1
        %v1685 = vsel %vm1662, %v1682, %v1684
        %v1686 = vrot.slane %v1487, 1
        %v1687 = vsel %vm1662, %v1684, %v1686
        %v1688 = vrot.slane %v1488, 1
        %v1689 = vsel %vm1662, %v1686, %v1688
        %v1690 = vrot.slane %v1489, 1
        %v1691 = vsel %vm1662, %v1688, %v1690
        %v1692 = vrot.slane %v1490, 1
        %v1693 = vsel %vm1662, %v1690, %v1692
        %v1694 = vrot.slane %v1509, 1
        %v1695 = vsel %vm1662, %v1692, %v1694
        %v1712 = vld [vmem:[#allocation9] sm:$0xf]
        %v1713 = vld [vmem:[#allocation9 + $0x4] sm:$0xf]
        %v1714 = vld [vmem:[#allocation9 + $0x8] sm:$0xf]
        %v1715 = vld [vmem:[#allocation9 + $0xc] sm:$0xf]
        %v1716 = vld [vmem:[#allocation9 + $0x10] sm:$0xf]
        %v1717 = vld [vmem:[#allocation9 + $0x14] sm:$0xf]
        %v1718 = vld [vmem:[#allocation9 + $0x18] sm:$0xf]
        %v1719 = vld [vmem:[#allocation9 + $0x1c] sm:$0xf]
        %v1720 = vld [vmem:[#allocation9 + $0x20] sm:$0xf]
        %v1721 = vld [vmem:[#allocation9 + $0x24] sm:$0xf]
        %v1722 = vld [vmem:[#allocation9 + $0x28] sm:$0xf]
        %v1723 = vld [vmem:[#allocation9 + $0x2c] sm:$0xf]
        %v1724 = vld [vmem:[#allocation9 + $0x30] sm:$0xf]
        %v1725 = vld [vmem:[#allocation9 + $0x34] sm:$0xf]
        %v1726 = vld [vmem:[#allocation9 + $0x38] sm:$0xf]
        %v1727 = vld [vmem:[#allocation9 + $0x3c] sm:$0xf]
        %v1728 = vld [vmem:[#allocation9 + $0x40] sm:$0xf]
        %v1729 = vld [vmem:[#allocation9 + $0x44] sm:$0xf]
        %v1730 = vld [vmem:[#allocation9 + $0x48] sm:$0xf]
        %v1731 = vld [vmem:[#allocation9 + $0x4c] sm:$0xf]
        %v1732 = vld [vmem:[#allocation9 + $0x50] sm:$0xf]
        %v1733 = vld [vmem:[#allocation9 + $0x54] sm:$0xf]
        %v1734 = vld [vmem:[#allocation9 + $0x58] sm:$0xf]
        %v1735 = vld [vmem:[#allocation9 + $0x5c] sm:$0xf]
        %v1736 = vld [vmem:[#allocation9 + $0x60] sm:$0xf]
        %v1737 = vld [vmem:[#allocation9 + $0x64] sm:$0xf]
        %v1738 = vld [vmem:[#allocation9 + $0x68] sm:$0xf]
        %v1739 = vld [vmem:[#allocation9 + $0x6c] sm:$0xf]
        %v1740 = vld [vmem:[#allocation9 + $0x70] sm:$0xf]
        %v1741 = vld [vmem:[#allocation9 + $0x74] sm:$0xf]
        %v1742 = vld [vmem:[#allocation9 + $0x78] sm:$0xf]
        %v1743 = vld [vmem:[#allocation9 + $0x7c] sm:$0xf]
        %v1744 = vld [vmem:[#allocation9 + $0x80] sm:$0xf]
        %v1745 = vld [vmem:[#allocation9 + $0x84] sm:$0xf]
        %v1746 = vld [vmem:[#allocation9 + $0x88] sm:$0xf]
        %v1747 = vld [vmem:[#allocation9 + $0x8c] sm:$0xf]
        %v1748 = vld [vmem:[#allocation9 + $0x90] sm:$0xf]
        %v1749 = vld [vmem:[#allocation9 + $0x94] sm:$0xf]
        %v1750 = vld [vmem:[#allocation9 + $0x98] sm:$0xf]
        %v1751 = vld [vmem:[#allocation9 + $0x9c] sm:$0xf]
        %v1752 = vld [vmem:[#allocation9 + $0xa0] sm:$0xf]
        %v1753 = vld [vmem:[#allocation9 + $0xa4] sm:$0xf]
        %v1754 = vld [vmem:[#allocation9 + $0xa8] sm:$0xf]
        %v1755 = vld [vmem:[#allocation9 + $0xac] sm:$0xf]
        %v1756 = vld [vmem:[#allocation9 + $0xb0] sm:$0xf]
        %v1757 = vld [vmem:[#allocation9 + $0xb4] sm:$0xf]
        %v1758 = vld [vmem:[#allocation9 + $0xb8] sm:$0xf]
        %v1759 = vld [vmem:[#allocation9 + $0xbc] sm:$0xf]
        %v1760 = vld [vmem:[#allocation2 + $0x80] sm:$0xf]
        %v1761 = vld [vmem:[#allocation2 + $0x84] sm:$0xf]
        %v1762 = vld [vmem:[#allocation2 + $0x88] sm:$0xf]
        %v1763 = vld [vmem:[#allocation2 + $0x8c] sm:$0x1]
        %v1764 = vld [vmem:[#allocation2 + $0xc] sm:$0xe]
        %v1768 = vunpack.c.l.b16 %v1760
        %v1769 = vunpack.c.l.b16 %v1761
        %v1770 = vunpack.c.l.b16 %v1762
        %v1771 = vpack.c.b16 %v1447, %v1446
        %v1772 = vpack.c.b16 %v1449, %v1448
        %v1773 = vpack.c.b16 %v1451, %v1450
        %v1774 = vpack.c.b16 %v1453, %v1452
        %v1775 = vpack.c.b16 %v1455, %v1454
        %v1776 = vpack.c.b16 %v1457, %v1456
        %v1777 = vpack.c.b16 %v1459, %v1458
        %v1778 = vpack.c.b16 %v1461, %v1460
        %v1779 = vpack.c.b16 %v1463, %v1462
        %v1780 = vpack.c.b16 %v1465, %v1464
        %v1781 = vpack.c.b16 %v1467, %v1466
        %v1782 = vpack.c.b16 %v1469, %v1468
        %v1783 = vpack.c.b16 %v1471, %v1470
        %v1784 = vpack.c.b16 %v1473, %v1472
        %v1785 = vpack.c.b16 %v1768, %v1474
        %v1786 = vpack.c.b16 %v1770, %v1769
        %v1804 = vunpack.c.l.b16 %v1763
        %v1805 = vpack.c.b16 %v1804, %v1804
        %v1807 = vshrl.u32 %v1771, 16
        %v1809 = vshll.u32 %v1771, 16
        %v1811 = vrot.slane %v1809, 1
        %v1812 = vor.u32 %v1807, %v1811
        %v1814 = vshll.u32 %v1772, 16
        %v1816 = vrot.slane %v1814, 1
        %v1817 = vsel %vm1510, %v1812, %v1816
        %v1818 = vshrl.u32 %v1772, 16
        %v1820 = vor.u32 %v1818, %v1816
        %v1822 = vshll.u32 %v1773, 16
        %v1824 = vrot.slane %v1822, 1
        %v1825 = vsel %vm1510, %v1820, %v1824
        %v1826 = vshrl.u32 %v1773, 16
        %v1828 = vor.u32 %v1826, %v1824
        %v1830 = vshll.u32 %v1774, 16
        %v1832 = vrot.slane %v1830, 1
        %v1833 = vsel %vm1510, %v1828, %v1832
        %v1834 = vshrl.u32 %v1774, 16
        %v1836 = vor.u32 %v1834, %v1832
        %v1838 = vshll.u32 %v1775, 16
        %v1840 = vrot.slane %v1838, 1
        %v1841 = vsel %vm1510, %v1836, %v1840
        %v1842 = vshrl.u32 %v1775, 16
        %v1844 = vor.u32 %v1842, %v1840
        %v1846 = vshll.u32 %v1776, 16
        %v1848 = vrot.slane %v1846, 1
        %v1849 = vsel %vm1510, %v1844, %v1848
        %v1850 = vshrl.u32 %v1776, 16
        %v1852 = vor.u32 %v1850, %v1848
        %v1854 = vshll.u32 %v1777, 16
        %v1856 = vrot.slane %v1854, 1
        %v1857 = vsel %vm1510, %v1852, %v1856
        %v1858 = vshrl.u32 %v1777, 16
        %v1860 = vor.u32 %v1858, %v1856
        %v1862 = vshll.u32 %v1778, 16
        %v1864 = vrot.slane %v1862, 1
        %v1865 = vsel %vm1510, %v1860, %v1864
        %v1866 = vshrl.u32 %v1778, 16
        %v1868 = vor.u32 %v1866, %v1864
        %v1870 = vshll.u32 %v1779, 16
        %v1872 = vrot.slane %v1870, 1
        %v1873 = vsel %vm1510, %v1868, %v1872
        %v1874 = vshrl.u32 %v1779, 16
        %v1876 = vor.u32 %v1874, %v1872
        %v1878 = vshll.u32 %v1780, 16
        %v1880 = vrot.slane %v1878, 1
        %v1881 = vsel %vm1510, %v1876, %v1880
        %v1882 = vshrl.u32 %v1780, 16
        %v1884 = vor.u32 %v1882, %v1880
        %v1886 = vshll.u32 %v1781, 16
        %v1888 = vrot.slane %v1886, 1
        %v1889 = vsel %vm1510, %v1884, %v1888
        %v1890 = vshrl.u32 %v1781, 16
        %v1892 = vor.u32 %v1890, %v1888
        %v1894 = vshll.u32 %v1782, 16
        %v1896 = vrot.slane %v1894, 1
        %v1897 = vsel %vm1510, %v1892, %v1896
        %v1898 = vshrl.u32 %v1782, 16
        %v1900 = vor.u32 %v1898, %v1896
        %v1902 = vshll.u32 %v1783, 16
        %v1904 = vrot.slane %v1902, 1
        %v1905 = vsel %vm1510, %v1900, %v1904
        %v1906 = vshrl.u32 %v1783, 16
        %v1908 = vor.u32 %v1906, %v1904
        %v1910 = vshll.u32 %v1784, 16
        %v1912 = vrot.slane %v1910, 1
        %v1913 = vsel %vm1510, %v1908, %v1912
        %v1914 = vshrl.u32 %v1784, 16
        %v1916 = vor.u32 %v1914, %v1912
        %v1918 = vshll.u32 %v1785, 16
        %v1920 = vrot.slane %v1918, 1
        %v1921 = vsel %vm1510, %v1916, %v1920
        %v1922 = vshrl.u32 %v1785, 16
        %v1924 = vor.u32 %v1922, %v1920
        %v1926 = vshll.u32 %v1786, 16
        %v1928 = vrot.slane %v1926, 1
        %v1929 = vsel %vm1510, %v1924, %v1928
        %v1930 = vshrl.u32 %v1786, 16
        %v1932 = vor.u32 %v1930, %v1928
        %v1934 = vshll.u32 %v1805, 16
        %v1936 = vrot.slane %v1934, 1
        %v1937 = vsel %vm1510, %v1932, %v1936
        %v1955 = vunpack.c.l.b16 %v1764
        %v1956 = vpack.c.b16 %v1447, %v1955
        %v1957 = vrot.slane %v1956, 1
        %v1958 = vrot.slane %v1772, 1
        %v1959 = vsel %vm1662, %v1957, %v1958
        %v1960 = vrot.slane %v1773, 1
        %v1961 = vsel %vm1662, %v1958, %v1960
        %v1962 = vrot.slane %v1774, 1
        %v1963 = vsel %vm1662, %v1960, %v1962
        %v1964 = vrot.slane %v1775, 1
        %v1965 = vsel %vm1662, %v1962, %v1964
        %v1966 = vrot.slane %v1776, 1
        %v1967 = vsel %vm1662, %v1964, %v1966
        %v1968 = vrot.slane %v1777, 1
        %v1969 = vsel %vm1662, %v1966, %v1968
        %v1970 = vrot.slane %v1778, 1
        %v1971 = vsel %vm1662, %v1968, %v1970
        %v1972 = vrot.slane %v1779, 1
        %v1973 = vsel %vm1662, %v1970, %v1972
        %v1974 = vrot.slane %v1780, 1
        %v1975 = vsel %vm1662, %v1972, %v1974
        %v1976 = vrot.slane %v1781, 1
        %v1977 = vsel %vm1662, %v1974, %v1976
        %v1978 = vrot.slane %v1782, 1
        %v1979 = vsel %vm1662, %v1976, %v1978
        %v1980 = vrot.slane %v1783, 1
        %v1981 = vsel %vm1662, %v1978, %v1980
        %v1982 = vrot.slane %v1784, 1
        %v1983 = vsel %vm1662, %v1980, %v1982
        %v1984 = vrot.slane %v1785, 1
        %v1985 = vsel %vm1662, %v1982, %v1984
        %v1986 = vrot.slane %v1786, 1
        %v1987 = vsel %vm1662, %v1984, %v1986
        %v1988 = vrot.slane %v1805, 1
        %v1989 = vsel %vm1662, %v1986, %v1988
        %s2006 = scalar_lea.vmem [#allocation9], 192
        %v2007 = vld [vmem:[%s2006] sm:$0xf]
        %v2008 = vld [vmem:[%s2006 + $0x4] sm:$0xf]
        %v2009 = vld [vmem:[%s2006 + $0x8] sm:$0xf]
        %v2010 = vld [vmem:[%s2006 + $0xc] sm:$0xf]
        %v2011 = vld [vmem:[%s2006 + $0x10] sm:$0xf]
        %v2012 = vld [vmem:[%s2006 + $0x14] sm:$0xf]
        %v2013 = vld [vmem:[%s2006 + $0x18] sm:$0xf]
        %v2014 = vld [vmem:[%s2006 + $0x1c] sm:$0xf]
        %v2015 = vld [vmem:[%s2006 + $0x20] sm:$0xf]
        %v2016 = vld [vmem:[%s2006 + $0x24] sm:$0xf]
        %v2017 = vld [vmem:[%s2006 + $0x28] sm:$0xf]
        %v2018 = vld [vmem:[%s2006 + $0x2c] sm:$0xf]
        %v2019 = vld [vmem:[%s2006 + $0x30] sm:$0xf]
        %v2020 = vld [vmem:[%s2006 + $0x34] sm:$0xf]
        %v2021 = vld [vmem:[%s2006 + $0x38] sm:$0xf]
        %v2022 = vld [vmem:[%s2006 + $0x3c] sm:$0xf]
        %v2023 = vld [vmem:[%s2006 + $0x40] sm:$0xf]
        %v2024 = vld [vmem:[%s2006 + $0x44] sm:$0xf]
        %v2025 = vld [vmem:[%s2006 + $0x48] sm:$0xf]
        %v2026 = vld [vmem:[%s2006 + $0x4c] sm:$0xf]
        %v2027 = vld [vmem:[%s2006 + $0x50] sm:$0xf]
        %v2028 = vld [vmem:[%s2006 + $0x54] sm:$0xf]
        %v2029 = vld [vmem:[%s2006 + $0x58] sm:$0xf]
        %v2030 = vld [vmem:[%s2006 + $0x5c] sm:$0xf]
        %v2031 = vld [vmem:[%s2006 + $0x60] sm:$0xf]
        %v2032 = vld [vmem:[%s2006 + $0x64] sm:$0xf]
        %v2033 = vld [vmem:[%s2006 + $0x68] sm:$0xf]
        %v2034 = vld [vmem:[%s2006 + $0x6c] sm:$0xf]
        %v2035 = vld [vmem:[%s2006 + $0x70] sm:$0xf]
        %v2036 = vld [vmem:[%s2006 + $0x74] sm:$0xf]
        %v2037 = vld [vmem:[%s2006 + $0x78] sm:$0xf]
        %v2038 = vld [vmem:[%s2006 + $0x7c] sm:$0xf]
        %v2039 = vld [vmem:[%s2006 + $0x80] sm:$0xf]
        %v2040 = vld [vmem:[%s2006 + $0x84] sm:$0xf]
        %v2041 = vld [vmem:[%s2006 + $0x88] sm:$0xf]
        %v2042 = vld [vmem:[%s2006 + $0x8c] sm:$0xf]
        %v2043 = vld [vmem:[%s2006 + $0x90] sm:$0xf]
        %v2044 = vld [vmem:[%s2006 + $0x94] sm:$0xf]
        %v2045 = vld [vmem:[%s2006 + $0x98] sm:$0xf]
        %v2046 = vld [vmem:[%s2006 + $0x9c] sm:$0xf]
        %v2047 = vld [vmem:[%s2006 + $0xa0] sm:$0xf]
        %v2048 = vld [vmem:[%s2006 + $0xa4] sm:$0xf]
        %v2049 = vld [vmem:[%s2006 + $0xa8] sm:$0xf]
        %v2050 = vld [vmem:[%s2006 + $0xac] sm:$0xf]
        %v2051 = vld [vmem:[%s2006 + $0xb0] sm:$0xf]
        %v2052 = vld [vmem:[%s2006 + $0xb4] sm:$0xf]
        %v2053 = vld [vmem:[%s2006 + $0xb8] sm:$0xf]
        %v2054 = vld [vmem:[%s2006 + $0xbc] sm:$0xf]
        %v2103 = vunpack.c.l.b16 %v2007
        %v2104 = vunpack.c.l.b16 %v2008
        %v2105 = vunpack.c.l.b16 %v2009
        %v2106 = vunpack.c.l.b16 %v2010
        %v2107 = vunpack.c.l.b16 %v2011
        %v2108 = vunpack.c.l.b16 %v2012
        %v2109 = vunpack.c.l.b16 %v2013
        %v2110 = vunpack.c.l.b16 %v2014
        %v2111 = vunpack.c.l.b16 %v2015
        %v2112 = vunpack.c.l.b16 %v2016
        %v2113 = vunpack.c.l.b16 %v2017
        %v2114 = vunpack.c.l.b16 %v2018
        %v2115 = vunpack.c.l.b16 %v2019
        %v2116 = vunpack.c.l.b16 %v2020
        %v2117 = vunpack.c.l.b16 %v2021
        %v2118 = vunpack.c.l.b16 %v2022
        %v2119 = vunpack.c.l.b16 %v2023
        %v2120 = vunpack.c.l.b16 %v2024
        %v2121 = vunpack.c.l.b16 %v2025
        %v2122 = vunpack.c.l.b16 %v2026
        %v2123 = vunpack.c.l.b16 %v2027
        %v2124 = vunpack.c.l.b16 %v2028
        %v2125 = vunpack.c.l.b16 %v2029
        %v2126 = vunpack.c.l.b16 %v2030
        %v2127 = vunpack.c.l.b16 %v2031
        %v2128 = vunpack.c.l.b16 %v2032
        %v2129 = vunpack.c.l.b16 %v2033
        %v2130 = vunpack.c.l.b16 %v2034
        %v2131 = vunpack.c.l.b16 %v2035
        %v2132 = vunpack.c.l.b16 %v2036
        %v2133 = vunpack.c.l.b16 %v2037
        %v2134 = vunpack.c.l.b16 %v2038
        %v2135 = vunpack.c.l.b16 %v2039
        %v2136 = vunpack.c.l.b16 %v2040
        %v2137 = vunpack.c.l.b16 %v2041
        %v2138 = vunpack.c.l.b16 %v2042
        %v2139 = vunpack.c.l.b16 %v2043
        %v2140 = vunpack.c.l.b16 %v2044
        %v2141 = vunpack.c.l.b16 %v2045
        %v2142 = vunpack.c.l.b16 %v2046
        %v2143 = vunpack.c.l.b16 %v2047
        %v2144 = vunpack.c.l.b16 %v2048
        %v2145 = vunpack.c.l.b16 %v2049
        %v2146 = vunpack.c.l.b16 %v2050
        %v2147 = vunpack.c.l.b16 %v2051
        %v2148 = vunpack.c.l.b16 %v2052
        %v2149 = vunpack.c.l.b16 %v2053
        %v2150 = vunpack.c.l.b16 %v2054
        %v2151 = vpack.c.b16 %v2104, %v2103
        %v2152 = vpack.c.b16 %v2106, %v2105
        %v2153 = vpack.c.b16 %v2108, %v2107
        %v2154 = vpack.c.b16 %v2110, %v2109
        %v2155 = vpack.c.b16 %v2112, %v2111
        %v2156 = vpack.c.b16 %v2114, %v2113
        %v2157 = vpack.c.b16 %v2116, %v2115
        %v2158 = vpack.c.b16 %v2118, %v2117
        %v2159 = vpack.c.b16 %v2120, %v2119
        %v2160 = vpack.c.b16 %v2122, %v2121
        %v2161 = vpack.c.b16 %v2124, %v2123
        %v2162 = vpack.c.b16 %v2126, %v2125
        %v2163 = vpack.c.b16 %v2128, %v2127
        %v2164 = vpack.c.b16 %v2130, %v2129
        %v2165 = vpack.c.b16 %v2132, %v2131
        %v2166 = vpack.c.b16 %v2134, %v2133
        %v2167 = vpack.c.b16 %v2136, %v2135
        %v2168 = vpack.c.b16 %v2138, %v2137
        %v2169 = vpack.c.b16 %v2140, %v2139
        %v2170 = vpack.c.b16 %v2142, %v2141
        %v2171 = vpack.c.b16 %v2144, %v2143
        %v2172 = vpack.c.b16 %v2146, %v2145
        %v2173 = vpack.c.b16 %v2148, %v2147
        %v2174 = vpack.c.b16 %v2150, %v2149
        %2199 = vmatpush.bf16.msra.mxu0 %v2158
        %2200 = vmatpush.bf16.msra.mxu0 %v2157
        %2201 = vmatpush.bf16.msra.mxu0 %v2156
        %2202 = vmatpush.bf16.msra.mxu0 %v2155
        %2203 = vmatpush.bf16.msra.mxu0 %v2154
        %2204 = vmatpush.bf16.msra.mxu0 %v2153
        %2205 = vmatpush.bf16.msra.mxu0 %v2152
        %2206 = vmatpush.bf16.msra.mxu0 %v2151
        %2207 = vmatmul.bf16.gmra.mxu0 %v1771
        %v2208 = vpop.f32.mrf.mxu0
        %v2209 = vadd.f32 0.0, %v2208
        %v2210 = vpop.f32.mrf.mxu0
        %v2211 = vadd.f32 0.0, %v2210
        %2212 = vmatmul.bf16.gmra.mxu0 %v1772
        %v2213 = vpop.f32.mrf.mxu0
        %v2214 = vadd.f32 0.0, %v2213
        %v2215 = vpop.f32.mrf.mxu0
        %v2216 = vadd.f32 0.0, %v2215
        %2217 = vmatmul.bf16.gmra.mxu0 %v1773
        %v2218 = vpop.f32.mrf.mxu0
        %v2219 = vadd.f32 0.0, %v2218
        %v2220 = vpop.f32.mrf.mxu0
        %v2221 = vadd.f32 0.0, %v2220
        %2222 = vmatmul.bf16.gmra.mxu0 %v1774
        %v2223 = vpop.f32.mrf.mxu0
        %v2224 = vadd.f32 0.0, %v2223
        %v2225 = vpop.f32.mrf.mxu0
        %v2226 = vadd.f32 0.0, %v2225
        %2227 = vmatmul.bf16.gmra.mxu0 %v1775
        %v2228 = vpop.f32.mrf.mxu0
        %v2229 = vadd.f32 0.0, %v2228
        %v2230 = vpop.f32.mrf.mxu0
        %v2231 = vadd.f32 0.0, %v2230
        %2232 = vmatmul.bf16.gmra.mxu0 %v1776
        %v2233 = vpop.f32.mrf.mxu0
        %v2234 = vadd.f32 0.0, %v2233
        %v2235 = vpop.f32.mrf.mxu0
        %v2236 = vadd.f32 0.0, %v2235
        %2237 = vmatmul.bf16.gmra.mxu0 %v1777
        %v2238 = vpop.f32.mrf.mxu0
        %v2239 = vadd.f32 0.0, %v2238
        %v2240 = vpop.f32.mrf.mxu0
        %v2241 = vadd.f32 0.0, %v2240
        %2242 = vmatmul.bf16.gmra.mxu0 %v1778
        %v2243 = vpop.f32.mrf.mxu0
        %v2244 = vadd.f32 0.0, %v2243
        %v2245 = vpop.f32.mrf.mxu0
        %v2246 = vadd.f32 0.0, %v2245
        %2247 = vmatmul.bf16.gmra.mxu0 %v1779
        %v2248 = vpop.f32.mrf.mxu0
        %v2249 = vadd.f32 0.0, %v2248
        %v2250 = vpop.f32.mrf.mxu0
        %v2251 = vadd.f32 0.0, %v2250
        %2252 = vmatmul.bf16.gmra.mxu0 %v1780
        %v2253 = vpop.f32.mrf.mxu0
        %v2254 = vadd.f32 0.0, %v2253
        %v2255 = vpop.f32.mrf.mxu0
        %v2256 = vadd.f32 0.0, %v2255
        %2257 = vmatmul.bf16.gmra.mxu0 %v1781
        %v2258 = vpop.f32.mrf.mxu0
        %v2259 = vadd.f32 0.0, %v2258
        %v2260 = vpop.f32.mrf.mxu0
        %v2261 = vadd.f32 0.0, %v2260
        %2262 = vmatmul.bf16.gmra.mxu0 %v1782
        %v2263 = vpop.f32.mrf.mxu0
        %v2264 = vadd.f32 0.0, %v2263
        %v2265 = vpop.f32.mrf.mxu0
        %v2266 = vadd.f32 0.0, %v2265
        %2267 = vmatmul.bf16.gmra.mxu0 %v1783
        %v2268 = vpop.f32.mrf.mxu0
        %v2269 = vadd.f32 0.0, %v2268
        %v2270 = vpop.f32.mrf.mxu0
        %v2271 = vadd.f32 0.0, %v2270
        %2272 = vmatmul.bf16.gmra.mxu0 %v1784
        %v2273 = vpop.f32.mrf.mxu0
        %v2274 = vadd.f32 0.0, %v2273
        %v2275 = vpop.f32.mrf.mxu0
        %v2276 = vadd.f32 0.0, %v2275
        %2277 = vmatmul.bf16.gmra.mxu0 %v1785
        %v2278 = vpop.f32.mrf.mxu0
        %v2279 = vadd.f32 0.0, %v2278
        %v2280 = vpop.f32.mrf.mxu0
        %v2281 = vadd.f32 0.0, %v2280
        %2282 = vmatmul.bf16.gmra.mxu0 %v1786
        %v2283 = vpop.f32.mrf.mxu0
        %v2284 = vadd.f32 0.0, %v2283
        %v2285 = vpop.f32.mrf.mxu0
        %v2286 = vadd.f32 0.0, %v2285
        %2287 = vdwg.mxu0
        %2288 = vmatpush.bf16.msra.mxu0 %v2166
        %2289 = vmatpush.bf16.msra.mxu0 %v2165
        %2290 = vmatpush.bf16.msra.mxu0 %v2164
        %2291 = vmatpush.bf16.msra.mxu0 %v2163
        %2292 = vmatpush.bf16.msra.mxu0 %v2162
        %2293 = vmatpush.bf16.msra.mxu0 %v2161
        %2294 = vmatpush.bf16.msra.mxu0 %v2160
        %2295 = vmatpush.bf16.msra.mxu0 %v2159
        %2296 = vmatmul.bf16.gmra.mxu0 %v1817
        %v2297 = vpop.f32.mrf.mxu0
        %v2298 = vadd.f32 %v2209, %v2297
        %v2299 = vpop.f32.mrf.mxu0
        %v2300 = vadd.f32 %v2211, %v2299
        %2301 = vmatmul.bf16.gmra.mxu0 %v1825
        %v2302 = vpop.f32.mrf.mxu0
        %v2303 = vadd.f32 %v2214, %v2302
        %v2304 = vpop.f32.mrf.mxu0
        %v2305 = vadd.f32 %v2216, %v2304
        %2306 = vmatmul.bf16.gmra.mxu0 %v1833
        %v2307 = vpop.f32.mrf.mxu0
        %v2308 = vadd.f32 %v2219, %v2307
        %v2309 = vpop.f32.mrf.mxu0
        %v2310 = vadd.f32 %v2221, %v2309
        %2311 = vmatmul.bf16.gmra.mxu0 %v1841
        %v2312 = vpop.f32.mrf.mxu0
        %v2313 = vadd.f32 %v2224, %v2312
        %v2314 = vpop.f32.mrf.mxu0
        %v2315 = vadd.f32 %v2226, %v2314
        %2316 = vmatmul.bf16.gmra.mxu0 %v1849
        %v2317 = vpop.f32.mrf.mxu0
        %v2318 = vadd.f32 %v2229, %v2317
        %v2319 = vpop.f32.mrf.mxu0
        %v2320 = vadd.f32 %v2231, %v2319
        %2321 = vmatmul.bf16.gmra.mxu0 %v1857
        %v2322 = vpop.f32.mrf.mxu0
        %v2323 = vadd.f32 %v2234, %v2322
        %v2324 = vpop.f32.mrf.mxu0
        %v2325 = vadd.f32 %v2236, %v2324
        %2326 = vmatmul.bf16.gmra.mxu0 %v1865
        %v2327 = vpop.f32.mrf.mxu0
        %v2328 = vadd.f32 %v2239, %v2327
        %v2329 = vpop.f32.mrf.mxu0
        %v2330 = vadd.f32 %v2241, %v2329
        %2331 = vmatmul.bf16.gmra.mxu0 %v1873
        %v2332 = vpop.f32.mrf.mxu0
        %v2333 = vadd.f32 %v2244, %v2332
        %v2334 = vpop.f32.mrf.mxu0
        %v2335 = vadd.f32 %v2246, %v2334
        %2336 = vmatmul.bf16.gmra.mxu0 %v1881
        %v2337 = vpop.f32.mrf.mxu0
        %v2338 = vadd.f32 %v2249, %v2337
        %v2339 = vpop.f32.mrf.mxu0
        %v2340 = vadd.f32 %v2251, %v2339
        %2341 = vmatmul.bf16.gmra.mxu0 %v1889
        %v2342 = vpop.f32.mrf.mxu0
        %v2343 = vadd.f32 %v2254, %v2342
        %v2344 = vpop.f32.mrf.mxu0
        %v2345 = vadd.f32 %v2256, %v2344
        %2346 = vmatmul.bf16.gmra.mxu0 %v1897
        %v2347 = vpop.f32.mrf.mxu0
        %v2348 = vadd.f32 %v2259, %v2347
        %v2349 = vpop.f32.mrf.mxu0
        %v2350 = vadd.f32 %v2261, %v2349
        %2351 = vmatmul.bf16.gmra.mxu0 %v1905
        %v2352 = vpop.f32.mrf.mxu0
        %v2353 = vadd.f32 %v2264, %v2352
        %v2354 = vpop.f32.mrf.mxu0
        %v2355 = vadd.f32 %v2266, %v2354
        %2356 = vmatmul.bf16.gmra.mxu0 %v1913
        %v2357 = vpop.f32.mrf.mxu0
        %v2358 = vadd.f32 %v2269, %v2357
        %v2359 = vpop.f32.mrf.mxu0
        %v2360 = vadd.f32 %v2271, %v2359
        %2361 = vmatmul.bf16.gmra.mxu0 %v1921
        %v2362 = vpop.f32.mrf.mxu0
        %v2363 = vadd.f32 %v2274, %v2362
        %v2364 = vpop.f32.mrf.mxu0
        %v2365 = vadd.f32 %v2276, %v2364
        %2366 = vmatmul.bf16.gmra.mxu0 %v1929
        %v2367 = vpop.f32.mrf.mxu0
        %v2368 = vadd.f32 %v2279, %v2367
        %v2369 = vpop.f32.mrf.mxu0
        %v2370 = vadd.f32 %v2281, %v2369
        %2371 = vmatmul.bf16.gmra.mxu0 %v1937
        %v2372 = vpop.f32.mrf.mxu0
        %v2373 = vadd.f32 %v2284, %v2372
        %v2374 = vpop.f32.mrf.mxu0
        %v2375 = vadd.f32 %v2286, %v2374
        %2376 = vdwg.mxu0
        %2377 = vmatpush.bf16.msra.mxu0 %v2174
        %2378 = vmatpush.bf16.msra.mxu0 %v2173
        %2379 = vmatpush.bf16.msra.mxu0 %v2172
        %2380 = vmatpush.bf16.msra.mxu0 %v2171
        %2381 = vmatpush.bf16.msra.mxu0 %v2170
        %2382 = vmatpush.bf16.msra.mxu0 %v2169
        %2383 = vmatpush.bf16.msra.mxu0 %v2168
        %2384 = vmatpush.bf16.msra.mxu0 %v2167
        %2385 = vmatmul.bf16.gmra.mxu0 %v1959
        %v2386 = vpop.f32.mrf.mxu0
        %v2387 = vadd.f32 %v2298, %v2386
        %v2388 = vpop.f32.mrf.mxu0
        %v2389 = vadd.f32 %v2300, %v2388
        %2390 = vmatmul.bf16.gmra.mxu0 %v1961
        %v2391 = vpop.f32.mrf.mxu0
        %v2392 = vadd.f32 %v2303, %v2391
        %v2393 = vpop.f32.mrf.mxu0
        %v2394 = vadd.f32 %v2305, %v2393
        %2395 = vmatmul.bf16.gmra.mxu0 %v1963
        %v2396 = vpop.f32.mrf.mxu0
        %v2397 = vadd.f32 %v2308, %v2396
        %v2398 = vpop.f32.mrf.mxu0
        %v2399 = vadd.f32 %v2310, %v2398
        %2400 = vmatmul.bf16.gmra.mxu0 %v1965
        %v2401 = vpop.f32.mrf.mxu0
        %v2402 = vadd.f32 %v2313, %v2401
        %v2403 = vpop.f32.mrf.mxu0
        %v2404 = vadd.f32 %v2315, %v2403
        %2405 = vmatmul.bf16.gmra.mxu0 %v1967
        %v2406 = vpop.f32.mrf.mxu0
        %v2407 = vadd.f32 %v2318, %v2406
        %v2408 = vpop.f32.mrf.mxu0
        %v2409 = vadd.f32 %v2320, %v2408
        %2410 = vmatmul.bf16.gmra.mxu0 %v1969
        %v2411 = vpop.f32.mrf.mxu0
        %v2412 = vadd.f32 %v2323, %v2411
        %v2413 = vpop.f32.mrf.mxu0
        %v2414 = vadd.f32 %v2325, %v2413
        %2415 = vmatmul.bf16.gmra.mxu0 %v1971
        %v2416 = vpop.f32.mrf.mxu0
        %v2417 = vadd.f32 %v2328, %v2416
        %v2418 = vpop.f32.mrf.mxu0
        %v2419 = vadd.f32 %v2330, %v2418
        %2420 = vmatmul.bf16.gmra.mxu0 %v1973
        %v2421 = vpop.f32.mrf.mxu0
        %v2422 = vadd.f32 %v2333, %v2421
        %v2423 = vpop.f32.mrf.mxu0
        %v2424 = vadd.f32 %v2335, %v2423
        %2425 = vmatmul.bf16.gmra.mxu0 %v1975
        %v2426 = vpop.f32.mrf.mxu0
        %v2427 = vadd.f32 %v2338, %v2426
        %v2428 = vpop.f32.mrf.mxu0
        %v2429 = vadd.f32 %v2340, %v2428
        %2430 = vmatmul.bf16.gmra.mxu0 %v1977
        %v2431 = vpop.f32.mrf.mxu0
        %v2432 = vadd.f32 %v2343, %v2431
        %v2433 = vpop.f32.mrf.mxu0
        %v2434 = vadd.f32 %v2345, %v2433
        %2435 = vmatmul.bf16.gmra.mxu0 %v1979
        %v2436 = vpop.f32.mrf.mxu0
        %v2437 = vadd.f32 %v2348, %v2436
        %v2438 = vpop.f32.mrf.mxu0
        %v2439 = vadd.f32 %v2350, %v2438
        %2440 = vmatmul.bf16.gmra.mxu0 %v1981
        %v2441 = vpop.f32.mrf.mxu0
        %v2442 = vadd.f32 %v2353, %v2441
        %v2443 = vpop.f32.mrf.mxu0
        %v2444 = vadd.f32 %v2355, %v2443
        %2445 = vmatmul.bf16.gmra.mxu0 %v1983
        %v2446 = vpop.f32.mrf.mxu0
        %v2447 = vadd.f32 %v2358, %v2446
        %v2448 = vpop.f32.mrf.mxu0
        %v2449 = vadd.f32 %v2360, %v2448
        %2450 = vmatmul.bf16.gmra.mxu0 %v1985
        %v2451 = vpop.f32.mrf.mxu0
        %v2452 = vadd.f32 %v2363, %v2451
        %v2453 = vpop.f32.mrf.mxu0
        %v2454 = vadd.f32 %v2365, %v2453
        %2455 = vmatmul.bf16.gmra.mxu0 %v1987
        %v2456 = vpop.f32.mrf.mxu0
        %v2457 = vadd.f32 %v2368, %v2456
        %v2458 = vpop.f32.mrf.mxu0
        %v2459 = vadd.f32 %v2370, %v2458
        %2460 = vmatmul.bf16.gmra.mxu0 %v1989
        %v2461 = vpop.f32.mrf.mxu0
        %v2462 = vadd.f32 %v2373, %v2461
        %v2463 = vpop.f32.mrf.mxu0
        %v2464 = vadd.f32 %v2375, %v2463
        %2465 = vdwg.mxu0
        %v2514 = vunpack.c.l.b16 %v1712
        %v2515 = vunpack.c.l.b16 %v1713
        %v2516 = vunpack.c.l.b16 %v1714
        %v2517 = vunpack.c.l.b16 %v1715
        %v2518 = vunpack.c.l.b16 %v1716
        %v2519 = vunpack.c.l.b16 %v1717
        %v2520 = vunpack.c.l.b16 %v1718
        %v2521 = vunpack.c.l.b16 %v1719
        %v2522 = vunpack.c.l.b16 %v1720
        %v2523 = vunpack.c.l.b16 %v1721
        %v2524 = vunpack.c.l.b16 %v1722
        %v2525 = vunpack.c.l.b16 %v1723
        %v2526 = vunpack.c.l.b16 %v1724
        %v2527 = vunpack.c.l.b16 %v1725
        %v2528 = vunpack.c.l.b16 %v1726
        %v2529 = vunpack.c.l.b16 %v1727
        %v2530 = vunpack.c.l.b16 %v1728
        %v2531 = vunpack.c.l.b16 %v1729
        %v2532 = vunpack.c.l.b16 %v1730
        %v2533 = vunpack.c.l.b16 %v1731
        %v2534 = vunpack.c.l.b16 %v1732
        %v2535 = vunpack.c.l.b16 %v1733
        %v2536 = vunpack.c.l.b16 %v1734
        %v2537 = vunpack.c.l.b16 %v1735
        %v2538 = vunpack.c.l.b16 %v1736
        %v2539 = vunpack.c.l.b16 %v1737
        %v2540 = vunpack.c.l.b16 %v1738
        %v2541 = vunpack.c.l.b16 %v1739
        %v2542 = vunpack.c.l.b16 %v1740
        %v2543 = vunpack.c.l.b16 %v1741
        %v2544 = vunpack.c.l.b16 %v1742
        %v2545 = vunpack.c.l.b16 %v1743
        %v2546 = vunpack.c.l.b16 %v1744
        %v2547 = vunpack.c.l.b16 %v1745
        %v2548 = vunpack.c.l.b16 %v1746
        %v2549 = vunpack.c.l.b16 %v1747
        %v2550 = vunpack.c.l.b16 %v1748
        %v2551 = vunpack.c.l.b16 %v1749
        %v2552 = vunpack.c.l.b16 %v1750
        %v2553 = vunpack.c.l.b16 %v1751
        %v2554 = vunpack.c.l.b16 %v1752
        %v2555 = vunpack.c.l.b16 %v1753
        %v2556 = vunpack.c.l.b16 %v1754
        %v2557 = vunpack.c.l.b16 %v1755
        %v2558 = vunpack.c.l.b16 %v1756
        %v2559 = vunpack.c.l.b16 %v1757
        %v2560 = vunpack.c.l.b16 %v1758
        %v2561 = vunpack.c.l.b16 %v1759
        %v2562 = vpack.c.b16 %v2515, %v2514
        %v2563 = vpack.c.b16 %v2517, %v2516
        %v2564 = vpack.c.b16 %v2519, %v2518
        %v2565 = vpack.c.b16 %v2521, %v2520
        %v2566 = vpack.c.b16 %v2523, %v2522
        %v2567 = vpack.c.b16 %v2525, %v2524
        %v2568 = vpack.c.b16 %v2527, %v2526
        %v2569 = vpack.c.b16 %v2529, %v2528
        %v2570 = vpack.c.b16 %v2531, %v2530
        %v2571 = vpack.c.b16 %v2533, %v2532
        %v2572 = vpack.c.b16 %v2535, %v2534
        %v2573 = vpack.c.b16 %v2537, %v2536
        %v2574 = vpack.c.b16 %v2539, %v2538
        %v2575 = vpack.c.b16 %v2541, %v2540
        %v2576 = vpack.c.b16 %v2543, %v2542
        %v2577 = vpack.c.b16 %v2545, %v2544
        %v2578 = vpack.c.b16 %v2547, %v2546
        %v2579 = vpack.c.b16 %v2549, %v2548
        %v2580 = vpack.c.b16 %v2551, %v2550
        %v2581 = vpack.c.b16 %v2553, %v2552
        %v2582 = vpack.c.b16 %v2555, %v2554
        %v2583 = vpack.c.b16 %v2557, %v2556
        %v2584 = vpack.c.b16 %v2559, %v2558
        %v2585 = vpack.c.b16 %v2561, %v2560
        %2610 = vmatpush.bf16.msra.mxu0 %v2569
        %2611 = vmatpush.bf16.msra.mxu0 %v2568
        %2612 = vmatpush.bf16.msra.mxu0 %v2567
        %2613 = vmatpush.bf16.msra.mxu0 %v2566
        %2614 = vmatpush.bf16.msra.mxu0 %v2565
        %2615 = vmatpush.bf16.msra.mxu0 %v2564
        %2616 = vmatpush.bf16.msra.mxu0 %v2563
        %2617 = vmatpush.bf16.msra.mxu0 %v2562
        %2618 = vmatmul.bf16.gmra.mxu0 %v1475
        %v2619 = vpop.f32.mrf.mxu0
        %v2620 = vadd.f32 %v2387, %v2619
        %v2621 = vpop.f32.mrf.mxu0
        %v2622 = vadd.f32 %v2389, %v2621
        %2623 = vmatmul.bf16.gmra.mxu0 %v1476
        %v2624 = vpop.f32.mrf.mxu0
        %v2625 = vadd.f32 %v2392, %v2624
        %v2626 = vpop.f32.mrf.mxu0
        %v2627 = vadd.f32 %v2394, %v2626
        %2628 = vmatmul.bf16.gmra.mxu0 %v1477
        %v2629 = vpop.f32.mrf.mxu0
        %v2630 = vadd.f32 %v2397, %v2629
        %v2631 = vpop.f32.mrf.mxu0
        %v2632 = vadd.f32 %v2399, %v2631
        %2633 = vmatmul.bf16.gmra.mxu0 %v1478
        %v2634 = vpop.f32.mrf.mxu0
        %v2635 = vadd.f32 %v2402, %v2634
        %v2636 = vpop.f32.mrf.mxu0
        %v2637 = vadd.f32 %v2404, %v2636
        %2638 = vmatmul.bf16.gmra.mxu0 %v1479
        %v2639 = vpop.f32.mrf.mxu0
        %v2640 = vadd.f32 %v2407, %v2639
        %v2641 = vpop.f32.mrf.mxu0
        %v2642 = vadd.f32 %v2409, %v2641
        %2643 = vmatmul.bf16.gmra.mxu0 %v1480
        %v2644 = vpop.f32.mrf.mxu0
        %v2645 = vadd.f32 %v2412, %v2644
        %v2646 = vpop.f32.mrf.mxu0
        %v2647 = vadd.f32 %v2414, %v2646
        %2648 = vmatmul.bf16.gmra.mxu0 %v1481
        %v2649 = vpop.f32.mrf.mxu0
        %v2650 = vadd.f32 %v2417, %v2649
        %v2651 = vpop.f32.mrf.mxu0
        %v2652 = vadd.f32 %v2419, %v2651
        %2653 = vmatmul.bf16.gmra.mxu0 %v1482
        %v2654 = vpop.f32.mrf.mxu0
        %v2655 = vadd.f32 %v2422, %v2654
        %v2656 = vpop.f32.mrf.mxu0
        %v2657 = vadd.f32 %v2424, %v2656
        %2658 = vmatmul.bf16.gmra.mxu0 %v1483
        %v2659 = vpop.f32.mrf.mxu0
        %v2660 = vadd.f32 %v2427, %v2659
        %v2661 = vpop.f32.mrf.mxu0
        %v2662 = vadd.f32 %v2429, %v2661
        %2663 = vmatmul.bf16.gmra.mxu0 %v1484
        %v2664 = vpop.f32.mrf.mxu0
        %v2665 = vadd.f32 %v2432, %v2664
        %v2666 = vpop.f32.mrf.mxu0
        %v2667 = vadd.f32 %v2434, %v2666
        %2668 = vmatmul.bf16.gmra.mxu0 %v1485
        %v2669 = vpop.f32.mrf.mxu0
        %v2670 = vadd.f32 %v2437, %v2669
        %v2671 = vpop.f32.mrf.mxu0
        %v2672 = vadd.f32 %v2439, %v2671
        %2673 = vmatmul.bf16.gmra.mxu0 %v1486
        %v2674 = vpop.f32.mrf.mxu0
        %v2675 = vadd.f32 %v2442, %v2674
        %v2676 = vpop.f32.mrf.mxu0
        %v2677 = vadd.f32 %v2444, %v2676
        %2678 = vmatmul.bf16.gmra.mxu0 %v1487
        %v2679 = vpop.f32.mrf.mxu0
        %v2680 = vadd.f32 %v2447, %v2679
        %v2681 = vpop.f32.mrf.mxu0
        %v2682 = vadd.f32 %v2449, %v2681
        %2683 = vmatmul.bf16.gmra.mxu0 %v1488
        %v2684 = vpop.f32.mrf.mxu0
        %v2685 = vadd.f32 %v2452, %v2684
        %v2686 = vpop.f32.mrf.mxu0
        %v2687 = vadd.f32 %v2454, %v2686
        %2688 = vmatmul.bf16.gmra.mxu0 %v1489
        %v2689 = vpop.f32.mrf.mxu0
        %v2690 = vadd.f32 %v2457, %v2689
        %v2691 = vpop.f32.mrf.mxu0
        %v2692 = vadd.f32 %v2459, %v2691
        %2693 = vmatmul.bf16.gmra.mxu0 %v1490
        %v2694 = vpop.f32.mrf.mxu0
        %v2695 = vadd.f32 %v2462, %v2694
        %v2696 = vpop.f32.mrf.mxu0
        %v2697 = vadd.f32 %v2464, %v2696
        %2698 = vdwg.mxu0
        %2699 = vmatpush.bf16.msra.mxu0 %v2577
        %2700 = vmatpush.bf16.msra.mxu0 %v2576
        %2701 = vmatpush.bf16.msra.mxu0 %v2575
        %2702 = vmatpush.bf16.msra.mxu0 %v2574
        %2703 = vmatpush.bf16.msra.mxu0 %v2573
        %2704 = vmatpush.bf16.msra.mxu0 %v2572
        %2705 = vmatpush.bf16.msra.mxu0 %v2571
        %2706 = vmatpush.bf16.msra.mxu0 %v2570
        %2707 = vmatmul.bf16.gmra.mxu0 %v1522
        %v2708 = vpop.f32.mrf.mxu0
        %v2709 = vadd.f32 %v2620, %v2708
        %v2710 = vpop.f32.mrf.mxu0
        %v2711 = vadd.f32 %v2622, %v2710
        %2712 = vmatmul.bf16.gmra.mxu0 %v1530
        %v2713 = vpop.f32.mrf.mxu0
        %v2714 = vadd.f32 %v2625, %v2713
        %v2715 = vpop.f32.mrf.mxu0
        %v2716 = vadd.f32 %v2627, %v2715
        %2717 = vmatmul.bf16.gmra.mxu0 %v1538
        %v2718 = vpop.f32.mrf.mxu0
        %v2719 = vadd.f32 %v2630, %v2718
        %v2720 = vpop.f32.mrf.mxu0
        %v2721 = vadd.f32 %v2632, %v2720
        %2722 = vmatmul.bf16.gmra.mxu0 %v1546
        %v2723 = vpop.f32.mrf.mxu0
        %v2724 = vadd.f32 %v2635, %v2723
        %v2725 = vpop.f32.mrf.mxu0
        %v2726 = vadd.f32 %v2637, %v2725
        %2727 = vmatmul.bf16.gmra.mxu0 %v1554
        %v2728 = vpop.f32.mrf.mxu0
        %v2729 = vadd.f32 %v2640, %v2728
        %v2730 = vpop.f32.mrf.mxu0
        %v2731 = vadd.f32 %v2642, %v2730
        %2732 = vmatmul.bf16.gmra.mxu0 %v1562
        %v2733 = vpop.f32.mrf.mxu0
        %v2734 = vadd.f32 %v2645, %v2733
        %v2735 = vpop.f32.mrf.mxu0
        %v2736 = vadd.f32 %v2647, %v2735
        %2737 = vmatmul.bf16.gmra.mxu0 %v1570
        %v2738 = vpop.f32.mrf.mxu0
        %v2739 = vadd.f32 %v2650, %v2738
        %v2740 = vpop.f32.mrf.mxu0
        %v2741 = vadd.f32 %v2652, %v2740
        %2742 = vmatmul.bf16.gmra.mxu0 %v1578
        %v2743 = vpop.f32.mrf.mxu0
        %v2744 = vadd.f32 %v2655, %v2743
        %v2745 = vpop.f32.mrf.mxu0
        %v2746 = vadd.f32 %v2657, %v2745
        %2747 = vmatmul.bf16.gmra.mxu0 %v1586
        %v2748 = vpop.f32.mrf.mxu0
        %v2749 = vadd.f32 %v2660, %v2748
        %v2750 = vpop.f32.mrf.mxu0
        %v2751 = vadd.f32 %v2662, %v2750
        %2752 = vmatmul.bf16.gmra.mxu0 %v1594
        %v2753 = vpop.f32.mrf.mxu0
        %v2754 = vadd.f32 %v2665, %v2753
        %v2755 = vpop.f32.mrf.mxu0
        %v2756 = vadd.f32 %v2667, %v2755
        %2757 = vmatmul.bf16.gmra.mxu0 %v1602
        %v2758 = vpop.f32.mrf.mxu0
        %v2759 = vadd.f32 %v2670, %v2758
        %v2760 = vpop.f32.mrf.mxu0
        %v2761 = vadd.f32 %v2672, %v2760
        %2762 = vmatmul.bf16.gmra.mxu0 %v1610
        %v2763 = vpop.f32.mrf.mxu0
        %v2764 = vadd.f32 %v2675, %v2763
        %v2765 = vpop.f32.mrf.mxu0
        %v2766 = vadd.f32 %v2677, %v2765
        %2767 = vmatmul.bf16.gmra.mxu0 %v1618
        %v2768 = vpop.f32.mrf.mxu0
        %v2769 = vadd.f32 %v2680, %v2768
        %v2770 = vpop.f32.mrf.mxu0
        %v2771 = vadd.f32 %v2682, %v2770
        %2772 = vmatmul.bf16.gmra.mxu0 %v1626
        %v2773 = vpop.f32.mrf.mxu0
        %v2774 = vadd.f32 %v2685, %v2773
        %v2775 = vpop.f32.mrf.mxu0
        %v2776 = vadd.f32 %v2687, %v2775
        %2777 = vmatmul.bf16.gmra.mxu0 %v1634
        %v2778 = vpop.f32.mrf.mxu0
        %v2779 = vadd.f32 %v2690, %v2778
        %v2780 = vpop.f32.mrf.mxu0
        %v2781 = vadd.f32 %v2692, %v2780
        %2782 = vmatmul.bf16.gmra.mxu0 %v1642
        %v2783 = vpop.f32.mrf.mxu0
        %v2784 = vadd.f32 %v2695, %v2783
        %v2785 = vpop.f32.mrf.mxu0
        %v2786 = vadd.f32 %v2697, %v2785
        %2787 = vdwg.mxu0
        %2788 = vmatpush.bf16.msra.mxu0 %v2585
        %2789 = vmatpush.bf16.msra.mxu0 %v2584
        %2790 = vmatpush.bf16.msra.mxu0 %v2583
        %2791 = vmatpush.bf16.msra.mxu0 %v2582
        %2792 = vmatpush.bf16.msra.mxu0 %v2581
        %2793 = vmatpush.bf16.msra.mxu0 %v2580
        %2794 = vmatpush.bf16.msra.mxu0 %v2579
        %2795 = vmatpush.bf16.msra.mxu0 %v2578
        %2796 = vmatmul.bf16.gmra.mxu0 %v1665
        %v2797 = vpop.f32.mrf.mxu0
        %v2798 = vadd.f32 %v2709, %v2797
        %v2799 = vpop.f32.mrf.mxu0
        %v2800 = vadd.f32 %v2711, %v2799
        %2801 = vmatmul.bf16.gmra.mxu0 %v1667
        %v2802 = vpop.f32.mrf.mxu0
        %v2803 = vadd.f32 %v2714, %v2802
        %v2804 = vpop.f32.mrf.mxu0
        %v2805 = vadd.f32 %v2716, %v2804
        %2806 = vmatmul.bf16.gmra.mxu0 %v1669
        %v2807 = vpop.f32.mrf.mxu0
        %v2808 = vadd.f32 %v2719, %v2807
        %v2809 = vpop.f32.mrf.mxu0
        %v2810 = vadd.f32 %v2721, %v2809
        %2811 = vmatmul.bf16.gmra.mxu0 %v1671
        %v2812 = vpop.f32.mrf.mxu0
        %v2813 = vadd.f32 %v2724, %v2812
        %v2814 = vpop.f32.mrf.mxu0
        %v2815 = vadd.f32 %v2726, %v2814
        %2816 = vmatmul.bf16.gmra.mxu0 %v1673
        %v2817 = vpop.f32.mrf.mxu0
        %v2818 = vadd.f32 %v2729, %v2817
        %v2819 = vpop.f32.mrf.mxu0
        %v2820 = vadd.f32 %v2731, %v2819
        %2821 = vmatmul.bf16.gmra.mxu0 %v1675
        %v2822 = vpop.f32.mrf.mxu0
        %v2823 = vadd.f32 %v2734, %v2822
        %v2824 = vpop.f32.mrf.mxu0
        %v2825 = vadd.f32 %v2736, %v2824
        %2826 = vmatmul.bf16.gmra.mxu0 %v1677
        %v2827 = vpop.f32.mrf.mxu0
        %v2828 = vadd.f32 %v2739, %v2827
        %v2829 = vpop.f32.mrf.mxu0
        %v2830 = vadd.f32 %v2741, %v2829
        %2831 = vmatmul.bf16.gmra.mxu0 %v1679
        %v2832 = vpop.f32.mrf.mxu0
        %v2833 = vadd.f32 %v2744, %v2832
        %v2834 = vpop.f32.mrf.mxu0
        %v2835 = vadd.f32 %v2746, %v2834
        %2836 = vmatmul.bf16.gmra.mxu0 %v1681
        %v2837 = vpop.f32.mrf.mxu0
        %v2838 = vadd.f32 %v2749, %v2837
        %v2839 = vpop.f32.mrf.mxu0
        %v2840 = vadd.f32 %v2751, %v2839
        %2841 = vmatmul.bf16.gmra.mxu0 %v1683
        %v2842 = vpop.f32.mrf.mxu0
        %v2843 = vadd.f32 %v2754, %v2842
        %v2844 = vpop.f32.mrf.mxu0
        %v2845 = vadd.f32 %v2756, %v2844
        %2846 = vmatmul.bf16.gmra.mxu0 %v1685
        %v2847 = vpop.f32.mrf.mxu0
        %v2848 = vadd.f32 %v2759, %v2847
        %v2849 = vpop.f32.mrf.mxu0
        %v2850 = vadd.f32 %v2761, %v2849
        %2851 = vmatmul.bf16.gmra.mxu0 %v1687
        %v2852 = vpop.f32.mrf.mxu0
        %v2853 = vadd.f32 %v2764, %v2852
        %v2854 = vpop.f32.mrf.mxu0
        %v2855 = vadd.f32 %v2766, %v2854
        %2856 = vmatmul.bf16.gmra.mxu0 %v1689
        %v2857 = vpop.f32.mrf.mxu0
        %v2858 = vadd.f32 %v2769, %v2857
        %v2859 = vpop.f32.mrf.mxu0
        %v2860 = vadd.f32 %v2771, %v2859
        %2861 = vmatmul.bf16.gmra.mxu0 %v1691
        %v2862 = vpop.f32.mrf.mxu0
        %v2863 = vadd.f32 %v2774, %v2862
        %v2864 = vpop.f32.mrf.mxu0
        %v2865 = vadd.f32 %v2776, %v2864
        %2866 = vmatmul.bf16.gmra.mxu0 %v1693
        %v2867 = vpop.f32.mrf.mxu0
        %v2868 = vadd.f32 %v2779, %v2867
        %v2869 = vpop.f32.mrf.mxu0
        %v2870 = vadd.f32 %v2781, %v2869
        %2871 = vmatmul.bf16.gmra.mxu0 %v1695
        %v2872 = vpop.f32.mrf.mxu0
        %v2873 = vadd.f32 %v2784, %v2872
        %v2874 = vpop.f32.mrf.mxu0
        %v2875 = vadd.f32 %v2786, %v2874
        %2876 = vdwg.mxu0
        %v2877 = vld [vmem:[#allocation2 + $0x18] sm:$0xf]
        %v2878 = vld [vmem:[#allocation2 + $0x1c] sm:$0xf]
        %v2879 = vld [vmem:[#allocation2 + $0x20] sm:$0xf]
        %v2880 = vld [vmem:[#allocation2 + $0x24] sm:$0xf]
        %v2881 = vld [vmem:[#allocation2 + $0x28] sm:$0xf]
        %v2882 = vld [vmem:[#allocation2 + $0x2c] sm:$0xf]
        %v2883 = vld [vmem:[#allocation2 + $0x30] sm:$0xf]
        %v2884 = vld [vmem:[#allocation2 + $0x34] sm:$0xf]
        %v2885 = vld [vmem:[#allocation2 + $0x38] sm:$0xf]
        %v2886 = vld [vmem:[#allocation2 + $0x3c] sm:$0xf]
        %v2887 = vld [vmem:[#allocation2 + $0x40] sm:$0xf]
        %v2888 = vld [vmem:[#allocation2 + $0x44] sm:$0xf]
        %v2889 = vld [vmem:[#allocation2 + $0x48] sm:$0xf]
        %v2890 = vld [vmem:[#allocation2 + $0x4c] sm:$0xf]
        %v2891 = vld [vmem:[#allocation2 + $0x50] sm:$0xf]
        %v2892 = vld [vmem:[#allocation2 + $0x54] sm:$0xf]
        %v2893 = vld [vmem:[#allocation2 + $0x58] sm:$0xf]
        %v2894 = vld [vmem:[#allocation2 + $0x5c] sm:$0xf]
        %v2895 = vld [vmem:[#allocation2 + $0x60] sm:$0xf]
        %v2896 = vld [vmem:[#allocation2 + $0x64] sm:$0xf]
        %v2897 = vld [vmem:[#allocation2 + $0x68] sm:$0xf]
        %v2898 = vld [vmem:[#allocation2 + $0x6c] sm:$0xf]
        %v2899 = vld [vmem:[#allocation2 + $0x70] sm:$0xf]
        %v2900 = vld [vmem:[#allocation2 + $0x74] sm:$0xf]
        %v2901 = vld [vmem:[#allocation2 + $0x78] sm:$0xf]
        %v2902 = vld [vmem:[#allocation2 + $0x7c] sm:$0xf]
        %v2903 = vld [vmem:[#allocation2 + $0x80] sm:$0xf]
        %v2904 = vld [vmem:[#allocation2 + $0x84] sm:$0xf]
        %v2905 = vld [vmem:[#allocation2 + $0x88] sm:$0xf]
        %v2906 = vld [vmem:[#allocation2 + $0x8c] sm:$0xf]
        %v2907 = vld [vmem:[#allocation2 + $0x90] sm:$0xf]
        %v2908 = vld [vmem:[#allocation2 + $0x94] sm:$0xf]
        %v2909 = vld [vmem:[#allocation2 + $0x98] sm:$0x1]
        %v2910 = vld [vmem:[#allocation2 + $0x18] sm:$0xe]
        %v2943 = vunpack.c.l.b16 %v2877
        %v2944 = vunpack.c.l.b16 %v2878
        %v2945 = vunpack.c.l.b16 %v2879
        %v2946 = vunpack.c.l.b16 %v2880
        %v2947 = vunpack.c.l.b16 %v2881
        %v2948 = vunpack.c.l.b16 %v2882
        %v2949 = vunpack.c.l.b16 %v2883
        %v2950 = vunpack.c.l.b16 %v2884
        %v2951 = vunpack.c.l.b16 %v2885
        %v2952 = vunpack.c.l.b16 %v2886
        %v2953 = vunpack.c.l.b16 %v2887
        %v2954 = vunpack.c.l.b16 %v2888
        %v2955 = vunpack.c.l.b16 %v2889
        %v2956 = vunpack.c.l.b16 %v2890
        %v2957 = vunpack.c.l.b16 %v2891
        %v2958 = vunpack.c.l.b16 %v2892
        %v2959 = vunpack.c.l.b16 %v2893
        %v2960 = vunpack.c.l.b16 %v2894
        %v2961 = vunpack.c.l.b16 %v2895
        %v2962 = vunpack.c.l.b16 %v2896
        %v2963 = vunpack.c.l.b16 %v2897
        %v2964 = vunpack.c.l.b16 %v2898
        %v2965 = vunpack.c.l.b16 %v2899
        %v2966 = vunpack.c.l.b16 %v2900
        %v2967 = vunpack.c.l.b16 %v2901
        %v2968 = vunpack.c.l.b16 %v2902
        %v2969 = vunpack.c.l.b16 %v2903
        %v2970 = vunpack.c.l.b16 %v2904
        %v2971 = vunpack.c.l.b16 %v2905
        %v2972 = vunpack.c.l.b16 %v2906
        %v2973 = vunpack.c.l.b16 %v2907
        %v2974 = vunpack.c.l.b16 %v2908
        %v2975 = vpack.c.b16 %v2944, %v2943
        %v2976 = vpack.c.b16 %v2946, %v2945
        %v2977 = vpack.c.b16 %v2948, %v2947
        %v2978 = vpack.c.b16 %v2950, %v2949
        %v2979 = vpack.c.b16 %v2952, %v2951
        %v2980 = vpack.c.b16 %v2954, %v2953
        %v2981 = vpack.c.b16 %v2956, %v2955
        %v2982 = vpack.c.b16 %v2958, %v2957
        %v2983 = vpack.c.b16 %v2960, %v2959
        %v2984 = vpack.c.b16 %v2962, %v2961
        %v2985 = vpack.c.b16 %v2964, %v2963
        %v2986 = vpack.c.b16 %v2966, %v2965
        %v2987 = vpack.c.b16 %v2968, %v2967
        %v2988 = vpack.c.b16 %v2970, %v2969
        %v2989 = vpack.c.b16 %v2972, %v2971
        %v2990 = vpack.c.b16 %v2974, %v2973
        %v3008 = vunpack.c.l.b16 %v2909
        %v3009 = vpack.c.b16 %v3008, %v3008
        %v3011 = vshrl.u32 %v2975, 16
        %v3013 = vshll.u32 %v2975, 16
        %v3015 = vrot.slane %v3013, 1
        %v3016 = vor.u32 %v3011, %v3015
        %v3018 = vshll.u32 %v2976, 16
        %v3020 = vrot.slane %v3018, 1
        %v3021 = vsel %vm1510, %v3016, %v3020
        %v3022 = vshrl.u32 %v2976, 16
        %v3024 = vor.u32 %v3022, %v3020
        %v3026 = vshll.u32 %v2977, 16
        %v3028 = vrot.slane %v3026, 1
        %v3029 = vsel %vm1510, %v3024, %v3028
        %v3030 = vshrl.u32 %v2977, 16
        %v3032 = vor.u32 %v3030, %v3028
        %v3034 = vshll.u32 %v2978, 16
        %v3036 = vrot.slane %v3034, 1
        %v3037 = vsel %vm1510, %v3032, %v3036
        %v3038 = vshrl.u32 %v2978, 16
        %v3040 = vor.u32 %v3038, %v3036
        %v3042 = vshll.u32 %v2979, 16
        %v3044 = vrot.slane %v3042, 1
        %v3045 = vsel %vm1510, %v3040, %v3044
        %v3046 = vshrl.u32 %v2979, 16
        %v3048 = vor.u32 %v3046, %v3044
        %v3050 = vshll.u32 %v2980, 16
        %v3052 = vrot.slane %v3050, 1
        %v3053 = vsel %vm1510, %v3048, %v3052
        %v3054 = vshrl.u32 %v2980, 16
        %v3056 = vor.u32 %v3054, %v3052
        %v3058 = vshll.u32 %v2981, 16
        %v3060 = vrot.slane %v3058, 1
        %v3061 = vsel %vm1510, %v3056, %v3060
        %v3062 = vshrl.u32 %v2981, 16
        %v3064 = vor.u32 %v3062, %v3060
        %v3066 = vshll.u32 %v2982, 16
        %v3068 = vrot.slane %v3066, 1
        %v3069 = vsel %vm1510, %v3064, %v3068
        %v3070 = vshrl.u32 %v2982, 16
        %v3072 = vor.u32 %v3070, %v3068
        %v3074 = vshll.u32 %v2983, 16
        %v3076 = vrot.slane %v3074, 1
        %v3077 = vsel %vm1510, %v3072, %v3076
        %v3078 = vshrl.u32 %v2983, 16
        %v3080 = vor.u32 %v3078, %v3076
        %v3082 = vshll.u32 %v2984, 16
        %v3084 = vrot.slane %v3082, 1
        %v3085 = vsel %vm1510, %v3080, %v3084
        %v3086 = vshrl.u32 %v2984, 16
        %v3088 = vor.u32 %v3086, %v3084
        %v3090 = vshll.u32 %v2985, 16
        %v3092 = vrot.slane %v3090, 1
        %v3093 = vsel %vm1510, %v3088, %v3092
        %v3094 = vshrl.u32 %v2985, 16
        %v3096 = vor.u32 %v3094, %v3092
        %v3098 = vshll.u32 %v2986, 16
        %v3100 = vrot.slane %v3098, 1
        %v3101 = vsel %vm1510, %v3096, %v3100
        %v3102 = vshrl.u32 %v2986, 16
        %v3104 = vor.u32 %v3102, %v3100
        %v3106 = vshll.u32 %v2987, 16
        %v3108 = vrot.slane %v3106, 1
        %v3109 = vsel %vm1510, %v3104, %v3108
        %v3110 = vshrl.u32 %v2987, 16
        %v3112 = vor.u32 %v3110, %v3108
        %v3114 = vshll.u32 %v2988, 16
        %v3116 = vrot.slane %v3114, 1
        %v3117 = vsel %vm1510, %v3112, %v3116
        %v3118 = vshrl.u32 %v2988, 16
        %v3120 = vor.u32 %v3118, %v3116
        %v3122 = vshll.u32 %v2989, 16
        %v3124 = vrot.slane %v3122, 1
        %v3125 = vsel %vm1510, %v3120, %v3124
        %v3126 = vshrl.u32 %v2989, 16
        %v3128 = vor.u32 %v3126, %v3124
        %v3130 = vshll.u32 %v2990, 16
        %v3132 = vrot.slane %v3130, 1
        %v3133 = vsel %vm1510, %v3128, %v3132
        %v3134 = vshrl.u32 %v2990, 16
        %v3136 = vor.u32 %v3134, %v3132
        %v3138 = vshll.u32 %v3009, 16
        %v3140 = vrot.slane %v3138, 1
        %v3141 = vsel %vm1510, %v3136, %v3140
        %v3159 = vunpack.c.l.b16 %v2910
        %v3160 = vpack.c.b16 %v2944, %v3159
        %v3161 = vrot.slane %v3160, 1
        %v3162 = vrot.slane %v2976, 1
        %v3163 = vsel %vm1662, %v3161, %v3162
        %v3164 = vrot.slane %v2977, 1
        %v3165 = vsel %vm1662, %v3162, %v3164
        %v3166 = vrot.slane %v2978, 1
        %v3167 = vsel %vm1662, %v3164, %v3166
        %v3168 = vrot.slane %v2979, 1
        %v3169 = vsel %vm1662, %v3166, %v3168
        %v3170 = vrot.slane %v2980, 1
        %v3171 = vsel %vm1662, %v3168, %v3170
        %v3172 = vrot.slane %v2981, 1
        %v3173 = vsel %vm1662, %v3170, %v3172
        %v3174 = vrot.slane %v2982, 1
        %v3175 = vsel %vm1662, %v3172, %v3174
        %v3176 = vrot.slane %v2983, 1
        %v3177 = vsel %vm1662, %v3174, %v3176
        %v3178 = vrot.slane %v2984, 1
        %v3179 = vsel %vm1662, %v3176, %v3178
        %v3180 = vrot.slane %v2985, 1
        %v3181 = vsel %vm1662, %v3178, %v3180
        %v3182 = vrot.slane %v2986, 1
        %v3183 = vsel %vm1662, %v3180, %v3182
        %v3184 = vrot.slane %v2987, 1
        %v3185 = vsel %vm1662, %v3182, %v3184
        %v3186 = vrot.slane %v2988, 1
        %v3187 = vsel %vm1662, %v3184, %v3186
        %v3188 = vrot.slane %v2989, 1
        %v3189 = vsel %vm1662, %v3186, %v3188
        %v3190 = vrot.slane %v2990, 1
        %v3191 = vsel %vm1662, %v3188, %v3190
        %v3192 = vrot.slane %v3009, 1
        %v3193 = vsel %vm1662, %v3190, %v3192
        %s3210 = scalar_lea.vmem [#allocation9], 384
        %v3211 = vld [vmem:[%s3210] sm:$0xf]
        %v3212 = vld [vmem:[%s3210 + $0x4] sm:$0xf]
        %v3213 = vld [vmem:[%s3210 + $0x8] sm:$0xf]
        %v3214 = vld [vmem:[%s3210 + $0xc] sm:$0xf]
        %v3215 = vld [vmem:[%s3210 + $0x10] sm:$0xf]
        %v3216 = vld [vmem:[%s3210 + $0x14] sm:$0xf]
        %v3217 = vld [vmem:[%s3210 + $0x18] sm:$0xf]
        %v3218 = vld [vmem:[%s3210 + $0x1c] sm:$0xf]
        %v3219 = vld [vmem:[%s3210 + $0x20] sm:$0xf]
        %v3220 = vld [vmem:[%s3210 + $0x24] sm:$0xf]
        %v3221 = vld [vmem:[%s3210 + $0x28] sm:$0xf]
        %v3222 = vld [vmem:[%s3210 + $0x2c] sm:$0xf]
        %v3223 = vld [vmem:[%s3210 + $0x30] sm:$0xf]
        %v3224 = vld [vmem:[%s3210 + $0x34] sm:$0xf]
        %v3225 = vld [vmem:[%s3210 + $0x38] sm:$0xf]
        %v3226 = vld [vmem:[%s3210 + $0x3c] sm:$0xf]
        %v3227 = vld [vmem:[%s3210 + $0x40] sm:$0xf]
        %v3228 = vld [vmem:[%s3210 + $0x44] sm:$0xf]
        %v3229 = vld [vmem:[%s3210 + $0x48] sm:$0xf]
        %v3230 = vld [vmem:[%s3210 + $0x4c] sm:$0xf]
        %v3231 = vld [vmem:[%s3210 + $0x50] sm:$0xf]
        %v3232 = vld [vmem:[%s3210 + $0x54] sm:$0xf]
        %v3233 = vld [vmem:[%s3210 + $0x58] sm:$0xf]
        %v3234 = vld [vmem:[%s3210 + $0x5c] sm:$0xf]
        %v3235 = vld [vmem:[%s3210 + $0x60] sm:$0xf]
        %v3236 = vld [vmem:[%s3210 + $0x64] sm:$0xf]
        %v3237 = vld [vmem:[%s3210 + $0x68] sm:$0xf]
        %v3238 = vld [vmem:[%s3210 + $0x6c] sm:$0xf]
        %v3239 = vld [vmem:[%s3210 + $0x70] sm:$0xf]
        %v3240 = vld [vmem:[%s3210 + $0x74] sm:$0xf]
        %v3241 = vld [vmem:[%s3210 + $0x78] sm:$0xf]
        %v3242 = vld [vmem:[%s3210 + $0x7c] sm:$0xf]
        %v3243 = vld [vmem:[%s3210 + $0x80] sm:$0xf]
        %v3244 = vld [vmem:[%s3210 + $0x84] sm:$0xf]
        %v3245 = vld [vmem:[%s3210 + $0x88] sm:$0xf]
        %v3246 = vld [vmem:[%s3210 + $0x8c] sm:$0xf]
        %v3247 = vld [vmem:[%s3210 + $0x90] sm:$0xf]
        %v3248 = vld [vmem:[%s3210 + $0x94] sm:$0xf]
        %v3249 = vld [vmem:[%s3210 + $0x98] sm:$0xf]
        %v3250 = vld [vmem:[%s3210 + $0x9c] sm:$0xf]
        %v3251 = vld [vmem:[%s3210 + $0xa0] sm:$0xf]
        %v3252 = vld [vmem:[%s3210 + $0xa4] sm:$0xf]
        %v3253 = vld [vmem:[%s3210 + $0xa8] sm:$0xf]
        %v3254 = vld [vmem:[%s3210 + $0xac] sm:$0xf]
        %v3255 = vld [vmem:[%s3210 + $0xb0] sm:$0xf]
        %v3256 = vld [vmem:[%s3210 + $0xb4] sm:$0xf]
        %v3257 = vld [vmem:[%s3210 + $0xb8] sm:$0xf]
        %v3258 = vld [vmem:[%s3210 + $0xbc] sm:$0xf]
        %v3307 = vunpack.c.l.b16 %v3211
        %v3308 = vunpack.c.l.b16 %v3212
        %v3309 = vunpack.c.l.b16 %v3213
        %v3310 = vunpack.c.l.b16 %v3214
        %v3311 = vunpack.c.l.b16 %v3215
        %v3312 = vunpack.c.l.b16 %v3216
        %v3313 = vunpack.c.l.b16 %v3217
        %v3314 = vunpack.c.l.b16 %v3218
        %v3315 = vunpack.c.l.b16 %v3219
        %v3316 = vunpack.c.l.b16 %v3220
        %v3317 = vunpack.c.l.b16 %v3221
        %v3318 = vunpack.c.l.b16 %v3222
        %v3319 = vunpack.c.l.b16 %v3223
        %v3320 = vunpack.c.l.b16 %v3224
        %v3321 = vunpack.c.l.b16 %v3225
        %v3322 = vunpack.c.l.b16 %v3226
        %v3323 = vunpack.c.l.b16 %v3227
        %v3324 = vunpack.c.l.b16 %v3228
        %v3325 = vunpack.c.l.b16 %v3229
        %v3326 = vunpack.c.l.b16 %v3230
        %v3327 = vunpack.c.l.b16 %v3231
        %v3328 = vunpack.c.l.b16 %v3232
        %v3329 = vunpack.c.l.b16 %v3233
        %v3330 = vunpack.c.l.b16 %v3234
        %v3331 = vunpack.c.l.b16 %v3235
        %v3332 = vunpack.c.l.b16 %v3236
        %v3333 = vunpack.c.l.b16 %v3237
        %v3334 = vunpack.c.l.b16 %v3238
        %v3335 = vunpack.c.l.b16 %v3239
        %v3336 = vunpack.c.l.b16 %v3240
        %v3337 = vunpack.c.l.b16 %v3241
        %v3338 = vunpack.c.l.b16 %v3242
        %v3339 = vunpack.c.l.b16 %v3243
        %v3340 = vunpack.c.l.b16 %v3244
        %v3341 = vunpack.c.l.b16 %v3245
        %v3342 = vunpack.c.l.b16 %v3246
        %v3343 = vunpack.c.l.b16 %v3247
        %v3344 = vunpack.c.l.b16 %v3248
        %v3345 = vunpack.c.l.b16 %v3249
        %v3346 = vunpack.c.l.b16 %v3250
        %v3347 = vunpack.c.l.b16 %v3251
        %v3348 = vunpack.c.l.b16 %v3252
        %v3349 = vunpack.c.l.b16 %v3253
        %v3350 = vunpack.c.l.b16 %v3254
        %v3351 = vunpack.c.l.b16 %v3255
        %v3352 = vunpack.c.l.b16 %v3256
        %v3353 = vunpack.c.l.b16 %v3257
        %v3354 = vunpack.c.l.b16 %v3258
        %v3355 = vpack.c.b16 %v3308, %v3307
        %v3356 = vpack.c.b16 %v3310, %v3309
        %v3357 = vpack.c.b16 %v3312, %v3311
        %v3358 = vpack.c.b16 %v3314, %v3313
        %v3359 = vpack.c.b16 %v3316, %v3315
        %v3360 = vpack.c.b16 %v3318, %v3317
        %v3361 = vpack.c.b16 %v3320, %v3319
        %v3362 = vpack.c.b16 %v3322, %v3321
        %v3363 = vpack.c.b16 %v3324, %v3323
        %v3364 = vpack.c.b16 %v3326, %v3325
        %v3365 = vpack.c.b16 %v3328, %v3327
        %v3366 = vpack.c.b16 %v3330, %v3329
        %v3367 = vpack.c.b16 %v3332, %v3331
        %v3368 = vpack.c.b16 %v3334, %v3333
        %v3369 = vpack.c.b16 %v3336, %v3335
        %v3370 = vpack.c.b16 %v3338, %v3337
        %v3371 = vpack.c.b16 %v3340, %v3339
        %v3372 = vpack.c.b16 %v3342, %v3341
        %v3373 = vpack.c.b16 %v3344, %v3343
        %v3374 = vpack.c.b16 %v3346, %v3345
        %v3375 = vpack.c.b16 %v3348, %v3347
        %v3376 = vpack.c.b16 %v3350, %v3349
        %v3377 = vpack.c.b16 %v3352, %v3351
        %v3378 = vpack.c.b16 %v3354, %v3353
        %3403 = vmatpush.bf16.msra.mxu0 %v3362
        %3404 = vmatpush.bf16.msra.mxu0 %v3361
        %3405 = vmatpush.bf16.msra.mxu0 %v3360
        %3406 = vmatpush.bf16.msra.mxu0 %v3359
        %3407 = vmatpush.bf16.msra.mxu0 %v3358
        %3408 = vmatpush.bf16.msra.mxu0 %v3357
        %3409 = vmatpush.bf16.msra.mxu0 %v3356
        %3410 = vmatpush.bf16.msra.mxu0 %v3355
        %3411 = vmatmul.bf16.gmra.mxu0 %v2975
        %v3412 = vpop.f32.mrf.mxu0
        %v3413 = vadd.f32 0.0, %v3412
        %v3414 = vpop.f32.mrf.mxu0
        %v3415 = vadd.f32 0.0, %v3414
        %3416 = vmatmul.bf16.gmra.mxu0 %v2976
        %v3417 = vpop.f32.mrf.mxu0
        %v3418 = vadd.f32 0.0, %v3417
        %v3419 = vpop.f32.mrf.mxu0
        %v3420 = vadd.f32 0.0, %v3419
        %3421 = vmatmul.bf16.gmra.mxu0 %v2977
        %v3422 = vpop.f32.mrf.mxu0
        %v3423 = vadd.f32 0.0, %v3422
        %v3424 = vpop.f32.mrf.mxu0
        %v3425 = vadd.f32 0.0, %v3424
        %3426 = vmatmul.bf16.gmra.mxu0 %v2978
        %v3427 = vpop.f32.mrf.mxu0
        %v3428 = vadd.f32 0.0, %v3427
        %v3429 = vpop.f32.mrf.mxu0
        %v3430 = vadd.f32 0.0, %v3429
        %3431 = vmatmul.bf16.gmra.mxu0 %v2979
        %v3432 = vpop.f32.mrf.mxu0
        %v3433 = vadd.f32 0.0, %v3432
        %v3434 = vpop.f32.mrf.mxu0
        %v3435 = vadd.f32 0.0, %v3434
        %3436 = vmatmul.bf16.gmra.mxu0 %v2980
        %v3437 = vpop.f32.mrf.mxu0
        %v3438 = vadd.f32 0.0, %v3437
        %v3439 = vpop.f32.mrf.mxu0
        %v3440 = vadd.f32 0.0, %v3439
        %3441 = vmatmul.bf16.gmra.mxu0 %v2981
        %v3442 = vpop.f32.mrf.mxu0
        %v3443 = vadd.f32 0.0, %v3442
        %v3444 = vpop.f32.mrf.mxu0
        %v3445 = vadd.f32 0.0, %v3444
        %3446 = vmatmul.bf16.gmra.mxu0 %v2982
        %v3447 = vpop.f32.mrf.mxu0
        %v3448 = vadd.f32 0.0, %v3447
        %v3449 = vpop.f32.mrf.mxu0
        %v3450 = vadd.f32 0.0, %v3449
        %3451 = vmatmul.bf16.gmra.mxu0 %v2983
        %v3452 = vpop.f32.mrf.mxu0
        %v3453 = vadd.f32 0.0, %v3452
        %v3454 = vpop.f32.mrf.mxu0
        %v3455 = vadd.f32 0.0, %v3454
        %3456 = vmatmul.bf16.gmra.mxu0 %v2984
        %v3457 = vpop.f32.mrf.mxu0
        %v3458 = vadd.f32 0.0, %v3457
        %v3459 = vpop.f32.mrf.mxu0
        %v3460 = vadd.f32 0.0, %v3459
        %3461 = vmatmul.bf16.gmra.mxu0 %v2985
        %v3462 = vpop.f32.mrf.mxu0
        %v3463 = vadd.f32 0.0, %v3462
        %v3464 = vpop.f32.mrf.mxu0
        %v3465 = vadd.f32 0.0, %v3464
        %3466 = vmatmul.bf16.gmra.mxu0 %v2986
        %v3467 = vpop.f32.mrf.mxu0
        %v3468 = vadd.f32 0.0, %v3467
        %v3469 = vpop.f32.mrf.mxu0
        %v3470 = vadd.f32 0.0, %v3469
        %3471 = vmatmul.bf16.gmra.mxu0 %v2987
        %v3472 = vpop.f32.mrf.mxu0
        %v3473 = vadd.f32 0.0, %v3472
        %v3474 = vpop.f32.mrf.mxu0
        %v3475 = vadd.f32 0.0, %v3474
        %3476 = vmatmul.bf16.gmra.mxu0 %v2988
        %v3477 = vpop.f32.mrf.mxu0
        %v3478 = vadd.f32 0.0, %v3477
        %v3479 = vpop.f32.mrf.mxu0
        %v3480 = vadd.f32 0.0, %v3479
        %3481 = vmatmul.bf16.gmra.mxu0 %v2989
        %v3482 = vpop.f32.mrf.mxu0
        %v3483 = vadd.f32 0.0, %v3482
        %v3484 = vpop.f32.mrf.mxu0
        %v3485 = vadd.f32 0.0, %v3484
        %3486 = vmatmul.bf16.gmra.mxu0 %v2990
        %v3487 = vpop.f32.mrf.mxu0
        %v3488 = vadd.f32 0.0, %v3487
        %v3489 = vpop.f32.mrf.mxu0
        %v3490 = vadd.f32 0.0, %v3489
        %3491 = vdwg.mxu0
        %3492 = vmatpush.bf16.msra.mxu0 %v3370
        %3493 = vmatpush.bf16.msra.mxu0 %v3369
        %3494 = vmatpush.bf16.msra.mxu0 %v3368
        %3495 = vmatpush.bf16.msra.mxu0 %v3367
        %3496 = vmatpush.bf16.msra.mxu0 %v3366
        %3497 = vmatpush.bf16.msra.mxu0 %v3365
        %3498 = vmatpush.bf16.msra.mxu0 %v3364
        %3499 = vmatpush.bf16.msra.mxu0 %v3363
        %3500 = vmatmul.bf16.gmra.mxu0 %v3021
        %v3501 = vpop.f32.mrf.mxu0
        %v3502 = vadd.f32 %v3413, %v3501
        %v3503 = vpop.f32.mrf.mxu0
        %v3504 = vadd.f32 %v3415, %v3503
        %3505 = vmatmul.bf16.gmra.mxu0 %v3029
        %v3506 = vpop.f32.mrf.mxu0
        %v3507 = vadd.f32 %v3418, %v3506
        %v3508 = vpop.f32.mrf.mxu0
        %v3509 = vadd.f32 %v3420, %v3508
        %3510 = vmatmul.bf16.gmra.mxu0 %v3037
        %v3511 = vpop.f32.mrf.mxu0
        %v3512 = vadd.f32 %v3423, %v3511
        %v3513 = vpop.f32.mrf.mxu0
        %v3514 = vadd.f32 %v3425, %v3513
        %3515 = vmatmul.bf16.gmra.mxu0 %v3045
        %v3516 = vpop.f32.mrf.mxu0
        %v3517 = vadd.f32 %v3428, %v3516
        %v3518 = vpop.f32.mrf.mxu0
        %v3519 = vadd.f32 %v3430, %v3518
        %3520 = vmatmul.bf16.gmra.mxu0 %v3053
        %v3521 = vpop.f32.mrf.mxu0
        %v3522 = vadd.f32 %v3433, %v3521
        %v3523 = vpop.f32.mrf.mxu0
        %v3524 = vadd.f32 %v3435, %v3523
        %3525 = vmatmul.bf16.gmra.mxu0 %v3061
        %v3526 = vpop.f32.mrf.mxu0
        %v3527 = vadd.f32 %v3438, %v3526
        %v3528 = vpop.f32.mrf.mxu0
        %v3529 = vadd.f32 %v3440, %v3528
        %3530 = vmatmul.bf16.gmra.mxu0 %v3069
        %v3531 = vpop.f32.mrf.mxu0
        %v3532 = vadd.f32 %v3443, %v3531
        %v3533 = vpop.f32.mrf.mxu0
        %v3534 = vadd.f32 %v3445, %v3533
        %3535 = vmatmul.bf16.gmra.mxu0 %v3077
        %v3536 = vpop.f32.mrf.mxu0
        %v3537 = vadd.f32 %v3448, %v3536
        %v3538 = vpop.f32.mrf.mxu0
        %v3539 = vadd.f32 %v3450, %v3538
        %3540 = vmatmul.bf16.gmra.mxu0 %v3085
        %v3541 = vpop.f32.mrf.mxu0
        %v3542 = vadd.f32 %v3453, %v3541
        %v3543 = vpop.f32.mrf.mxu0
        %v3544 = vadd.f32 %v3455, %v3543
        %3545 = vmatmul.bf16.gmra.mxu0 %v3093
        %v3546 = vpop.f32.mrf.mxu0
        %v3547 = vadd.f32 %v3458, %v3546
        %v3548 = vpop.f32.mrf.mxu0
        %v3549 = vadd.f32 %v3460, %v3548
        %3550 = vmatmul.bf16.gmra.mxu0 %v3101
        %v3551 = vpop.f32.mrf.mxu0
        %v3552 = vadd.f32 %v3463, %v3551
        %v3553 = vpop.f32.mrf.mxu0
        %v3554 = vadd.f32 %v3465, %v3553
        %3555 = vmatmul.bf16.gmra.mxu0 %v3109
        %v3556 = vpop.f32.mrf.mxu0
        %v3557 = vadd.f32 %v3468, %v3556
        %v3558 = vpop.f32.mrf.mxu0
        %v3559 = vadd.f32 %v3470, %v3558
        %3560 = vmatmul.bf16.gmra.mxu0 %v3117
        %v3561 = vpop.f32.mrf.mxu0
        %v3562 = vadd.f32 %v3473, %v3561
        %v3563 = vpop.f32.mrf.mxu0
        %v3564 = vadd.f32 %v3475, %v3563
        %3565 = vmatmul.bf16.gmra.mxu0 %v3125
        %v3566 = vpop.f32.mrf.mxu0
        %v3567 = vadd.f32 %v3478, %v3566
        %v3568 = vpop.f32.mrf.mxu0
        %v3569 = vadd.f32 %v3480, %v3568
        %3570 = vmatmul.bf16.gmra.mxu0 %v3133
        %v3571 = vpop.f32.mrf.mxu0
        %v3572 = vadd.f32 %v3483, %v3571
        %v3573 = vpop.f32.mrf.mxu0
        %v3574 = vadd.f32 %v3485, %v3573
        %3575 = vmatmul.bf16.gmra.mxu0 %v3141
        %v3576 = vpop.f32.mrf.mxu0
        %v3577 = vadd.f32 %v3488, %v3576
        %v3578 = vpop.f32.mrf.mxu0
        %v3579 = vadd.f32 %v3490, %v3578
        %3580 = vdwg.mxu0
        %3581 = vmatpush.bf16.msra.mxu0 %v3378
        %3582 = vmatpush.bf16.msra.mxu0 %v3377
        %3583 = vmatpush.bf16.msra.mxu0 %v3376
        %3584 = vmatpush.bf16.msra.mxu0 %v3375
        %3585 = vmatpush.bf16.msra.mxu0 %v3374
        %3586 = vmatpush.bf16.msra.mxu0 %v3373
        %3587 = vmatpush.bf16.msra.mxu0 %v3372
        %3588 = vmatpush.bf16.msra.mxu0 %v3371
        %3589 = vmatmul.bf16.gmra.mxu0 %v3163
        %v3590 = vpop.f32.mrf.mxu0
        %v3591 = vadd.f32 %v3502, %v3590
        %v3592 = vpop.f32.mrf.mxu0
        %v3593 = vadd.f32 %v3504, %v3592
        %3594 = vmatmul.bf16.gmra.mxu0 %v3165
        %v3595 = vpop.f32.mrf.mxu0
        %v3596 = vadd.f32 %v3507, %v3595
        %v3597 = vpop.f32.mrf.mxu0
        %v3598 = vadd.f32 %v3509, %v3597
        %3599 = vmatmul.bf16.gmra.mxu0 %v3167
        %v3600 = vpop.f32.mrf.mxu0
        %v3601 = vadd.f32 %v3512, %v3600
        %v3602 = vpop.f32.mrf.mxu0
        %v3603 = vadd.f32 %v3514, %v3602
        %3604 = vmatmul.bf16.gmra.mxu0 %v3169
        %v3605 = vpop.f32.mrf.mxu0
        %v3606 = vadd.f32 %v3517, %v3605
        %v3607 = vpop.f32.mrf.mxu0
        %v3608 = vadd.f32 %v3519, %v3607
        %3609 = vmatmul.bf16.gmra.mxu0 %v3171
        %v3610 = vpop.f32.mrf.mxu0
        %v3611 = vadd.f32 %v3522, %v3610
        %v3612 = vpop.f32.mrf.mxu0
        %v3613 = vadd.f32 %v3524, %v3612
        %3614 = vmatmul.bf16.gmra.mxu0 %v3173
        %v3615 = vpop.f32.mrf.mxu0
        %v3616 = vadd.f32 %v3527, %v3615
        %v3617 = vpop.f32.mrf.mxu0
        %v3618 = vadd.f32 %v3529, %v3617
        %3619 = vmatmul.bf16.gmra.mxu0 %v3175
        %v3620 = vpop.f32.mrf.mxu0
        %v3621 = vadd.f32 %v3532, %v3620
        %v3622 = vpop.f32.mrf.mxu0
        %v3623 = vadd.f32 %v3534, %v3622
        %3624 = vmatmul.bf16.gmra.mxu0 %v3177
        %v3625 = vpop.f32.mrf.mxu0
        %v3626 = vadd.f32 %v3537, %v3625
        %v3627 = vpop.f32.mrf.mxu0
        %v3628 = vadd.f32 %v3539, %v3627
        %3629 = vmatmul.bf16.gmra.mxu0 %v3179
        %v3630 = vpop.f32.mrf.mxu0
        %v3631 = vadd.f32 %v3542, %v3630
        %v3632 = vpop.f32.mrf.mxu0
        %v3633 = vadd.f32 %v3544, %v3632
        %3634 = vmatmul.bf16.gmra.mxu0 %v3181
        %v3635 = vpop.f32.mrf.mxu0
        %v3636 = vadd.f32 %v3547, %v3635
        %v3637 = vpop.f32.mrf.mxu0
        %v3638 = vadd.f32 %v3549, %v3637
        %3639 = vmatmul.bf16.gmra.mxu0 %v3183
        %v3640 = vpop.f32.mrf.mxu0
        %v3641 = vadd.f32 %v3552, %v3640
        %v3642 = vpop.f32.mrf.mxu0
        %v3643 = vadd.f32 %v3554, %v3642
        %3644 = vmatmul.bf16.gmra.mxu0 %v3185
        %v3645 = vpop.f32.mrf.mxu0
        %v3646 = vadd.f32 %v3557, %v3645
        %v3647 = vpop.f32.mrf.mxu0
        %v3648 = vadd.f32 %v3559, %v3647
        %3649 = vmatmul.bf16.gmra.mxu0 %v3187
        %v3650 = vpop.f32.mrf.mxu0
        %v3651 = vadd.f32 %v3562, %v3650
        %v3652 = vpop.f32.mrf.mxu0
        %v3653 = vadd.f32 %v3564, %v3652
        %3654 = vmatmul.bf16.gmra.mxu0 %v3189
        %v3655 = vpop.f32.mrf.mxu0
        %v3656 = vadd.f32 %v3567, %v3655
        %v3657 = vpop.f32.mrf.mxu0
        %v3658 = vadd.f32 %v3569, %v3657
        %3659 = vmatmul.bf16.gmra.mxu0 %v3191
        %v3660 = vpop.f32.mrf.mxu0
        %v3661 = vadd.f32 %v3572, %v3660
        %v3662 = vpop.f32.mrf.mxu0
        %v3663 = vadd.f32 %v3574, %v3662
        %3664 = vmatmul.bf16.gmra.mxu0 %v3193
        %v3665 = vpop.f32.mrf.mxu0
        %v3666 = vadd.f32 %v3577, %v3665
        %v3667 = vpop.f32.mrf.mxu0
        %v3668 = vadd.f32 %v3579, %v3667
        %3669 = vdwg.mxu0
        %v3670 = vadd.f32 %v2798, %v3591
        %v3671 = vadd.f32 %v2800, %v3593
        %v3672 = vadd.f32 %v2803, %v3596
        %v3673 = vadd.f32 %v2805, %v3598
        %v3674 = vadd.f32 %v2808, %v3601
        %v3675 = vadd.f32 %v2810, %v3603
        %v3676 = vadd.f32 %v2813, %v3606
        %v3677 = vadd.f32 %v2815, %v3608
        %v3678 = vadd.f32 %v2818, %v3611
        %v3679 = vadd.f32 %v2820, %v3613
        %v3680 = vadd.f32 %v2823, %v3616
        %v3681 = vadd.f32 %v2825, %v3618
        %v3682 = vadd.f32 %v2828, %v3621
        %v3683 = vadd.f32 %v2830, %v3623
        %v3684 = vadd.f32 %v2833, %v3626
        %v3685 = vadd.f32 %v2835, %v3628
        %v3686 = vadd.f32 %v2838, %v3631
        %v3687 = vadd.f32 %v2840, %v3633
        %v3688 = vadd.f32 %v2843, %v3636
        %v3689 = vadd.f32 %v2845, %v3638
        %v3690 = vadd.f32 %v2848, %v3641
        %v3691 = vadd.f32 %v2850, %v3643
        %v3692 = vadd.f32 %v2853, %v3646
        %v3693 = vadd.f32 %v2855, %v3648
        %v3694 = vadd.f32 %v2858, %v3651
        %v3695 = vadd.f32 %v2860, %v3653
        %v3696 = vadd.f32 %v2863, %v3656
        %v3697 = vadd.f32 %v2865, %v3658
        %v3698 = vadd.f32 %v2868, %v3661
        %v3699 = vadd.f32 %v2870, %v3663
        %v3700 = vadd.f32 %v2873, %v3666
        %v3701 = vadd.f32 %v2875, %v3668
        %v3702 = vld [vmem:[%s5] sm:$0x1]
        %v3704 = vperm.slane %v3702, 0
        %v3706 = vadd.f32 %v3670, %v3704
        %v3707 = vadd.f32 %v3671, %v3704
        %v3708 = vadd.f32 %v3672, %v3704
        %v3709 = vadd.f32 %v3673, %v3704
        %v3710 = vadd.f32 %v3674, %v3704
        %v3711 = vadd.f32 %v3675, %v3704
        %v3712 = vadd.f32 %v3676, %v3704
        %v3713 = vadd.f32 %v3677, %v3704
        %v3714 = vadd.f32 %v3678, %v3704
        %v3715 = vadd.f32 %v3679, %v3704
        %v3716 = vadd.f32 %v3680, %v3704
        %v3717 = vadd.f32 %v3681, %v3704
        %v3718 = vadd.f32 %v3682, %v3704
        %v3719 = vadd.f32 %v3683, %v3704
        %v3720 = vadd.f32 %v3684, %v3704
        %v3721 = vadd.f32 %v3685, %v3704
        %v3722 = vadd.f32 %v3686, %v3704
        %v3723 = vadd.f32 %v3687, %v3704
        %v3724 = vadd.f32 %v3688, %v3704
        %v3725 = vadd.f32 %v3689, %v3704
        %v3726 = vadd.f32 %v3690, %v3704
        %v3727 = vadd.f32 %v3691, %v3704
        %v3728 = vadd.f32 %v3692, %v3704
        %v3729 = vadd.f32 %v3693, %v3704
        %v3730 = vadd.f32 %v3694, %v3704
        %v3731 = vadd.f32 %v3695, %v3704
        %v3732 = vadd.f32 %v3696, %v3704
        %v3733 = vadd.f32 %v3697, %v3704
        %v3734 = vadd.f32 %v3698, %v3704
        %v3735 = vadd.f32 %v3699, %v3704
        %v3736 = vadd.f32 %v3700, %v3704
        %v3737 = vadd.f32 %v3701, %v3704
        %v3738 = vmax.f32 %v3706, 0.0
        %v3739 = vmax.f32 %v3707, 0.0
        %v3740 = vmax.f32 %v3708, 0.0
        %v3741 = vmax.f32 %v3709, 0.0
        %v3742 = vmax.f32 %v3710, 0.0
        %v3743 = vmax.f32 %v3711, 0.0
        %v3744 = vmax.f32 %v3712, 0.0
        %v3745 = vmax.f32 %v3713, 0.0
        %v3746 = vmax.f32 %v3714, 0.0
        %v3747 = vmax.f32 %v3715, 0.0
        %v3748 = vmax.f32 %v3716, 0.0
        %v3749 = vmax.f32 %v3717, 0.0
        %v3750 = vmax.f32 %v3718, 0.0
        %v3751 = vmax.f32 %v3719, 0.0
        %v3752 = vmax.f32 %v3720, 0.0
        %v3753 = vmax.f32 %v3721, 0.0
        %v3754 = vmax.f32 %v3722, 0.0
        %v3755 = vmax.f32 %v3723, 0.0
        %v3756 = vmax.f32 %v3724, 0.0
        %v3757 = vmax.f32 %v3725, 0.0
        %v3758 = vmax.f32 %v3726, 0.0
        %v3759 = vmax.f32 %v3727, 0.0
        %v3760 = vmax.f32 %v3728, 0.0
        %v3761 = vmax.f32 %v3729, 0.0
        %v3762 = vmax.f32 %v3730, 0.0
        %v3763 = vmax.f32 %v3731, 0.0
        %v3764 = vmax.f32 %v3732, 0.0
        %v3765 = vmax.f32 %v3733, 0.0
        %v3766 = vmax.f32 %v3734, 0.0
        %v3767 = vmax.f32 %v3735, 0.0
        %v3768 = vmax.f32 %v3736, 0.0
        %v3769 = vmax.f32 %v3737, 0.0
        %v3770 = vpack.c.bf16 %v3739, %v3738
        %v3771 = vpack.c.bf16 %v3741, %v3740
        %v3772 = vpack.c.bf16 %v3743, %v3742
        %v3773 = vpack.c.bf16 %v3745, %v3744
        %v3774 = vpack.c.bf16 %v3747, %v3746
        %v3775 = vpack.c.bf16 %v3749, %v3748
        %v3776 = vpack.c.bf16 %v3751, %v3750
        %v3777 = vpack.c.bf16 %v3753, %v3752
        %v3778 = vpack.c.bf16 %v3755, %v3754
        %v3779 = vpack.c.bf16 %v3757, %v3756
        %v3780 = vpack.c.bf16 %v3759, %v3758
        %v3781 = vpack.c.bf16 %v3761, %v3760
        %v3782 = vpack.c.bf16 %v3763, %v3762
        %v3783 = vpack.c.bf16 %v3765, %v3764
        %v3784 = vpack.c.bf16 %v3767, %v3766
        %v3785 = vpack.c.bf16 %v3769, %v3768
        %v3786 = vld [vmem:[#allocation10] sm:$0xf]
        %v3787 = vld [vmem:[#allocation10 + $0x4] sm:$0xf]
        %v3788 = vld [vmem:[#allocation10 + $0x8] sm:$0xf]
        %v3789 = vld [vmem:[#allocation10 + $0xc] sm:$0xf]
        %v3790 = vld [vmem:[#allocation10 + $0x10] sm:$0xf]
        %v3791 = vld [vmem:[#allocation10 + $0x14] sm:$0xf]
        %v3792 = vld [vmem:[#allocation10 + $0x18] sm:$0xf]
        %v3793 = vld [vmem:[#allocation10 + $0x1c] sm:$0xf]
        %v3794 = vld [vmem:[#allocation10 + $0x20] sm:$0xf]
        %v3795 = vld [vmem:[#allocation10 + $0x24] sm:$0xf]
        %v3796 = vld [vmem:[#allocation10 + $0x28] sm:$0xf]
        %v3797 = vld [vmem:[#allocation10 + $0x2c] sm:$0xf]
        %v3798 = vld [vmem:[#allocation10 + $0x30] sm:$0xf]
        %v3799 = vld [vmem:[#allocation10 + $0x34] sm:$0xf]
        %v3800 = vld [vmem:[#allocation10 + $0x38] sm:$0xf]
        %v3801 = vld [vmem:[#allocation10 + $0x3c] sm:$0xf]
        %v3802 = vld [vmem:[%s7] sm:$0x1]
        %v3804 = vperm.slane %v3802, 0
        %v3822 = vunpack.c.l.b16 %v3786
        %v3823 = vunpack.c.l.b16 %v3787
        %v3824 = vunpack.c.l.b16 %v3788
        %v3825 = vunpack.c.l.b16 %v3789
        %v3826 = vunpack.c.l.b16 %v3790
        %v3827 = vunpack.c.l.b16 %v3791
        %v3828 = vunpack.c.l.b16 %v3792
        %v3829 = vunpack.c.l.b16 %v3793
        %v3830 = vunpack.c.l.b16 %v3794
        %v3831 = vunpack.c.l.b16 %v3795
        %v3832 = vunpack.c.l.b16 %v3796
        %v3833 = vunpack.c.l.b16 %v3797
        %v3834 = vunpack.c.l.b16 %v3798
        %v3835 = vunpack.c.l.b16 %v3799
        %v3836 = vunpack.c.l.b16 %v3800
        %v3837 = vunpack.c.l.b16 %v3801
        %v3838 = vpack.c.b16 %v3823, %v3822
        %v3839 = vpack.c.b16 %v3825, %v3824
        %v3840 = vpack.c.b16 %v3827, %v3826
        %v3841 = vpack.c.b16 %v3829, %v3828
        %v3842 = vpack.c.b16 %v3831, %v3830
        %v3843 = vpack.c.b16 %v3833, %v3832
        %v3844 = vpack.c.b16 %v3835, %v3834
        %v3845 = vpack.c.b16 %v3837, %v3836
        %3854 = vmatpush.bf16.msra.mxu0 %v3845
        %3855 = vmatpush.bf16.msra.mxu0 %v3844
        %3856 = vmatpush.bf16.msra.mxu0 %v3843
        %3857 = vmatpush.bf16.msra.mxu0 %v3842
        %3858 = vmatpush.bf16.msra.mxu0 %v3841
        %3859 = vmatpush.bf16.msra.mxu0 %v3840
        %3860 = vmatpush.bf16.msra.mxu0 %v3839
        %3861 = vmatpush.bf16.msra.mxu0 %v3838
        %3862 = vmatmul.bf16.gmra.mxu0 %v3770
        %v3863 = vpop.f32.mrf.mxu0
        %v3864 = vadd.f32 %v3804, %v3863
        %v3865 = vpop.f32.mrf.mxu0
        %v3866 = vadd.f32 %v3804, %v3865
        %3867 = vmatmul.bf16.gmra.mxu0 %v3771
        %v3868 = vpop.f32.mrf.mxu0
        %v3869 = vadd.f32 %v3804, %v3868
        %v3870 = vpop.f32.mrf.mxu0
        %v3871 = vadd.f32 %v3804, %v3870
        %3872 = vmatmul.bf16.gmra.mxu0 %v3772
        %v3873 = vpop.f32.mrf.mxu0
        %v3874 = vadd.f32 %v3804, %v3873
        %v3875 = vpop.f32.mrf.mxu0
        %v3876 = vadd.f32 %v3804, %v3875
        %3877 = vmatmul.bf16.gmra.mxu0 %v3773
        %v3878 = vpop.f32.mrf.mxu0
        %v3879 = vadd.f32 %v3804, %v3878
        %v3880 = vpop.f32.mrf.mxu0
        %v3881 = vadd.f32 %v3804, %v3880
        %3882 = vmatmul.bf16.gmra.mxu0 %v3774
        %v3883 = vpop.f32.mrf.mxu0
        %v3884 = vadd.f32 %v3804, %v3883
        %v3885 = vpop.f32.mrf.mxu0
        %v3886 = vadd.f32 %v3804, %v3885
        %3887 = vmatmul.bf16.gmra.mxu0 %v3775
        %v3888 = vpop.f32.mrf.mxu0
        %v3889 = vadd.f32 %v3804, %v3888
        %v3890 = vpop.f32.mrf.mxu0
        %v3891 = vadd.f32 %v3804, %v3890
        %3892 = vmatmul.bf16.gmra.mxu0 %v3776
        %v3893 = vpop.f32.mrf.mxu0
        %v3894 = vadd.f32 %v3804, %v3893
        %v3895 = vpop.f32.mrf.mxu0
        %v3896 = vadd.f32 %v3804, %v3895
        %3897 = vmatmul.bf16.gmra.mxu0 %v3777
        %v3898 = vpop.f32.mrf.mxu0
        %v3899 = vadd.f32 %v3804, %v3898
        %v3900 = vpop.f32.mrf.mxu0
        %v3901 = vadd.f32 %v3804, %v3900
        %3902 = vmatmul.bf16.gmra.mxu0 %v3778
        %v3903 = vpop.f32.mrf.mxu0
        %v3904 = vadd.f32 %v3804, %v3903
        %v3905 = vpop.f32.mrf.mxu0
        %v3906 = vadd.f32 %v3804, %v3905
        %3907 = vmatmul.bf16.gmra.mxu0 %v3779
        %v3908 = vpop.f32.mrf.mxu0
        %v3909 = vadd.f32 %v3804, %v3908
        %v3910 = vpop.f32.mrf.mxu0
        %v3911 = vadd.f32 %v3804, %v3910
        %3912 = vmatmul.bf16.gmra.mxu0 %v3780
        %v3913 = vpop.f32.mrf.mxu0
        %v3914 = vadd.f32 %v3804, %v3913
        %v3915 = vpop.f32.mrf.mxu0
        %v3916 = vadd.f32 %v3804, %v3915
        %3917 = vmatmul.bf16.gmra.mxu0 %v3781
        %v3918 = vpop.f32.mrf.mxu0
        %v3919 = vadd.f32 %v3804, %v3918
        %v3920 = vpop.f32.mrf.mxu0
        %v3921 = vadd.f32 %v3804, %v3920
        %3922 = vmatmul.bf16.gmra.mxu0 %v3782
        %v3923 = vpop.f32.mrf.mxu0
        %v3924 = vadd.f32 %v3804, %v3923
        %v3925 = vpop.f32.mrf.mxu0
        %v3926 = vadd.f32 %v3804, %v3925
        %3927 = vmatmul.bf16.gmra.mxu0 %v3783
        %v3928 = vpop.f32.mrf.mxu0
        %v3929 = vadd.f32 %v3804, %v3928
        %v3930 = vpop.f32.mrf.mxu0
        %v3931 = vadd.f32 %v3804, %v3930
        %3932 = vmatmul.bf16.gmra.mxu0 %v3784
        %v3933 = vpop.f32.mrf.mxu0
        %v3934 = vadd.f32 %v3804, %v3933
        %v3935 = vpop.f32.mrf.mxu0
        %v3936 = vadd.f32 %v3804, %v3935
        %3937 = vmatmul.bf16.gmra.mxu0 %v3785
        %v3938 = vpop.f32.mrf.mxu0
        %v3939 = vadd.f32 %v3804, %v3938
        %v3940 = vpop.f32.mrf.mxu0
        %v3941 = vadd.f32 %v3804, %v3940
        %3942 = vdwg.mxu0
        %v3943 = vld [vmem:[#allocation3] sm:$0xff]
        %v3944 = vld [vmem:[#allocation3 + $0x8] sm:$0xff]
        %v3945 = vld [vmem:[#allocation3 + $0x10] sm:$0xff]
        %v3946 = vld [vmem:[#allocation3 + $0x18] sm:$0xff]
        %v3947 = vld [vmem:[#allocation3 + $0x20] sm:$0xff]
        %v3948 = vld [vmem:[#allocation3 + $0x28] sm:$0xff]
        %v3949 = vld [vmem:[#allocation3 + $0x30] sm:$0xff]
        %v3950 = vld [vmem:[#allocation3 + $0x38] sm:$0xff]
        %v3951 = vld [vmem:[#allocation3 + $0x40] sm:$0xff]
        %v3952 = vld [vmem:[#allocation3 + $0x48] sm:$0xff]
        %v3953 = vld [vmem:[#allocation3 + $0x50] sm:$0xff]
        %v3954 = vld [vmem:[#allocation3 + $0x58] sm:$0xff]
        %v3955 = vld [vmem:[#allocation3 + $0x60] sm:$0xff]
        %v3956 = vld [vmem:[#allocation3 + $0x68] sm:$0xff]
        %v3957 = vld [vmem:[#allocation3 + $0x70] sm:$0xff]
        %v3958 = vld [vmem:[#allocation3 + $0x78] sm:$0xff]
        %v3959 = vld [vmem:[#allocation3 + $0x80] sm:$0xff]
        %v3960 = vld [vmem:[#allocation3 + $0x88] sm:$0xff]
        %v3961 = vld [vmem:[#allocation3 + $0x90] sm:$0xff]
        %v3962 = vld [vmem:[#allocation3 + $0x98] sm:$0xff]
        %v3963 = vld [vmem:[#allocation3 + $0xa0] sm:$0xff]
        %v3964 = vld [vmem:[#allocation3 + $0xa8] sm:$0xff]
        %v3965 = vld [vmem:[#allocation3 + $0xb0] sm:$0xff]
        %v3966 = vld [vmem:[#allocation3 + $0xb8] sm:$0xff]
        %v3967 = vld [vmem:[#allocation3 + $0xc0] sm:$0xff]
        %v3968 = vld [vmem:[#allocation3 + $0xc8] sm:$0xff]
        %v3969 = vld [vmem:[#allocation3 + $0xd0] sm:$0xff]
        %v3970 = vld [vmem:[#allocation3 + $0xd8] sm:$0xff]
        %v3971 = vld [vmem:[#allocation3 + $0xe0] sm:$0xff]
        %v3972 = vld [vmem:[#allocation3 + $0xe8] sm:$0xff]
        %v3973 = vld [vmem:[#allocation3 + $0xf0] sm:$0xff]
        %v3974 = vld [vmem:[#allocation3 + $0xf8] sm:$0xff]
        %v3975 = vadd.f32 %v3864, %v3943
        %v3976 = vadd.f32 %v3866, %v3944
        %v3977 = vadd.f32 %v3869, %v3945
        %v3978 = vadd.f32 %v3871, %v3946
        %v3979 = vadd.f32 %v3874, %v3947
        %v3980 = vadd.f32 %v3876, %v3948
        %v3981 = vadd.f32 %v3879, %v3949
        %v3982 = vadd.f32 %v3881, %v3950
        %v3983 = vadd.f32 %v3884, %v3951
        %v3984 = vadd.f32 %v3886, %v3952
        %v3985 = vadd.f32 %v3889, %v3953
        %v3986 = vadd.f32 %v3891, %v3954
        %v3987 = vadd.f32 %v3894, %v3955
        %v3988 = vadd.f32 %v3896, %v3956
        %v3989 = vadd.f32 %v3899, %v3957
        %v3990 = vadd.f32 %v3901, %v3958
        %v3991 = vadd.f32 %v3904, %v3959
        %v3992 = vadd.f32 %v3906, %v3960
        %v3993 = vadd.f32 %v3909, %v3961
        %v3994 = vadd.f32 %v3911, %v3962
        %v3995 = vadd.f32 %v3914, %v3963
        %v3996 = vadd.f32 %v3916, %v3964
        %v3997 = vadd.f32 %v3919, %v3965
        %v3998 = vadd.f32 %v3921, %v3966
        %v3999 = vadd.f32 %v3924, %v3967
        %v4000 = vadd.f32 %v3926, %v3968
        %v4001 = vadd.f32 %v3929, %v3969
        %v4002 = vadd.f32 %v3931, %v3970
        %v4003 = vadd.f32 %v3934, %v3971
        %v4004 = vadd.f32 %v3936, %v3972
        %v4005 = vadd.f32 %v3939, %v3973
        %v4006 = vadd.f32 %v3941, %v3974
        %v4007 = vmax.f32 %v3975, 0.0
        %v4008 = vmax.f32 %v3976, 0.0
        %v4009 = vmax.f32 %v3977, 0.0
        %v4010 = vmax.f32 %v3978, 0.0
        %v4011 = vmax.f32 %v3979, 0.0
        %v4012 = vmax.f32 %v3980, 0.0
        %v4013 = vmax.f32 %v3981, 0.0
        %v4014 = vmax.f32 %v3982, 0.0
        %v4015 = vmax.f32 %v3983, 0.0
        %v4016 = vmax.f32 %v3984, 0.0
        %v4017 = vmax.f32 %v3985, 0.0
        %v4018 = vmax.f32 %v3986, 0.0
        %v4019 = vmax.f32 %v3987, 0.0
        %v4020 = vmax.f32 %v3988, 0.0
        %v4021 = vmax.f32 %v3989, 0.0
        %v4022 = vmax.f32 %v3990, 0.0
        %v4023 = vmax.f32 %v3991, 0.0
        %v4024 = vmax.f32 %v3992, 0.0
        %v4025 = vmax.f32 %v3993, 0.0
        %v4026 = vmax.f32 %v3994, 0.0
        %v4027 = vmax.f32 %v3995, 0.0
        %v4028 = vmax.f32 %v3996, 0.0
        %v4029 = vmax.f32 %v3997, 0.0
        %v4030 = vmax.f32 %v3998, 0.0
        %v4031 = vmax.f32 %v3999, 0.0
        %v4032 = vmax.f32 %v4000, 0.0
        %v4033 = vmax.f32 %v4001, 0.0
        %v4034 = vmax.f32 %v4002, 0.0
        %v4035 = vmax.f32 %v4003, 0.0
        %v4036 = vmax.f32 %v4004, 0.0
        %v4037 = vmax.f32 %v4005, 0.0
        %v4038 = vmax.f32 %v4006, 0.0
        %4039 = vst [vmem:[%s389] sm:$0xff] %v4007
        %4040 = vst [vmem:[%s389 + $0x8] sm:$0xff] %v4008
        %4041 = vst [vmem:[%s389 + $0x10] sm:$0xff] %v4009
        %4042 = vst [vmem:[%s389 + $0x18] sm:$0xff] %v4010
        %4043 = vst [vmem:[%s389 + $0x20] sm:$0xff] %v4011
        %4044 = vst [vmem:[%s389 + $0x28] sm:$0xff] %v4012
        %4045 = vst [vmem:[%s389 + $0x30] sm:$0xff] %v4013
        %4046 = vst [vmem:[%s389 + $0x38] sm:$0xff] %v4014
        %4047 = vst [vmem:[%s389 + $0x40] sm:$0xff] %v4015
        %4048 = vst [vmem:[%s389 + $0x48] sm:$0xff] %v4016
        %4049 = vst [vmem:[%s389 + $0x50] sm:$0xff] %v4017
        %4050 = vst [vmem:[%s389 + $0x58] sm:$0xff] %v4018
        %4051 = vst [vmem:[%s389 + $0x60] sm:$0xff] %v4019
        %4052 = vst [vmem:[%s389 + $0x68] sm:$0xff] %v4020
        %4053 = vst [vmem:[%s389 + $0x70] sm:$0xff] %v4021
        %4054 = vst [vmem:[%s389 + $0x78] sm:$0xff] %v4022
        %4055 = vst [vmem:[%s389 + $0x80] sm:$0xff] %v4023
        %4056 = vst [vmem:[%s389 + $0x88] sm:$0xff] %v4024
        %4057 = vst [vmem:[%s389 + $0x90] sm:$0xff] %v4025
        %4058 = vst [vmem:[%s389 + $0x98] sm:$0xff] %v4026
        %4059 = vst [vmem:[%s389 + $0xa0] sm:$0xff] %v4027
        %4060 = vst [vmem:[%s389 + $0xa8] sm:$0xff] %v4028
        %4061 = vst [vmem:[%s389 + $0xb0] sm:$0xff] %v4029
        %4062 = vst [vmem:[%s389 + $0xb8] sm:$0xff] %v4030
        %4063 = vst [vmem:[%s389 + $0xc0] sm:$0xff] %v4031
        %4064 = vst [vmem:[%s389 + $0xc8] sm:$0xff] %v4032
        %4065 = vst [vmem:[%s389 + $0xd0] sm:$0xff] %v4033
        %4066 = vst [vmem:[%s389 + $0xd8] sm:$0xff] %v4034
        %4067 = vst [vmem:[%s389 + $0xe0] sm:$0xff] %v4035
        %4068 = vst [vmem:[%s389 + $0xe8] sm:$0xff] %v4036
        %4069 = vst [vmem:[%s389 + $0xf0] sm:$0xff] %v4037
        %4070 = vst [vmem:[%s389 + $0xf8] sm:$0xff] %v4038
        %s4071 = sand.u32 %s222, 1
        %s4072 = scalar_lea.sflag [#allocation6], %s4071
        %s4073 = sand.u32 %s222, 1
        %s4074 = smul.addr %s4073, 256
        %s4075 = scalar_lea.vmem [#allocation12], %s4074
        // Predicated region
        $region69: #{tpu_custom_call.1} parent=51 // pred_check
          %p4076 = pneg %p232
        $region70: #{tpu_custom_call.1} parent=51 // pred_check_branch
          %4078 = sbr.rel (%p4076) target = $region72
        $region71: #{tpu_custom_call.1} parent=51 // pred_region
          %s4079 = smul.u32 32, %s32
          %4081 = vsyncadd %s4072, 0
          %s4082 = smul.addr %s31, 64
          %s4083 = sadd.s32 %s4079, %s4082
          %s4084 = smul.addr %s4083, 8
          %s4085 = scalar_lea.hbm %s8, %s4084
          %s4086 = sshll.u32 %s4075, 4
          %s4087 = int_to_ptr.vmem [resolvable:$true] %s4086
          %s4088 = sshll.u32 %s4085, 4
          %s4089 = int_to_ptr.hbm [resolvable:$true] %s4088
          %4094 = dma.vmem_to_hbm [thread:$0]  %s4087, 4096, %s4089, %s4072, 128, 128, 8
        $region72: #{tpu_custom_call.1} parent=51 // pred_fallthru
          _
      $region52: #{tpu_custom_call.1} parent=5 // pred_fallthru
        _
      %p4095 = scmp.le.s32.totalorder 2, %s22
      // Predicated region
      $region73: #{tpu_custom_call.1} parent=5 // pred_check
        %p4096 = pneg %p4095
      $region74: #{tpu_custom_call.1} parent=5 // pred_check_branch
        %4098 = sbr.rel (%p4096) target = $region76
      $region75: #{tpu_custom_call.1} parent=5 // pred_region
        %s4099 = ssub.s32 %s22, 2
        // Predicated region
        $region77: #{tpu_custom_call.1} parent=75 // pred_check
          %p4100 = pneg %p238
        $region78: #{tpu_custom_call.1} parent=75 // pred_check_branch
          %4102 = sbr.rel (%p4100) target = $region80
        $region79: #{tpu_custom_call.1} parent=75 // pred_region
          %s4103 = sand.u32 %s223, 1
          %s4104 = scalar_lea.sflag [#allocation6], %s4103
          %s4105 = sand.u32 %s223, 1
          %s4106 = smul.addr %s4105, 256
          %s4107 = scalar_lea.vmem [#allocation12], %s4106
          %4109 = dma.done %s4104, 4096
        $region80: #{tpu_custom_call.1} parent=75 // pred_fallthru
          _
      $region76: #{tpu_custom_call.1} parent=5 // pred_fallthru
        _
    $region6: #{tpu_custom_call.1} parent=1 // loop_footer
      %s26 = sadd.s32 1, %s22
    $region7: #{tpu_custom_call.1} parent=1 // loop_footer_branch
      %21 = sbr.rel target = $region3
    $region8: #{tpu_custom_call.1} parent=1 // loop_exit
      _
    %4110 = vsyncpa [#allocation5], 1
    %s4111 = scalar_lea.sflag [#allocation5], 1
    %4112 = vsyncpa %s4111, 1
    %4113 = vsyncpa [#allocation8], 1
    %4114 = vsyncpa [#allocation11], 1
    %4115 = vsyncpa [#allocation6], 1
    %s4116 = scalar_lea.sflag [#allocation6], 1
    %4117 = vsyncpa %s4116, 1

</llo_original>
